<compile_context>
chip_gen: v5e
topology: v5e:2x2
jax: 0.10.0
libtpu: 0.0.40
codegen_flags: <defaults>
</compile_context>

<pallas_src>
import jax
import jax.numpy as jnp
import numpy as np
from jax.experimental import pallas as pl
from jax.experimental.pallas import tpu as pltpu


def _ru(x, m):
    return ((x + m - 1) // m) * m


# ------------------------------ the fused kernel ------------------------------

def _net_kernel(x_ref, a1_ref, b1_ref, a2_ref, b2_ref, g1_ref, bf1_ref,
                w2_ref, bf2_ref, w3_ref, bf3_ref, o_ref):
    # x_ref : (4, 8, bt, 96)  bf16  image tile; row 4*h4+r -> [r, h4], lane = 3*w+c
    # a1_ref: (5, 2, 96, 84)  bf16  conv1 banded weights [tap_i, pool_dw, in, out]
    # a2_ref: (5, 2, 84, 80)  bf16  conv2 banded weights
    # g1_ref: (5, 80, 128)    bf16  fc1 grouped by conv2 output row (NCHW order folded)
    # w2_ref, w3_ref: (128, 128) bf16 ; biases are f32 rows ; o_ref: (bt, 128) f32
    bt = o_ref.shape[0]

    # ---- conv1 + bias + relu + 2x2 max-pool; output grouped by row parity ----
    # pooled1[a][p, b, 6*pw + c] == torch pooled1[b, c, 2*p + a, pw]
    pooled1 = []
    for a in range(2):                       # parity of the pooled output row
        qmax = None
        for dh in range(2):                  # pool quadrant (H)
            for dw in range(2):              # pool quadrant (W, folded into A1)
                acc = None
                for i in range(5):           # conv kernel row
                    e = 2 * a + dh + i       # needed input row = 4*p + e
                    lhs = x_ref[e % 4, e // 4:e // 4 + 7]            # (7, bt, 96)
                    t = jnp.dot(lhs.reshape(7 * bt, 96), a1_ref[i, dw],
                                preferred_element_type=jnp.float32)  # (7*bt, 84)
                    acc = t if acc is None else acc + t
                qmax = acc if qmax is None else jnp.maximum(qmax, acc)
        # max over quadrants commutes with the shared bias add and with relu
        h = jnp.maximum(qmax + b1_ref[...], 0.0)
        pooled1.append(h.astype(jnp.bfloat16).reshape(7, bt, 84))

    # ---- conv2 + bias + relu + 2x2 max-pool -> pooled2[r, b, 16*pw2 + f] ----
    qmax2 = None
    for dh in range(2):
        for dw in range(2):
            acc = None
            for i in range(5):
                e = dh + i                    # needed input row = 2*ph2 + e
                lhs = pooled1[e % 2][e // 2:e // 2 + 5]              # (5, bt, 84)
                t = jnp.dot(lhs.reshape(5 * bt, 84), a2_ref[i, dw],
                            preferred_element_type=jnp.float32)      # (5*bt, 80)
                acc = t if acc is None else acc + t
            qmax2 = acc if qmax2 is None else jnp.maximum(qmax2, acc)
    pooled2 = jnp.maximum(qmax2 + b2_ref[...], 0.0)
    pooled2 = pooled2.astype(jnp.bfloat16).reshape(5, bt, 80)

    # ---- fc1 (five row-grouped matmuls over the 400 features) -> relu ----
    acc = None
    for r in range(5):
        t = jnp.dot(pooled2[r], g1_ref[r], preferred_element_type=jnp.float32)
        acc = t if acc is None else acc + t
    h = jnp.maximum(acc + bf1_ref[...], 0.0).astype(jnp.bfloat16)    # (bt, 128)

    # ---- fc2 -> relu -> fc3 (+bias); dims padded to a lane-dense 128 ----
    h = jnp.dot(h, w2_ref[...], preferred_element_type=jnp.float32)
    h = jnp.maximum(h + bf2_ref[...], 0.0).astype(jnp.bfloat16)
    h = jnp.dot(h, w3_ref[...], preferred_element_type=jnp.float32)
    o_ref[...] = h + bf3_ref[...]


# ------------------------------ Pallas wrapper --------------------------------

def _pick_batch_tile(n):
    # multiple of 16 so the in-kernel (7, bt, 96) <-> (7*bt, 96) bf16 reshapes
    # are layout no-ops; cap at 128 images/step (few-MB VMEM working set).
    n16 = _ru(max(n, 1), 16)
    bt = min(128, n16)
    # keep >= 2 grid steps when the batch allows it, so v7x's 2 TensorCores
    # both get work via dimension_semantics=("parallel",).
    if bt == n16 and n16 >= 32:
        bt = _ru(n16 // 2, 16)
    return bt


def net_forward(p, x_nchw):
    """x_nchw: (N, 3, 32, 32) float32 (PyTorch layout). Returns (N, 10) f32."""
    n = x_nchw.shape[0]
    bt = _pick_batch_tile(n)
    npad = _ru(n, bt)

    # cheap XLA-side layout plumbing (no data blow-up): image -> (r, h4, n, 96)
    # with image row = 4*h4 + r and lane = 3*w + c, so every conv row read in
    # the kernel is a contiguous slice.
    x = jnp.transpose(x_nchw, (0, 2, 3, 1))                 # NHWC
    x = x.reshape(n, 8, 4, 96)                              # (n, h4, r, 3*w+c)
    x = jnp.transpose(x, (2, 1, 0, 3)).astype(jnp.bfloat16)  # (4, 8, n, 96)
    if npad != n:
        x = jnp.pad(x, ((0, 0), (0, 0), (0, npad - n), (0, 0)))

    out = pl.pallas_call(
        _net_kernel,
        out_shape=jax.ShapeDtypeStruct((npad, 128), jnp.float32),
        grid_spec=pltpu.PrefetchScalarGridSpec(
            num_scalar_prefetch=0,
            grid=(npad // bt,),
            in_specs=[
                pl.BlockSpec((4, 8, bt, 96), lambda i: (0, 0, i, 0)),
                pl.BlockSpec((5, 2, 96, 84), lambda i: (0, 0, 0, 0)),
                pl.BlockSpec((1, 84), lambda i: (0, 0)),
                pl.BlockSpec((5, 2, 84, 80), lambda i: (0, 0, 0, 0)),
                pl.BlockSpec((1, 80), lambda i: (0, 0)),
                pl.BlockSpec((5, 80, 128), lambda i: (0, 0, 0)),
                pl.BlockSpec((1, 128), lambda i: (0, 0)),
                pl.BlockSpec((128, 128), lambda i: (0, 0)),
                pl.BlockSpec((1, 128), lambda i: (0, 0)),
                pl.BlockSpec((128, 128), lambda i: (0, 0)),
                pl.BlockSpec((1, 128), lambda i: (0, 0)),
            ],
            out_specs=pl.BlockSpec((bt, 128), lambda i: (i, 0)),
        ),
        compiler_params=pltpu.CompilerParams(
            dimension_semantics=("parallel",),
            vmem_limit_bytes=32 * 1024 * 1024,
        ),
    )(x, p["A1"], p["b1"], p["A2"], p["b2"], p["G1"], p["bf1"],
      p["Wf2"], p["bf2"], p["Wf3"], p["bf3"])
    return out[:n, :10]


# ------------------------------ params / prep ---------------------------------

def init_params(key):
    """Deterministic init mimicking PyTorch's default U(+-1/sqrt(fan_in))."""
    def uni(k, shape, fan_in):
        bound = 1.0 / (fan_in ** 0.5)
        return jax.random.uniform(k, shape, jnp.float32, -bound, bound)

    ks = jax.random.split(key, 10)
    return {
        "conv1_w": uni(ks[0], (6, 3, 5, 5), 3 * 5 * 5),
        "conv1_b": uni(ks[1], (6,), 3 * 5 * 5),
        "conv2_w": uni(ks[2], (16, 6, 5, 5), 6 * 5 * 5),
        "conv2_b": uni(ks[3], (16,), 6 * 5 * 5),
        # Linear weights stored transposed (in, out): row = torch input index.
        "fc1_w": uni(ks[4], (400, 120), 400),
        "fc1_b": uni(ks[5], (120,), 400),
        "fc2_w": uni(ks[6], (120, 84), 120),
        "fc2_b": uni(ks[7], (84,), 120),
        "fc3_w": uni(ks[8], (84, 10), 84),
        "fc3_b": uni(ks[9], (10,), 84),
    }


def prepare_params(p):
    """One-time weight prep into the kernel's banded / lane-dense layouts."""
    w1 = np.asarray(p["conv1_w"], np.float32)     # (6, 3, 5, 5)
    w2 = np.asarray(p["conv2_w"], np.float32)     # (16, 6, 5, 5)
    f1 = np.asarray(p["fc1_w"], np.float32)       # (400, 120)

    # conv1: A1[i, dw, 3*w + c, 6*pw + f] = w1[f, c, i, w - (2*pw + dw)]
    A1 = np.zeros((5, 2, 96, 84), np.float32)
    for i in range(5):
        for dw in range(2):
            for pw in range(14):
                for j in range(5):
                    w = 2 * pw + dw + j
                    A1[i, dw, 3 * w:3 * w + 3, 6 * pw:6 * pw + 6] = w1[:, :, i, j].T
    b1 = np.tile(np.asarray(p["conv1_b"], np.float32), 14).reshape(1, 84)

    # conv2: A2[i, dw, 6*pw + c, 16*pw2 + f] = w2[f, c, i, pw - (2*pw2 + dw)]
    A2 = np.zeros((5, 2, 84, 80), np.float32)
    for i in range(5):
        for dw in range(2):
            for pw2 in range(5):
                for j in range(5):
                    w = 2 * pw2 + dw + j
                    A2[i, dw, 6 * w:6 * w + 6, 16 * pw2:16 * pw2 + 16] = w2[:, :, i, j].T
    b2 = np.tile(np.asarray(p["conv2_b"], np.float32), 5).reshape(1, 80)

    # fc1 regrouped by conv2 output row; folds PyTorch's NCHW flatten order so
    # the kernel never reshapes/transposes the 400-feature activation.
    G1 = np.zeros((5, 80, 128), np.float32)
    for r in range(5):
        for pw2 in range(5):
            for f in range(16):
                G1[r, 16 * pw2 + f, :120] = f1[f * 25 + r * 5 + pw2, :]
    bf1 = np.zeros((1, 128), np.float32); bf1[0, :120] = np.asarray(p["fc1_b"])
    Wf2 = np.zeros((128, 128), np.float32); Wf2[:120, :84] = np.asarray(p["fc2_w"])
    bf2 = np.zeros((1, 128), np.float32); bf2[0, :84] = np.asarray(p["fc2_b"])
    Wf3 = np.zeros((128, 128), np.float32); Wf3[:84, :10] = np.asarray(p["fc3_w"])
    bf3 = np.zeros((1, 128), np.float32); bf3[0, :10] = np.asarray(p["fc3_b"])

    bf16 = jnp.bfloat16
    return {
        "A1": jnp.asarray(A1, bf16), "b1": jnp.asarray(b1),
        "A2": jnp.asarray(A2, bf16), "b2": jnp.asarray(b2),
        "G1": jnp.asarray(G1, bf16), "bf1": jnp.asarray(bf1),
        "Wf2": jnp.asarray(Wf2, bf16), "bf2": jnp.asarray(bf2),
        "Wf3": jnp.asarray(Wf3, bf16), "bf3": jnp.asarray(bf3),
    }


# ------------------------- pure-JAX reference (f32) ---------------------------

def reference_forward(p, x):
    dn = ("NCHW", "OIHW", "NCHW")
    y = jax.lax.conv_general_dilated(x, p["conv1_w"], (1, 1), "VALID",
                                     dimension_numbers=dn)
    y = jax.nn.relu(y + p["conv1_b"][None, :, None, None])
    y = jax.lax.reduce_window(y, -jnp.inf, jax.lax.max,
                              (1, 1, 2, 2), (1, 1, 2, 2), "VALID")
    y = jax.lax.conv_general_dilated(y, p["conv2_w"], (1, 1), "VALID",
                                     dimension_numbers=dn)
    y = jax.nn.relu(y + p["conv2_b"][None, :, None, None])
    y = jax.lax.reduce_window(y, -jnp.inf, jax.lax.max,
                              (1, 1, 2, 2), (1, 1, 2, 2), "VALID")
    y = y.reshape(y.shape[0], -1)                     # NCHW flatten -> (N, 400)
    y = jax.nn.relu(y @ p["fc1_w"] + p["fc1_b"])
    y = jax.nn.relu(y @ p["fc2_w"] + p["fc2_b"])
    return y @ p["fc3_w"] + p["fc3_b"]


if __name__ == "__main__":
    key = jax.random.PRNGKey(0)
    pkey, xkey = jax.random.split(key)
    params = init_params(pkey)
    prepped = prepare_params(params)
    x = jax.random.normal(xkey, (2, 3, 32, 32), jnp.float32)

    out = jax.jit(net_forward)(prepped, x)
    out = jax.block_until_ready(out)
    assert out.shape == (2, 10), out.shape
    assert out.dtype == jnp.float32

    ref = jax.block_until_ready(reference_forward(params, x))
    err = float(jnp.max(jnp.abs(out - ref)))
    assert err < 5e-2, f"mismatch vs reference: max|diff|={err}"
    print("KERNEL_OK")
</pallas_src>

<mosaic_0001>
module attributes {stable_mosaic.version = 11 : i64} {
  func.func @_net_kernel(%arg0: i32, %arg1: memref<4x8x16x96xbf16, #tpu.memory_space<vmem>>, %arg2: memref<5x2x96x84xbf16, #tpu.memory_space<vmem>>, %arg3: memref<1x84xf32, #tpu.memory_space<vmem>>, %arg4: memref<5x2x84x80xbf16, #tpu.memory_space<vmem>>, %arg5: memref<1x80xf32, #tpu.memory_space<vmem>>, %arg6: memref<5x80x128xbf16, #tpu.memory_space<vmem>>, %arg7: memref<1x128xf32, #tpu.memory_space<vmem>>, %arg8: memref<128x128xbf16, #tpu.memory_space<vmem>>, %arg9: memref<1x128xf32, #tpu.memory_space<vmem>>, %arg10: memref<128x128xbf16, #tpu.memory_space<vmem>>, %arg11: memref<1x128xf32, #tpu.memory_space<vmem>>, %arg12: memref<16x128xf32, #tpu.memory_space<vmem>>) attributes {dimension_semantics = [#tpu.dimension_semantics<parallel>], iteration_bounds = array<i64: 1>, scalar_prefetch = 0 : i64, scratch_operands = 0 : i64, tpu.core_type = #tpu.core_type<tc>, window_params = [{transform_indices = @transform_0, window_bounds = array<i64: 4, 8, 16, 96>}, {pipeline_mode = #tpu.pipeline_mode<synchronous>, transform_indices = @transform_1, window_bounds = array<i64: 5, 2, 96, 84>}, {pipeline_mode = #tpu.pipeline_mode<synchronous>, transform_indices = @transform_2, window_bounds = array<i64: 1, 84>}, {pipeline_mode = #tpu.pipeline_mode<synchronous>, transform_indices = @transform_3, window_bounds = array<i64: 5, 2, 84, 80>}, {pipeline_mode = #tpu.pipeline_mode<synchronous>, transform_indices = @transform_4, window_bounds = array<i64: 1, 80>}, {pipeline_mode = #tpu.pipeline_mode<synchronous>, transform_indices = @transform_5, window_bounds = array<i64: 5, 80, 128>}, {pipeline_mode = #tpu.pipeline_mode<synchronous>, transform_indices = @transform_6, window_bounds = array<i64: 1, 128>}, {pipeline_mode = #tpu.pipeline_mode<synchronous>, transform_indices = @transform_7, window_bounds = array<i64: 128, 128>}, {pipeline_mode = #tpu.pipeline_mode<synchronous>, transform_indices = @transform_8, window_bounds = array<i64: 1, 128>}, {pipeline_mode = #tpu.pipeline_mode<synchronous>, transform_indices = @transform_9, window_bounds = array<i64: 128, 128>}, {pipeline_mode = #tpu.pipeline_mode<synchronous>, transform_indices = @transform_10, window_bounds = array<i64: 1, 128>}, {transform_indices = @transform_11, window_bounds = array<i64: 16, 128>}]} {
    %c0 = arith.constant 0 : index
    %c0_0 = arith.constant 0 : index
    %c0_1 = arith.constant 0 : index
    %c0_2 = arith.constant 0 : index
    %0 = vector.load %arg1[%c0, %c0_0, %c0_1, %c0_2] : memref<4x8x16x96xbf16, #tpu.memory_space<vmem>>, vector<1x7x16x96xbf16>
    %1 = vector.shape_cast %0 : vector<1x7x16x96xbf16> to vector<7x16x96xbf16>
    %2 = vector.shape_cast %1 : vector<7x16x96xbf16> to vector<112x96xbf16>
    %c0_3 = arith.constant 0 : index
    %c0_4 = arith.constant 0 : index
    %c0_5 = arith.constant 0 : index
    %c0_6 = arith.constant 0 : index
    %3 = vector.load %arg2[%c0_3, %c0_4, %c0_5, %c0_6] : memref<5x2x96x84xbf16, #tpu.memory_space<vmem>>, vector<1x1x96x84xbf16>
    %4 = vector.shape_cast %3 : vector<1x1x96x84xbf16> to vector<96x84xbf16>
    %cst = arith.constant dense<0.000000e+00> : vector<112x84xf32>
    %5 = tpu.matmul %2, %4, %cst {dimension_numbers = #tpu.dot_dimension_numbers<[1], [0], [0], [1], [0, 0, 1, 1], [], []>} : vector<112x96xbf16>, vector<96x84xbf16>, vector<112x84xf32> -> vector<112x84xf32>
    %c1 = arith.constant 1 : index
    %c0_7 = arith.constant 0 : index
    %c0_8 = arith.constant 0 : index
    %c0_9 = arith.constant 0 : index
    %6 = vector.load %arg1[%c1, %c0_7, %c0_8, %c0_9] : memref<4x8x16x96xbf16, #tpu.memory_space<vmem>>, vector<1x7x16x96xbf16>
    %7 = vector.shape_cast %6 : vector<1x7x16x96xbf16> to vector<7x16x96xbf16>
    %8 = vector.shape_cast %7 : vector<7x16x96xbf16> to vector<112x96xbf16>
    %c1_10 = arith.constant 1 : index
    %c0_11 = arith.constant 0 : index
    %c0_12 = arith.constant 0 : index
    %c0_13 = arith.constant 0 : index
    %9 = vector.load %arg2[%c1_10, %c0_11, %c0_12, %c0_13] : memref<5x2x96x84xbf16, #tpu.memory_space<vmem>>, vector<1x1x96x84xbf16>
    %10 = vector.shape_cast %9 : vector<1x1x96x84xbf16> to vector<96x84xbf16>
    %cst_14 = arith.constant dense<0.000000e+00> : vector<112x84xf32>
    %11 = tpu.matmul %8, %10, %cst_14 {dimension_numbers = #tpu.dot_dimension_numbers<[1], [0], [0], [1], [0, 0, 1, 1], [], []>} : vector<112x96xbf16>, vector<96x84xbf16>, vector<112x84xf32> -> vector<112x84xf32>
    %12 = arith.addf %5, %11 : vector<112x84xf32>
    %c2 = arith.constant 2 : index
    %c0_15 = arith.constant 0 : index
    %c0_16 = arith.constant 0 : index
    %c0_17 = arith.constant 0 : index
    %13 = vector.load %arg1[%c2, %c0_15, %c0_16, %c0_17] : memref<4x8x16x96xbf16, #tpu.memory_space<vmem>>, vector<1x7x16x96xbf16>
    %14 = vector.shape_cast %13 : vector<1x7x16x96xbf16> to vector<7x16x96xbf16>
    %15 = vector.shape_cast %14 : vector<7x16x96xbf16> to vector<112x96xbf16>
    %c2_18 = arith.constant 2 : index
    %c0_19 = arith.constant 0 : index
    %c0_20 = arith.constant 0 : index
    %c0_21 = arith.constant 0 : index
    %16 = vector.load %arg2[%c2_18, %c0_19, %c0_20, %c0_21] : memref<5x2x96x84xbf16, #tpu.memory_space<vmem>>, vector<1x1x96x84xbf16>
    %17 = vector.shape_cast %16 : vector<1x1x96x84xbf16> to vector<96x84xbf16>
    %cst_22 = arith.constant dense<0.000000e+00> : vector<112x84xf32>
    %18 = tpu.matmul %15, %17, %cst_22 {dimension_numbers = #tpu.dot_dimension_numbers<[1], [0], [0], [1], [0, 0, 1, 1], [], []>} : vector<112x96xbf16>, vector<96x84xbf16>, vector<112x84xf32> -> vector<112x84xf32>
    %19 = arith.addf %12, %18 : vector<112x84xf32>
    %c3 = arith.constant 3 : index
    %c0_23 = arith.constant 0 : index
    %c0_24 = arith.constant 0 : index
    %c0_25 = arith.constant 0 : index
    %20 = vector.load %arg1[%c3, %c0_23, %c0_24, %c0_25] : memref<4x8x16x96xbf16, #tpu.memory_space<vmem>>, vector<1x7x16x96xbf16>
    %21 = vector.shape_cast %20 : vector<1x7x16x96xbf16> to vector<7x16x96xbf16>
    %22 = vector.shape_cast %21 : vector<7x16x96xbf16> to vector<112x96xbf16>
    %c3_26 = arith.constant 3 : index
    %c0_27 = arith.constant 0 : index
    %c0_28 = arith.constant 0 : index
    %c0_29 = arith.constant 0 : index
    %23 = vector.load %arg2[%c3_26, %c0_27, %c0_28, %c0_29] : memref<5x2x96x84xbf16, #tpu.memory_space<vmem>>, vector<1x1x96x84xbf16>
    %24 = vector.shape_cast %23 : vector<1x1x96x84xbf16> to vector<96x84xbf16>
    %cst_30 = arith.constant dense<0.000000e+00> : vector<112x84xf32>
    %25 = tpu.matmul %22, %24, %cst_30 {dimension_numbers = #tpu.dot_dimension_numbers<[1], [0], [0], [1], [0, 0, 1, 1], [], []>} : vector<112x96xbf16>, vector<96x84xbf16>, vector<112x84xf32> -> vector<112x84xf32>
    %26 = arith.addf %19, %25 : vector<112x84xf32>
    %c0_31 = arith.constant 0 : index
    %c1_32 = arith.constant 1 : index
    %c0_33 = arith.constant 0 : index
    %c0_34 = arith.constant 0 : index
    %27 = vector.load %arg1[%c0_31, %c1_32, %c0_33, %c0_34] : memref<4x8x16x96xbf16, #tpu.memory_space<vmem>>, vector<1x7x16x96xbf16>
    %28 = vector.shape_cast %27 : vector<1x7x16x96xbf16> to vector<7x16x96xbf16>
    %29 = vector.shape_cast %28 : vector<7x16x96xbf16> to vector<112x96xbf16>
    %c4 = arith.constant 4 : index
    %c0_35 = arith.constant 0 : index
    %c0_36 = arith.constant 0 : index
    %c0_37 = arith.constant 0 : index
    %30 = vector.load %arg2[%c4, %c0_35, %c0_36, %c0_37] : memref<5x2x96x84xbf16, #tpu.memory_space<vmem>>, vector<1x1x96x84xbf16>
    %31 = vector.shape_cast %30 : vector<1x1x96x84xbf16> to vector<96x84xbf16>
    %cst_38 = arith.constant dense<0.000000e+00> : vector<112x84xf32>
    %32 = tpu.matmul %29, %31, %cst_38 {dimension_numbers = #tpu.dot_dimension_numbers<[1], [0], [0], [1], [0, 0, 1, 1], [], []>} : vector<112x96xbf16>, vector<96x84xbf16>, vector<112x84xf32> -> vector<112x84xf32>
    %33 = arith.addf %26, %32 : vector<112x84xf32>
    %c0_39 = arith.constant 0 : index
    %c0_40 = arith.constant 0 : index
    %c0_41 = arith.constant 0 : index
    %c0_42 = arith.constant 0 : index
    %34 = vector.load %arg1[%c0_39, %c0_40, %c0_41, %c0_42] : memref<4x8x16x96xbf16, #tpu.memory_space<vmem>>, vector<1x7x16x96xbf16>
    %35 = vector.shape_cast %34 : vector<1x7x16x96xbf16> to vector<7x16x96xbf16>
    %36 = vector.shape_cast %35 : vector<7x16x96xbf16> to vector<112x96xbf16>
    %c0_43 = arith.constant 0 : index
    %c1_44 = arith.constant 1 : index
    %c0_45 = arith.constant 0 : index
    %c0_46 = arith.constant 0 : index
    %37 = vector.load %arg2[%c0_43, %c1_44, %c0_45, %c0_46] : memref<5x2x96x84xbf16, #tpu.memory_space<vmem>>, vector<1x1x96x84xbf16>
    %38 = vector.shape_cast %37 : vector<1x1x96x84xbf16> to vector<96x84xbf16>
    %cst_47 = arith.constant dense<0.000000e+00> : vector<112x84xf32>
    %39 = tpu.matmul %36, %38, %cst_47 {dimension_numbers = #tpu.dot_dimension_numbers<[1], [0], [0], [1], [0, 0, 1, 1], [], []>} : vector<112x96xbf16>, vector<96x84xbf16>, vector<112x84xf32> -> vector<112x84xf32>
    %c1_48 = arith.constant 1 : index
    %c0_49 = arith.constant 0 : index
    %c0_50 = arith.constant 0 : index
    %c0_51 = arith.constant 0 : index
    %40 = vector.load %arg1[%c1_48, %c0_49, %c0_50, %c0_51] : memref<4x8x16x96xbf16, #tpu.memory_space<vmem>>, vector<1x7x16x96xbf16>
    %41 = vector.shape_cast %40 : vector<1x7x16x96xbf16> to vector<7x16x96xbf16>
    %42 = vector.shape_cast %41 : vector<7x16x96xbf16> to vector<112x96xbf16>
    %c1_52 = arith.constant 1 : index
    %c1_53 = arith.constant 1 : index
    %c0_54 = arith.constant 0 : index
    %c0_55 = arith.constant 0 : index
    %43 = vector.load %arg2[%c1_52, %c1_53, %c0_54, %c0_55] : memref<5x2x96x84xbf16, #tpu.memory_space<vmem>>, vector<1x1x96x84xbf16>
    %44 = vector.shape_cast %43 : vector<1x1x96x84xbf16> to vector<96x84xbf16>
    %cst_56 = arith.constant dense<0.000000e+00> : vector<112x84xf32>
    %45 = tpu.matmul %42, %44, %cst_56 {dimension_numbers = #tpu.dot_dimension_numbers<[1], [0], [0], [1], [0, 0, 1, 1], [], []>} : vector<112x96xbf16>, vector<96x84xbf16>, vector<112x84xf32> -> vector<112x84xf32>
    %46 = arith.addf %39, %45 : vector<112x84xf32>
    %c2_57 = arith.constant 2 : index
    %c0_58 = arith.constant 0 : index
    %c0_59 = arith.constant 0 : index
    %c0_60 = arith.constant 0 : index
    %47 = vector.load %arg1[%c2_57, %c0_58, %c0_59, %c0_60] : memref<4x8x16x96xbf16, #tpu.memory_space<vmem>>, vector<1x7x16x96xbf16>
    %48 = vector.shape_cast %47 : vector<1x7x16x96xbf16> to vector<7x16x96xbf16>
    %49 = vector.shape_cast %48 : vector<7x16x96xbf16> to vector<112x96xbf16>
    %c2_61 = arith.constant 2 : index
    %c1_62 = arith.constant 1 : index
    %c0_63 = arith.constant 0 : index
    %c0_64 = arith.constant 0 : index
    %50 = vector.load %arg2[%c2_61, %c1_62, %c0_63, %c0_64] : memref<5x2x96x84xbf16, #tpu.memory_space<vmem>>, vector<1x1x96x84xbf16>
    %51 = vector.shape_cast %50 : vector<1x1x96x84xbf16> to vector<96x84xbf16>
    %cst_65 = arith.constant dense<0.000000e+00> : vector<112x84xf32>
    %52 = tpu.matmul %49, %51, %cst_65 {dimension_numbers = #tpu.dot_dimension_numbers<[1], [0], [0], [1], [0, 0, 1, 1], [], []>} : vector<112x96xbf16>, vector<96x84xbf16>, vector<112x84xf32> -> vector<112x84xf32>
    %53 = arith.addf %46, %52 : vector<112x84xf32>
    %c3_66 = arith.constant 3 : index
    %c0_67 = arith.constant 0 : index
    %c0_68 = arith.constant 0 : index
    %c0_69 = arith.constant 0 : index
    %54 = vector.load %arg1[%c3_66, %c0_67, %c0_68, %c0_69] : memref<4x8x16x96xbf16, #tpu.memory_space<vmem>>, vector<1x7x16x96xbf16>
    %55 = vector.shape_cast %54 : vector<1x7x16x96xbf16> to vector<7x16x96xbf16>
    %56 = vector.shape_cast %55 : vector<7x16x96xbf16> to vector<112x96xbf16>
    %c3_70 = arith.constant 3 : index
    %c1_71 = arith.constant 1 : index
    %c0_72 = arith.constant 0 : index
    %c0_73 = arith.constant 0 : index
    %57 = vector.load %arg2[%c3_70, %c1_71, %c0_72, %c0_73] : memref<5x2x96x84xbf16, #tpu.memory_space<vmem>>, vector<1x1x96x84xbf16>
    %58 = vector.shape_cast %57 : vector<1x1x96x84xbf16> to vector<96x84xbf16>
    %cst_74 = arith.constant dense<0.000000e+00> : vector<112x84xf32>
    %59 = tpu.matmul %56, %58, %cst_74 {dimension_numbers = #tpu.dot_dimension_numbers<[1], [0], [0], [1], [0, 0, 1, 1], [], []>} : vector<112x96xbf16>, vector<96x84xbf16>, vector<112x84xf32> -> vector<112x84xf32>
    %60 = arith.addf %53, %59 : vector<112x84xf32>
    %c0_75 = arith.constant 0 : index
    %c1_76 = arith.constant 1 : index
    %c0_77 = arith.constant 0 : index
    %c0_78 = arith.constant 0 : index
    %61 = vector.load %arg1[%c0_75, %c1_76, %c0_77, %c0_78] : memref<4x8x16x96xbf16, #tpu.memory_space<vmem>>, vector<1x7x16x96xbf16>
    %62 = vector.shape_cast %61 : vector<1x7x16x96xbf16> to vector<7x16x96xbf16>
    %63 = vector.shape_cast %62 : vector<7x16x96xbf16> to vector<112x96xbf16>
    %c4_79 = arith.constant 4 : index
    %c1_80 = arith.constant 1 : index
    %c0_81 = arith.constant 0 : index
    %c0_82 = arith.constant 0 : index
    %64 = vector.load %arg2[%c4_79, %c1_80, %c0_81, %c0_82] : memref<5x2x96x84xbf16, #tpu.memory_space<vmem>>, vector<1x1x96x84xbf16>
    %65 = vector.shape_cast %64 : vector<1x1x96x84xbf16> to vector<96x84xbf16>
    %cst_83 = arith.constant dense<0.000000e+00> : vector<112x84xf32>
    %66 = tpu.matmul %63, %65, %cst_83 {dimension_numbers = #tpu.dot_dimension_numbers<[1], [0], [0], [1], [0, 0, 1, 1], [], []>} : vector<112x96xbf16>, vector<96x84xbf16>, vector<112x84xf32> -> vector<112x84xf32>
    %67 = arith.addf %60, %66 : vector<112x84xf32>
    %68 = arith.maximumf %33, %67 : vector<112x84xf32>
    %c1_84 = arith.constant 1 : index
    %c0_85 = arith.constant 0 : index
    %c0_86 = arith.constant 0 : index
    %c0_87 = arith.constant 0 : index
    %69 = vector.load %arg1[%c1_84, %c0_85, %c0_86, %c0_87] : memref<4x8x16x96xbf16, #tpu.memory_space<vmem>>, vector<1x7x16x96xbf16>
    %70 = vector.shape_cast %69 : vector<1x7x16x96xbf16> to vector<7x16x96xbf16>
    %71 = vector.shape_cast %70 : vector<7x16x96xbf16> to vector<112x96xbf16>
    %c0_88 = arith.constant 0 : index
    %c0_89 = arith.constant 0 : index
    %c0_90 = arith.constant 0 : index
    %c0_91 = arith.constant 0 : index
    %72 = vector.load %arg2[%c0_88, %c0_89, %c0_90, %c0_91] : memref<5x2x96x84xbf16, #tpu.memory_space<vmem>>, vector<1x1x96x84xbf16>
    %73 = vector.shape_cast %72 : vector<1x1x96x84xbf16> to vector<96x84xbf16>
    %cst_92 = arith.constant dense<0.000000e+00> : vector<112x84xf32>
    %74 = tpu.matmul %71, %73, %cst_92 {dimension_numbers = #tpu.dot_dimension_numbers<[1], [0], [0], [1], [0, 0, 1, 1], [], []>} : vector<112x96xbf16>, vector<96x84xbf16>, vector<112x84xf32> -> vector<112x84xf32>
    %c2_93 = arith.constant 2 : index
    %c0_94 = arith.constant 0 : index
    %c0_95 = arith.constant 0 : index
    %c0_96 = arith.constant 0 : index
    %75 = vector.load %arg1[%c2_93, %c0_94, %c0_95, %c0_96] : memref<4x8x16x96xbf16, #tpu.memory_space<vmem>>, vector<1x7x16x96xbf16>
    %76 = vector.shape_cast %75 : vector<1x7x16x96xbf16> to vector<7x16x96xbf16>
    %77 = vector.shape_cast %76 : vector<7x16x96xbf16> to vector<112x96xbf16>
    %c1_97 = arith.constant 1 : index
    %c0_98 = arith.constant 0 : index
    %c0_99 = arith.constant 0 : index
    %c0_100 = arith.constant 0 : index
    %78 = vector.load %arg2[%c1_97, %c0_98, %c0_99, %c0_100] : memref<5x2x96x84xbf16, #tpu.memory_space<vmem>>, vector<1x1x96x84xbf16>
    %79 = vector.shape_cast %78 : vector<1x1x96x84xbf16> to vector<96x84xbf16>
    %cst_101 = arith.constant dense<0.000000e+00> : vector<112x84xf32>
    %80 = tpu.matmul %77, %79, %cst_101 {dimension_numbers = #tpu.dot_dimension_numbers<[1], [0], [0], [1], [0, 0, 1, 1], [], []>} : vector<112x96xbf16>, vector<96x84xbf16>, vector<112x84xf32> -> vector<112x84xf32>
    %81 = arith.addf %74, %80 : vector<112x84xf32>
    %c3_102 = arith.constant 3 : index
    %c0_103 = arith.constant 0 : index
    %c0_104 = arith.constant 0 : index
    %c0_105 = arith.constant 0 : index
    %82 = vector.load %arg1[%c3_102, %c0_103, %c0_104, %c0_105] : memref<4x8x16x96xbf16, #tpu.memory_space<vmem>>, vector<1x7x16x96xbf16>
    %83 = vector.shape_cast %82 : vector<1x7x16x96xbf16> to vector<7x16x96xbf16>
    %84 = vector.shape_cast %83 : vector<7x16x96xbf16> to vector<112x96xbf16>
    %c2_106 = arith.constant 2 : index
    %c0_107 = arith.constant 0 : index
    %c0_108 = arith.constant 0 : index
    %c0_109 = arith.constant 0 : index
    %85 = vector.load %arg2[%c2_106, %c0_107, %c0_108, %c0_109] : memref<5x2x96x84xbf16, #tpu.memory_space<vmem>>, vector<1x1x96x84xbf16>
    %86 = vector.shape_cast %85 : vector<1x1x96x84xbf16> to vector<96x84xbf16>
    %cst_110 = arith.constant dense<0.000000e+00> : vector<112x84xf32>
    %87 = tpu.matmul %84, %86, %cst_110 {dimension_numbers = #tpu.dot_dimension_numbers<[1], [0], [0], [1], [0, 0, 1, 1], [], []>} : vector<112x96xbf16>, vector<96x84xbf16>, vector<112x84xf32> -> vector<112x84xf32>
    %88 = arith.addf %81, %87 : vector<112x84xf32>
    %c0_111 = arith.constant 0 : index
    %c1_112 = arith.constant 1 : index
    %c0_113 = arith.constant 0 : index
    %c0_114 = arith.constant 0 : index
    %89 = vector.load %arg1[%c0_111, %c1_112, %c0_113, %c0_114] : memref<4x8x16x96xbf16, #tpu.memory_space<vmem>>, vector<1x7x16x96xbf16>
    %90 = vector.shape_cast %89 : vector<1x7x16x96xbf16> to vector<7x16x96xbf16>
    %91 = vector.shape_cast %90 : vector<7x16x96xbf16> to vector<112x96xbf16>
    %c3_115 = arith.constant 3 : index
    %c0_116 = arith.constant 0 : index
    %c0_117 = arith.constant 0 : index
    %c0_118 = arith.constant 0 : index
    %92 = vector.load %arg2[%c3_115, %c0_116, %c0_117, %c0_118] : memref<5x2x96x84xbf16, #tpu.memory_space<vmem>>, vector<1x1x96x84xbf16>
    %93 = vector.shape_cast %92 : vector<1x1x96x84xbf16> to vector<96x84xbf16>
    %cst_119 = arith.constant dense<0.000000e+00> : vector<112x84xf32>
    %94 = tpu.matmul %91, %93, %cst_119 {dimension_numbers = #tpu.dot_dimension_numbers<[1], [0], [0], [1], [0, 0, 1, 1], [], []>} : vector<112x96xbf16>, vector<96x84xbf16>, vector<112x84xf32> -> vector<112x84xf32>
    %95 = arith.addf %88, %94 : vector<112x84xf32>
    %c1_120 = arith.constant 1 : index
    %c1_121 = arith.constant 1 : index
    %c0_122 = arith.constant 0 : index
    %c0_123 = arith.constant 0 : index
    %96 = vector.load %arg1[%c1_120, %c1_121, %c0_122, %c0_123] : memref<4x8x16x96xbf16, #tpu.memory_space<vmem>>, vector<1x7x16x96xbf16>
    %97 = vector.shape_cast %96 : vector<1x7x16x96xbf16> to vector<7x16x96xbf16>
    %98 = vector.shape_cast %97 : vector<7x16x96xbf16> to vector<112x96xbf16>
    %c4_124 = arith.constant 4 : index
    %c0_125 = arith.constant 0 : index
    %c0_126 = arith.constant 0 : index
    %c0_127 = arith.constant 0 : index
    %99 = vector.load %arg2[%c4_124, %c0_125, %c0_126, %c0_127] : memref<5x2x96x84xbf16, #tpu.memory_space<vmem>>, vector<1x1x96x84xbf16>
    %100 = vector.shape_cast %99 : vector<1x1x96x84xbf16> to vector<96x84xbf16>
    %cst_128 = arith.constant dense<0.000000e+00> : vector<112x84xf32>
    %101 = tpu.matmul %98, %100, %cst_128 {dimension_numbers = #tpu.dot_dimension_numbers<[1], [0], [0], [1], [0, 0, 1, 1], [], []>} : vector<112x96xbf16>, vector<96x84xbf16>, vector<112x84xf32> -> vector<112x84xf32>
    %102 = arith.addf %95, %101 : vector<112x84xf32>
    %103 = arith.maximumf %68, %102 : vector<112x84xf32>
    %c1_129 = arith.constant 1 : index
    %c0_130 = arith.constant 0 : index
    %c0_131 = arith.constant 0 : index
    %c0_132 = arith.constant 0 : index
    %104 = vector.load %arg1[%c1_129, %c0_130, %c0_131, %c0_132] : memref<4x8x16x96xbf16, #tpu.memory_space<vmem>>, vector<1x7x16x96xbf16>
    %105 = vector.shape_cast %104 : vector<1x7x16x96xbf16> to vector<7x16x96xbf16>
    %106 = vector.shape_cast %105 : vector<7x16x96xbf16> to vector<112x96xbf16>
    %c0_133 = arith.constant 0 : index
    %c1_134 = arith.constant 1 : index
    %c0_135 = arith.constant 0 : index
    %c0_136 = arith.constant 0 : index
    %107 = vector.load %arg2[%c0_133, %c1_134, %c0_135, %c0_136] : memref<5x2x96x84xbf16, #tpu.memory_space<vmem>>, vector<1x1x96x84xbf16>
    %108 = vector.shape_cast %107 : vector<1x1x96x84xbf16> to vector<96x84xbf16>
    %cst_137 = arith.constant dense<0.000000e+00> : vector<112x84xf32>
    %109 = tpu.matmul %106, %108, %cst_137 {dimension_numbers = #tpu.dot_dimension_numbers<[1], [0], [0], [1], [0, 0, 1, 1], [], []>} : vector<112x96xbf16>, vector<96x84xbf16>, vector<112x84xf32> -> vector<112x84xf32>
    %c2_138 = arith.constant 2 : index
    %c0_139 = arith.constant 0 : index
    %c0_140 = arith.constant 0 : index
    %c0_141 = arith.constant 0 : index
    %110 = vector.load %arg1[%c2_138, %c0_139, %c0_140, %c0_141] : memref<4x8x16x96xbf16, #tpu.memory_space<vmem>>, vector<1x7x16x96xbf16>
    %111 = vector.shape_cast %110 : vector<1x7x16x96xbf16> to vector<7x16x96xbf16>
    %112 = vector.shape_cast %111 : vector<7x16x96xbf16> to vector<112x96xbf16>
    %c1_142 = arith.constant 1 : index
    %c1_143 = arith.constant 1 : index
    %c0_144 = arith.constant 0 : index
    %c0_145 = arith.constant 0 : index
    %113 = vector.load %arg2[%c1_142, %c1_143, %c0_144, %c0_145] : memref<5x2x96x84xbf16, #tpu.memory_space<vmem>>, vector<1x1x96x84xbf16>
    %114 = vector.shape_cast %113 : vector<1x1x96x84xbf16> to vector<96x84xbf16>
    %cst_146 = arith.constant dense<0.000000e+00> : vector<112x84xf32>
    %115 = tpu.matmul %112, %114, %cst_146 {dimension_numbers = #tpu.dot_dimension_numbers<[1], [0], [0], [1], [0, 0, 1, 1], [], []>} : vector<112x96xbf16>, vector<96x84xbf16>, vector<112x84xf32> -> vector<112x84xf32>
    %116 = arith.addf %109, %115 : vector<112x84xf32>
    %c3_147 = arith.constant 3 : index
    %c0_148 = arith.constant 0 : index
    %c0_149 = arith.constant 0 : index
    %c0_150 = arith.constant 0 : index
    %117 = vector.load %arg1[%c3_147, %c0_148, %c0_149, %c0_150] : memref<4x8x16x96xbf16, #tpu.memory_space<vmem>>, vector<1x7x16x96xbf16>
    %118 = vector.shape_cast %117 : vector<1x7x16x96xbf16> to vector<7x16x96xbf16>
    %119 = vector.shape_cast %118 : vector<7x16x96xbf16> to vector<112x96xbf16>
    %c2_151 = arith.constant 2 : index
    %c1_152 = arith.constant 1 : index
    %c0_153 = arith.constant 0 : index
    %c0_154 = arith.constant 0 : index
    %120 = vector.load %arg2[%c2_151, %c1_152, %c0_153, %c0_154] : memref<5x2x96x84xbf16, #tpu.memory_space<vmem>>, vector<1x1x96x84xbf16>
    %121 = vector.shape_cast %120 : vector<1x1x96x84xbf16> to vector<96x84xbf16>
    %cst_155 = arith.constant dense<0.000000e+00> : vector<112x84xf32>
    %122 = tpu.matmul %119, %121, %cst_155 {dimension_numbers = #tpu.dot_dimension_numbers<[1], [0], [0], [1], [0, 0, 1, 1], [], []>} : vector<112x96xbf16>, vector<96x84xbf16>, vector<112x84xf32> -> vector<112x84xf32>
    %123 = arith.addf %116, %122 : vector<112x84xf32>
    %c0_156 = arith.constant 0 : index
    %c1_157 = arith.constant 1 : index
    %c0_158 = arith.constant 0 : index
    %c0_159 = arith.constant 0 : index
    %124 = vector.load %arg1[%c0_156, %c1_157, %c0_158, %c0_159] : memref<4x8x16x96xbf16, #tpu.memory_space<vmem>>, vector<1x7x16x96xbf16>
    %125 = vector.shape_cast %124 : vector<1x7x16x96xbf16> to vector<7x16x96xbf16>
    %126 = vector.shape_cast %125 : vector<7x16x96xbf16> to vector<112x96xbf16>
    %c3_160 = arith.constant 3 : index
    %c1_161 = arith.constant 1 : index
    %c0_162 = arith.constant 0 : index
    %c0_163 = arith.constant 0 : index
    %127 = vector.load %arg2[%c3_160, %c1_161, %c0_162, %c0_163] : memref<5x2x96x84xbf16, #tpu.memory_space<vmem>>, vector<1x1x96x84xbf16>
    %128 = vector.shape_cast %127 : vector<1x1x96x84xbf16> to vector<96x84xbf16>
    %cst_164 = arith.constant dense<0.000000e+00> : vector<112x84xf32>
    %129 = tpu.matmul %126, %128, %cst_164 {dimension_numbers = #tpu.dot_dimension_numbers<[1], [0], [0], [1], [0, 0, 1, 1], [], []>} : vector<112x96xbf16>, vector<96x84xbf16>, vector<112x84xf32> -> vector<112x84xf32>
    %130 = arith.addf %123, %129 : vector<112x84xf32>
    %c1_165 = arith.constant 1 : index
    %c1_166 = arith.constant 1 : index
    %c0_167 = arith.constant 0 : index
    %c0_168 = arith.constant 0 : index
    %131 = vector.load %arg1[%c1_165, %c1_166, %c0_167, %c0_168] : memref<4x8x16x96xbf16, #tpu.memory_space<vmem>>, vector<1x7x16x96xbf16>
    %132 = vector.shape_cast %131 : vector<1x7x16x96xbf16> to vector<7x16x96xbf16>
    %133 = vector.shape_cast %132 : vector<7x16x96xbf16> to vector<112x96xbf16>
    %c4_169 = arith.constant 4 : index
    %c1_170 = arith.constant 1 : index
    %c0_171 = arith.constant 0 : index
    %c0_172 = arith.constant 0 : index
    %134 = vector.load %arg2[%c4_169, %c1_170, %c0_171, %c0_172] : memref<5x2x96x84xbf16, #tpu.memory_space<vmem>>, vector<1x1x96x84xbf16>
    %135 = vector.shape_cast %134 : vector<1x1x96x84xbf16> to vector<96x84xbf16>
    %cst_173 = arith.constant dense<0.000000e+00> : vector<112x84xf32>
    %136 = tpu.matmul %133, %135, %cst_173 {dimension_numbers = #tpu.dot_dimension_numbers<[1], [0], [0], [1], [0, 0, 1, 1], [], []>} : vector<112x96xbf16>, vector<96x84xbf16>, vector<112x84xf32> -> vector<112x84xf32>
    %137 = arith.addf %130, %136 : vector<112x84xf32>
    %138 = arith.maximumf %103, %137 : vector<112x84xf32>
    %c0_174 = arith.constant 0 : index
    %c0_175 = arith.constant 0 : index
    %139 = vector.load %arg3[%c0_174, %c0_175] : memref<1x84xf32, #tpu.memory_space<vmem>>, vector<1x84xf32>
    %140 = vector.broadcast %139 : vector<1x84xf32> to vector<112x84xf32>
    %141 = arith.addf %138, %140 : vector<112x84xf32>
    %cst_176 = arith.constant 0.000000e+00 : f32
    %142 = vector.broadcast %cst_176 : f32 to vector<112x84xf32>
    %143 = arith.maximumf %141, %142 : vector<112x84xf32>
    %144 = arith.truncf %143 : vector<112x84xf32> to vector<112x84xbf16>
    %145 = vector.shape_cast %144 : vector<112x84xbf16> to vector<7x16x84xbf16>
    %c2_177 = arith.constant 2 : index
    %c0_178 = arith.constant 0 : index
    %c0_179 = arith.constant 0 : index
    %c0_180 = arith.constant 0 : index
    %146 = vector.load %arg1[%c2_177, %c0_178, %c0_179, %c0_180] : memref<4x8x16x96xbf16, #tpu.memory_space<vmem>>, vector<1x7x16x96xbf16>
    %147 = vector.shape_cast %146 : vector<1x7x16x96xbf16> to vector<7x16x96xbf16>
    %148 = vector.shape_cast %147 : vector<7x16x96xbf16> to vector<112x96xbf16>
    %c0_181 = arith.constant 0 : index
    %c0_182 = arith.constant 0 : index
    %c0_183 = arith.constant 0 : index
    %c0_184 = arith.constant 0 : index
    %149 = vector.load %arg2[%c0_181, %c0_182, %c0_183, %c0_184] : memref<5x2x96x84xbf16, #tpu.memory_space<vmem>>, vector<1x1x96x84xbf16>
    %150 = vector.shape_cast %149 : vector<1x1x96x84xbf16> to vector<96x84xbf16>
    %cst_185 = arith.constant dense<0.000000e+00> : vector<112x84xf32>
    %151 = tpu.matmul %148, %150, %cst_185 {dimension_numbers = #tpu.dot_dimension_numbers<[1], [0], [0], [1], [0, 0, 1, 1], [], []>} : vector<112x96xbf16>, vector<96x84xbf16>, vector<112x84xf32> -> vector<112x84xf32>
    %c3_186 = arith.constant 3 : index
    %c0_187 = arith.constant 0 : index
    %c0_188 = arith.constant 0 : index
    %c0_189 = arith.constant 0 : index
    %152 = vector.load %arg1[%c3_186, %c0_187, %c0_188, %c0_189] : memref<4x8x16x96xbf16, #tpu.memory_space<vmem>>, vector<1x7x16x96xbf16>
    %153 = vector.shape_cast %152 : vector<1x7x16x96xbf16> to vector<7x16x96xbf16>
    %154 = vector.shape_cast %153 : vector<7x16x96xbf16> to vector<112x96xbf16>
    %c1_190 = arith.constant 1 : index
    %c0_191 = arith.constant 0 : index
    %c0_192 = arith.constant 0 : index
    %c0_193 = arith.constant 0 : index
    %155 = vector.load %arg2[%c1_190, %c0_191, %c0_192, %c0_193] : memref<5x2x96x84xbf16, #tpu.memory_space<vmem>>, vector<1x1x96x84xbf16>
    %156 = vector.shape_cast %155 : vector<1x1x96x84xbf16> to vector<96x84xbf16>
    %cst_194 = arith.constant dense<0.000000e+00> : vector<112x84xf32>
    %157 = tpu.matmul %154, %156, %cst_194 {dimension_numbers = #tpu.dot_dimension_numbers<[1], [0], [0], [1], [0, 0, 1, 1], [], []>} : vector<112x96xbf16>, vector<96x84xbf16>, vector<112x84xf32> -> vector<112x84xf32>
    %158 = arith.addf %151, %157 : vector<112x84xf32>
    %c0_195 = arith.constant 0 : index
    %c1_196 = arith.constant 1 : index
    %c0_197 = arith.constant 0 : index
    %c0_198 = arith.constant 0 : index
    %159 = vector.load %arg1[%c0_195, %c1_196, %c0_197, %c0_198] : memref<4x8x16x96xbf16, #tpu.memory_space<vmem>>, vector<1x7x16x96xbf16>
    %160 = vector.shape_cast %159 : vector<1x7x16x96xbf16> to vector<7x16x96xbf16>
    %161 = vector.shape_cast %160 : vector<7x16x96xbf16> to vector<112x96xbf16>
    %c2_199 = arith.constant 2 : index
    %c0_200 = arith.constant 0 : index
    %c0_201 = arith.constant 0 : index
    %c0_202 = arith.constant 0 : index
    %162 = vector.load %arg2[%c2_199, %c0_200, %c0_201, %c0_202] : memref<5x2x96x84xbf16, #tpu.memory_space<vmem>>, vector<1x1x96x84xbf16>
    %163 = vector.shape_cast %162 : vector<1x1x96x84xbf16> to vector<96x84xbf16>
    %cst_203 = arith.constant dense<0.000000e+00> : vector<112x84xf32>
    %164 = tpu.matmul %161, %163, %cst_203 {dimension_numbers = #tpu.dot_dimension_numbers<[1], [0], [0], [1], [0, 0, 1, 1], [], []>} : vector<112x96xbf16>, vector<96x84xbf16>, vector<112x84xf32> -> vector<112x84xf32>
    %165 = arith.addf %158, %164 : vector<112x84xf32>
    %c1_204 = arith.constant 1 : index
    %c1_205 = arith.constant 1 : index
    %c0_206 = arith.constant 0 : index
    %c0_207 = arith.constant 0 : index
    %166 = vector.load %arg1[%c1_204, %c1_205, %c0_206, %c0_207] : memref<4x8x16x96xbf16, #tpu.memory_space<vmem>>, vector<1x7x16x96xbf16>
    %167 = vector.shape_cast %166 : vector<1x7x16x96xbf16> to vector<7x16x96xbf16>
    %168 = vector.shape_cast %167 : vector<7x16x96xbf16> to vector<112x96xbf16>
    %c3_208 = arith.constant 3 : index
    %c0_209 = arith.constant 0 : index
    %c0_210 = arith.constant 0 : index
    %c0_211 = arith.constant 0 : index
    %169 = vector.load %arg2[%c3_208, %c0_209, %c0_210, %c0_211] : memref<5x2x96x84xbf16, #tpu.memory_space<vmem>>, vector<1x1x96x84xbf16>
    %170 = vector.shape_cast %169 : vector<1x1x96x84xbf16> to vector<96x84xbf16>
    %cst_212 = arith.constant dense<0.000000e+00> : vector<112x84xf32>
    %171 = tpu.matmul %168, %170, %cst_212 {dimension_numbers = #tpu.dot_dimension_numbers<[1], [0], [0], [1], [0, 0, 1, 1], [], []>} : vector<112x96xbf16>, vector<96x84xbf16>, vector<112x84xf32> -> vector<112x84xf32>
    %172 = arith.addf %165, %171 : vector<112x84xf32>
    %c2_213 = arith.constant 2 : index
    %c1_214 = arith.constant 1 : index
    %c0_215 = arith.constant 0 : index
    %c0_216 = arith.constant 0 : index
    %173 = vector.load %arg1[%c2_213, %c1_214, %c0_215, %c0_216] : memref<4x8x16x96xbf16, #tpu.memory_space<vmem>>, vector<1x7x16x96xbf16>
    %174 = vector.shape_cast %173 : vector<1x7x16x96xbf16> to vector<7x16x96xbf16>
    %175 = vector.shape_cast %174 : vector<7x16x96xbf16> to vector<112x96xbf16>
    %c4_217 = arith.constant 4 : index
    %c0_218 = arith.constant 0 : index
    %c0_219 = arith.constant 0 : index
    %c0_220 = arith.constant 0 : index
    %176 = vector.load %arg2[%c4_217, %c0_218, %c0_219, %c0_220] : memref<5x2x96x84xbf16, #tpu.memory_space<vmem>>, vector<1x1x96x84xbf16>
    %177 = vector.shape_cast %176 : vector<1x1x96x84xbf16> to vector<96x84xbf16>
    %cst_221 = arith.constant dense<0.000000e+00> : vector<112x84xf32>
    %178 = tpu.matmul %175, %177, %cst_221 {dimension_numbers = #tpu.dot_dimension_numbers<[1], [0], [0], [1], [0, 0, 1, 1], [], []>} : vector<112x96xbf16>, vector<96x84xbf16>, vector<112x84xf32> -> vector<112x84xf32>
    %179 = arith.addf %172, %178 : vector<112x84xf32>
    %c2_222 = arith.constant 2 : index
    %c0_223 = arith.constant 0 : index
    %c0_224 = arith.constant 0 : index
    %c0_225 = arith.constant 0 : index
    %180 = vector.load %arg1[%c2_222, %c0_223, %c0_224, %c0_225] : memref<4x8x16x96xbf16, #tpu.memory_space<vmem>>, vector<1x7x16x96xbf16>
    %181 = vector.shape_cast %180 : vector<1x7x16x96xbf16> to vector<7x16x96xbf16>
    %182 = vector.shape_cast %181 : vector<7x16x96xbf16> to vector<112x96xbf16>
    %c0_226 = arith.constant 0 : index
    %c1_227 = arith.constant 1 : index
    %c0_228 = arith.constant 0 : index
    %c0_229 = arith.constant 0 : index
    %183 = vector.load %arg2[%c0_226, %c1_227, %c0_228, %c0_229] : memref<5x2x96x84xbf16, #tpu.memory_space<vmem>>, vector<1x1x96x84xbf16>
    %184 = vector.shape_cast %183 : vector<1x1x96x84xbf16> to vector<96x84xbf16>
    %cst_230 = arith.constant dense<0.000000e+00> : vector<112x84xf32>
    %185 = tpu.matmul %182, %184, %cst_230 {dimension_numbers = #tpu.dot_dimension_numbers<[1], [0], [0], [1], [0, 0, 1, 1], [], []>} : vector<112x96xbf16>, vector<96x84xbf16>, vector<112x84xf32> -> vector<112x84xf32>
    %c3_231 = arith.constant 3 : index
    %c0_232 = arith.constant 0 : index
    %c0_233 = arith.constant 0 : index
    %c0_234 = arith.constant 0 : index
    %186 = vector.load %arg1[%c3_231, %c0_232, %c0_233, %c0_234] : memref<4x8x16x96xbf16, #tpu.memory_space<vmem>>, vector<1x7x16x96xbf16>
    %187 = vector.shape_cast %186 : vector<1x7x16x96xbf16> to vector<7x16x96xbf16>
    %188 = vector.shape_cast %187 : vector<7x16x96xbf16> to vector<112x96xbf16>
    %c1_235 = arith.constant 1 : index
    %c1_236 = arith.constant 1 : index
    %c0_237 = arith.constant 0 : index
    %c0_238 = arith.constant 0 : index
    %189 = vector.load %arg2[%c1_235, %c1_236, %c0_237, %c0_238] : memref<5x2x96x84xbf16, #tpu.memory_space<vmem>>, vector<1x1x96x84xbf16>
    %190 = vector.shape_cast %189 : vector<1x1x96x84xbf16> to vector<96x84xbf16>
    %cst_239 = arith.constant dense<0.000000e+00> : vector<112x84xf32>
    %191 = tpu.matmul %188, %190, %cst_239 {dimension_numbers = #tpu.dot_dimension_numbers<[1], [0], [0], [1], [0, 0, 1, 1], [], []>} : vector<112x96xbf16>, vector<96x84xbf16>, vector<112x84xf32> -> vector<112x84xf32>
    %192 = arith.addf %185, %191 : vector<112x84xf32>
    %c0_240 = arith.constant 0 : index
    %c1_241 = arith.constant 1 : index
    %c0_242 = arith.constant 0 : index
    %c0_243 = arith.constant 0 : index
    %193 = vector.load %arg1[%c0_240, %c1_241, %c0_242, %c0_243] : memref<4x8x16x96xbf16, #tpu.memory_space<vmem>>, vector<1x7x16x96xbf16>
    %194 = vector.shape_cast %193 : vector<1x7x16x96xbf16> to vector<7x16x96xbf16>
    %195 = vector.shape_cast %194 : vector<7x16x96xbf16> to vector<112x96xbf16>
    %c2_244 = arith.constant 2 : index
    %c1_245 = arith.constant 1 : index
    %c0_246 = arith.constant 0 : index
    %c0_247 = arith.constant 0 : index
    %196 = vector.load %arg2[%c2_244, %c1_245, %c0_246, %c0_247] : memref<5x2x96x84xbf16, #tpu.memory_space<vmem>>, vector<1x1x96x84xbf16>
    %197 = vector.shape_cast %196 : vector<1x1x96x84xbf16> to vector<96x84xbf16>
    %cst_248 = arith.constant dense<0.000000e+00> : vector<112x84xf32>
    %198 = tpu.matmul %195, %197, %cst_248 {dimension_numbers = #tpu.dot_dimension_numbers<[1], [0], [0], [1], [0, 0, 1, 1], [], []>} : vector<112x96xbf16>, vector<96x84xbf16>, vector<112x84xf32> -> vector<112x84xf32>
    %199 = arith.addf %192, %198 : vector<112x84xf32>
    %c1_249 = arith.constant 1 : index
    %c1_250 = arith.constant 1 : index
    %c0_251 = arith.constant 0 : index
    %c0_252 = arith.constant 0 : index
    %200 = vector.load %arg1[%c1_249, %c1_250, %c0_251, %c0_252] : memref<4x8x16x96xbf16, #tpu.memory_space<vmem>>, vector<1x7x16x96xbf16>
    %201 = vector.shape_cast %200 : vector<1x7x16x96xbf16> to vector<7x16x96xbf16>
    %202 = vector.shape_cast %201 : vector<7x16x96xbf16> to vector<112x96xbf16>
    %c3_253 = arith.constant 3 : index
    %c1_254 = arith.constant 1 : index
    %c0_255 = arith.constant 0 : index
    %c0_256 = arith.constant 0 : index
    %203 = vector.load %arg2[%c3_253, %c1_254, %c0_255, %c0_256] : memref<5x2x96x84xbf16, #tpu.memory_space<vmem>>, vector<1x1x96x84xbf16>
    %204 = vector.shape_cast %203 : vector<1x1x96x84xbf16> to vector<96x84xbf16>
    %cst_257 = arith.constant dense<0.000000e+00> : vector<112x84xf32>
    %205 = tpu.matmul %202, %204, %cst_257 {dimension_numbers = #tpu.dot_dimension_numbers<[1], [0], [0], [1], [0, 0, 1, 1], [], []>} : vector<112x96xbf16>, vector<96x84xbf16>, vector<112x84xf32> -> vector<112x84xf32>
    %206 = arith.addf %199, %205 : vector<112x84xf32>
    %c2_258 = arith.constant 2 : index
    %c1_259 = arith.constant 1 : index
    %c0_260 = arith.constant 0 : index
    %c0_261 = arith.constant 0 : index
    %207 = vector.load %arg1[%c2_258, %c1_259, %c0_260, %c0_261] : memref<4x8x16x96xbf16, #tpu.memory_space<vmem>>, vector<1x7x16x96xbf16>
    %208 = vector.shape_cast %207 : vector<1x7x16x96xbf16> to vector<7x16x96xbf16>
    %209 = vector.shape_cast %208 : vector<7x16x96xbf16> to vector<112x96xbf16>
    %c4_262 = arith.constant 4 : index
    %c1_263 = arith.constant 1 : index
    %c0_264 = arith.constant 0 : index
    %c0_265 = arith.constant 0 : index
    %210 = vector.load %arg2[%c4_262, %c1_263, %c0_264, %c0_265] : memref<5x2x96x84xbf16, #tpu.memory_space<vmem>>, vector<1x1x96x84xbf16>
    %211 = vector.shape_cast %210 : vector<1x1x96x84xbf16> to vector<96x84xbf16>
    %cst_266 = arith.constant dense<0.000000e+00> : vector<112x84xf32>
    %212 = tpu.matmul %209, %211, %cst_266 {dimension_numbers = #tpu.dot_dimension_numbers<[1], [0], [0], [1], [0, 0, 1, 1], [], []>} : vector<112x96xbf16>, vector<96x84xbf16>, vector<112x84xf32> -> vector<112x84xf32>
    %213 = arith.addf %206, %212 : vector<112x84xf32>
    %214 = arith.maximumf %179, %213 : vector<112x84xf32>
    %c3_267 = arith.constant 3 : index
    %c0_268 = arith.constant 0 : index
    %c0_269 = arith.constant 0 : index
    %c0_270 = arith.constant 0 : index
    %215 = vector.load %arg1[%c3_267, %c0_268, %c0_269, %c0_270] : memref<4x8x16x96xbf16, #tpu.memory_space<vmem>>, vector<1x7x16x96xbf16>
    %216 = vector.shape_cast %215 : vector<1x7x16x96xbf16> to vector<7x16x96xbf16>
    %217 = vector.shape_cast %216 : vector<7x16x96xbf16> to vector<112x96xbf16>
    %c0_271 = arith.constant 0 : index
    %c0_272 = arith.constant 0 : index
    %c0_273 = arith.constant 0 : index
    %c0_274 = arith.constant 0 : index
    %218 = vector.load %arg2[%c0_271, %c0_272, %c0_273, %c0_274] : memref<5x2x96x84xbf16, #tpu.memory_space<vmem>>, vector<1x1x96x84xbf16>
    %219 = vector.shape_cast %218 : vector<1x1x96x84xbf16> to vector<96x84xbf16>
    %cst_275 = arith.constant dense<0.000000e+00> : vector<112x84xf32>
    %220 = tpu.matmul %217, %219, %cst_275 {dimension_numbers = #tpu.dot_dimension_numbers<[1], [0], [0], [1], [0, 0, 1, 1], [], []>} : vector<112x96xbf16>, vector<96x84xbf16>, vector<112x84xf32> -> vector<112x84xf32>
    %c0_276 = arith.constant 0 : index
    %c1_277 = arith.constant 1 : index
    %c0_278 = arith.constant 0 : index
    %c0_279 = arith.constant 0 : index
    %221 = vector.load %arg1[%c0_276, %c1_277, %c0_278, %c0_279] : memref<4x8x16x96xbf16, #tpu.memory_space<vmem>>, vector<1x7x16x96xbf16>
    %222 = vector.shape_cast %221 : vector<1x7x16x96xbf16> to vector<7x16x96xbf16>
    %223 = vector.shape_cast %222 : vector<7x16x96xbf16> to vector<112x96xbf16>
    %c1_280 = arith.constant 1 : index
    %c0_281 = arith.constant 0 : index
    %c0_282 = arith.constant 0 : index
    %c0_283 = arith.constant 0 : index
    %224 = vector.load %arg2[%c1_280, %c0_281, %c0_282, %c0_283] : memref<5x2x96x84xbf16, #tpu.memory_space<vmem>>, vector<1x1x96x84xbf16>
    %225 = vector.shape_cast %224 : vector<1x1x96x84xbf16> to vector<96x84xbf16>
    %cst_284 = arith.constant dense<0.000000e+00> : vector<112x84xf32>
    %226 = tpu.matmul %223, %225, %cst_284 {dimension_numbers = #tpu.dot_dimension_numbers<[1], [0], [0], [1], [0, 0, 1, 1], [], []>} : vector<112x96xbf16>, vector<96x84xbf16>, vector<112x84xf32> -> vector<112x84xf32>
    %227 = arith.addf %220, %226 : vector<112x84xf32>
    %c1_285 = arith.constant 1 : index
    %c1_286 = arith.constant 1 : index
    %c0_287 = arith.constant 0 : index
    %c0_288 = arith.constant 0 : index
    %228 = vector.load %arg1[%c1_285, %c1_286, %c0_287, %c0_288] : memref<4x8x16x96xbf16, #tpu.memory_space<vmem>>, vector<1x7x16x96xbf16>
    %229 = vector.shape_cast %228 : vector<1x7x16x96xbf16> to vector<7x16x96xbf16>
    %230 = vector.shape_cast %229 : vector<7x16x96xbf16> to vector<112x96xbf16>
    %c2_289 = arith.constant 2 : index
    %c0_290 = arith.constant 0 : index
    %c0_291 = arith.constant 0 : index
    %c0_292 = arith.constant 0 : index
    %231 = vector.load %arg2[%c2_289, %c0_290, %c0_291, %c0_292] : memref<5x2x96x84xbf16, #tpu.memory_space<vmem>>, vector<1x1x96x84xbf16>
    %232 = vector.shape_cast %231 : vector<1x1x96x84xbf16> to vector<96x84xbf16>
    %cst_293 = arith.constant dense<0.000000e+00> : vector<112x84xf32>
    %233 = tpu.matmul %230, %232, %cst_293 {dimension_numbers = #tpu.dot_dimension_numbers<[1], [0], [0], [1], [0, 0, 1, 1], [], []>} : vector<112x96xbf16>, vector<96x84xbf16>, vector<112x84xf32> -> vector<112x84xf32>
    %234 = arith.addf %227, %233 : vector<112x84xf32>
    %c2_294 = arith.constant 2 : index
    %c1_295 = arith.constant 1 : index
    %c0_296 = arith.constant 0 : index
    %c0_297 = arith.constant 0 : index
    %235 = vector.load %arg1[%c2_294, %c1_295, %c0_296, %c0_297] : memref<4x8x16x96xbf16, #tpu.memory_space<vmem>>, vector<1x7x16x96xbf16>
    %236 = vector.shape_cast %235 : vector<1x7x16x96xbf16> to vector<7x16x96xbf16>
    %237 = vector.shape_cast %236 : vector<7x16x96xbf16> to vector<112x96xbf16>
    %c3_298 = arith.constant 3 : index
    %c0_299 = arith.constant 0 : index
    %c0_300 = arith.constant 0 : index
    %c0_301 = arith.constant 0 : index
    %238 = vector.load %arg2[%c3_298, %c0_299, %c0_300, %c0_301] : memref<5x2x96x84xbf16, #tpu.memory_space<vmem>>, vector<1x1x96x84xbf16>
    %239 = vector.shape_cast %238 : vector<1x1x96x84xbf16> to vector<96x84xbf16>
    %cst_302 = arith.constant dense<0.000000e+00> : vector<112x84xf32>
    %240 = tpu.matmul %237, %239, %cst_302 {dimension_numbers = #tpu.dot_dimension_numbers<[1], [0], [0], [1], [0, 0, 1, 1], [], []>} : vector<112x96xbf16>, vector<96x84xbf16>, vector<112x84xf32> -> vector<112x84xf32>
    %241 = arith.addf %234, %240 : vector<112x84xf32>
    %c3_303 = arith.constant 3 : index
    %c1_304 = arith.constant 1 : index
    %c0_305 = arith.constant 0 : index
    %c0_306 = arith.constant 0 : index
    %242 = vector.load %arg1[%c3_303, %c1_304, %c0_305, %c0_306] : memref<4x8x16x96xbf16, #tpu.memory_space<vmem>>, vector<1x7x16x96xbf16>
    %243 = vector.shape_cast %242 : vector<1x7x16x96xbf16> to vector<7x16x96xbf16>
    %244 = vector.shape_cast %243 : vector<7x16x96xbf16> to vector<112x96xbf16>
    %c4_307 = arith.constant 4 : index
    %c0_308 = arith.constant 0 : index
    %c0_309 = arith.constant 0 : index
    %c0_310 = arith.constant 0 : index
    %245 = vector.load %arg2[%c4_307, %c0_308, %c0_309, %c0_310] : memref<5x2x96x84xbf16, #tpu.memory_space<vmem>>, vector<1x1x96x84xbf16>
    %246 = vector.shape_cast %245 : vector<1x1x96x84xbf16> to vector<96x84xbf16>
    %cst_311 = arith.constant dense<0.000000e+00> : vector<112x84xf32>
    %247 = tpu.matmul %244, %246, %cst_311 {dimension_numbers = #tpu.dot_dimension_numbers<[1], [0], [0], [1], [0, 0, 1, 1], [], []>} : vector<112x96xbf16>, vector<96x84xbf16>, vector<112x84xf32> -> vector<112x84xf32>
    %248 = arith.addf %241, %247 : vector<112x84xf32>
    %249 = arith.maximumf %214, %248 : vector<112x84xf32>
    %c3_312 = arith.constant 3 : index
    %c0_313 = arith.constant 0 : index
    %c0_314 = arith.constant 0 : index
    %c0_315 = arith.constant 0 : index
    %250 = vector.load %arg1[%c3_312, %c0_313, %c0_314, %c0_315] : memref<4x8x16x96xbf16, #tpu.memory_space<vmem>>, vector<1x7x16x96xbf16>
    %251 = vector.shape_cast %250 : vector<1x7x16x96xbf16> to vector<7x16x96xbf16>
    %252 = vector.shape_cast %251 : vector<7x16x96xbf16> to vector<112x96xbf16>
    %c0_316 = arith.constant 0 : index
    %c1_317 = arith.constant 1 : index
    %c0_318 = arith.constant 0 : index
    %c0_319 = arith.constant 0 : index
    %253 = vector.load %arg2[%c0_316, %c1_317, %c0_318, %c0_319] : memref<5x2x96x84xbf16, #tpu.memory_space<vmem>>, vector<1x1x96x84xbf16>
    %254 = vector.shape_cast %253 : vector<1x1x96x84xbf16> to vector<96x84xbf16>
    %cst_320 = arith.constant dense<0.000000e+00> : vector<112x84xf32>
    %255 = tpu.matmul %252, %254, %cst_320 {dimension_numbers = #tpu.dot_dimension_numbers<[1], [0], [0], [1], [0, 0, 1, 1], [], []>} : vector<112x96xbf16>, vector<96x84xbf16>, vector<112x84xf32> -> vector<112x84xf32>
    %c0_321 = arith.constant 0 : index
    %c1_322 = arith.constant 1 : index
    %c0_323 = arith.constant 0 : index
    %c0_324 = arith.constant 0 : index
    %256 = vector.load %arg1[%c0_321, %c1_322, %c0_323, %c0_324] : memref<4x8x16x96xbf16, #tpu.memory_space<vmem>>, vector<1x7x16x96xbf16>
    %257 = vector.shape_cast %256 : vector<1x7x16x96xbf16> to vector<7x16x96xbf16>
    %258 = vector.shape_cast %257 : vector<7x16x96xbf16> to vector<112x96xbf16>
    %c1_325 = arith.constant 1 : index
    %c1_326 = arith.constant 1 : index
    %c0_327 = arith.constant 0 : index
    %c0_328 = arith.constant 0 : index
    %259 = vector.load %arg2[%c1_325, %c1_326, %c0_327, %c0_328] : memref<5x2x96x84xbf16, #tpu.memory_space<vmem>>, vector<1x1x96x84xbf16>
    %260 = vector.shape_cast %259 : vector<1x1x96x84xbf16> to vector<96x84xbf16>
    %cst_329 = arith.constant dense<0.000000e+00> : vector<112x84xf32>
    %261 = tpu.matmul %258, %260, %cst_329 {dimension_numbers = #tpu.dot_dimension_numbers<[1], [0], [0], [1], [0, 0, 1, 1], [], []>} : vector<112x96xbf16>, vector<96x84xbf16>, vector<112x84xf32> -> vector<112x84xf32>
    %262 = arith.addf %255, %261 : vector<112x84xf32>
    %c1_330 = arith.constant 1 : index
    %c1_331 = arith.constant 1 : index
    %c0_332 = arith.constant 0 : index
    %c0_333 = arith.constant 0 : index
    %263 = vector.load %arg1[%c1_330, %c1_331, %c0_332, %c0_333] : memref<4x8x16x96xbf16, #tpu.memory_space<vmem>>, vector<1x7x16x96xbf16>
    %264 = vector.shape_cast %263 : vector<1x7x16x96xbf16> to vector<7x16x96xbf16>
    %265 = vector.shape_cast %264 : vector<7x16x96xbf16> to vector<112x96xbf16>
    %c2_334 = arith.constant 2 : index
    %c1_335 = arith.constant 1 : index
    %c0_336 = arith.constant 0 : index
    %c0_337 = arith.constant 0 : index
    %266 = vector.load %arg2[%c2_334, %c1_335, %c0_336, %c0_337] : memref<5x2x96x84xbf16, #tpu.memory_space<vmem>>, vector<1x1x96x84xbf16>
    %267 = vector.shape_cast %266 : vector<1x1x96x84xbf16> to vector<96x84xbf16>
    %cst_338 = arith.constant dense<0.000000e+00> : vector<112x84xf32>
    %268 = tpu.matmul %265, %267, %cst_338 {dimension_numbers = #tpu.dot_dimension_numbers<[1], [0], [0], [1], [0, 0, 1, 1], [], []>} : vector<112x96xbf16>, vector<96x84xbf16>, vector<112x84xf32> -> vector<112x84xf32>
    %269 = arith.addf %262, %268 : vector<112x84xf32>
    %c2_339 = arith.constant 2 : index
    %c1_340 = arith.constant 1 : index
    %c0_341 = arith.constant 0 : index
    %c0_342 = arith.constant 0 : index
    %270 = vector.load %arg1[%c2_339, %c1_340, %c0_341, %c0_342] : memref<4x8x16x96xbf16, #tpu.memory_space<vmem>>, vector<1x7x16x96xbf16>
    %271 = vector.shape_cast %270 : vector<1x7x16x96xbf16> to vector<7x16x96xbf16>
    %272 = vector.shape_cast %271 : vector<7x16x96xbf16> to vector<112x96xbf16>
    %c3_343 = arith.constant 3 : index
    %c1_344 = arith.constant 1 : index
    %c0_345 = arith.constant 0 : index
    %c0_346 = arith.constant 0 : index
    %273 = vector.load %arg2[%c3_343, %c1_344, %c0_345, %c0_346] : memref<5x2x96x84xbf16, #tpu.memory_space<vmem>>, vector<1x1x96x84xbf16>
    %274 = vector.shape_cast %273 : vector<1x1x96x84xbf16> to vector<96x84xbf16>
    %cst_347 = arith.constant dense<0.000000e+00> : vector<112x84xf32>
    %275 = tpu.matmul %272, %274, %cst_347 {dimension_numbers = #tpu.dot_dimension_numbers<[1], [0], [0], [1], [0, 0, 1, 1], [], []>} : vector<112x96xbf16>, vector<96x84xbf16>, vector<112x84xf32> -> vector<112x84xf32>
    %276 = arith.addf %269, %275 : vector<112x84xf32>
    %c3_348 = arith.constant 3 : index
    %c1_349 = arith.constant 1 : index
    %c0_350 = arith.constant 0 : index
    %c0_351 = arith.constant 0 : index
    %277 = vector.load %arg1[%c3_348, %c1_349, %c0_350, %c0_351] : memref<4x8x16x96xbf16, #tpu.memory_space<vmem>>, vector<1x7x16x96xbf16>
    %278 = vector.shape_cast %277 : vector<1x7x16x96xbf16> to vector<7x16x96xbf16>
    %279 = vector.shape_cast %278 : vector<7x16x96xbf16> to vector<112x96xbf16>
    %c4_352 = arith.constant 4 : index
    %c1_353 = arith.constant 1 : index
    %c0_354 = arith.constant 0 : index
    %c0_355 = arith.constant 0 : index
    %280 = vector.load %arg2[%c4_352, %c1_353, %c0_354, %c0_355] : memref<5x2x96x84xbf16, #tpu.memory_space<vmem>>, vector<1x1x96x84xbf16>
    %281 = vector.shape_cast %280 : vector<1x1x96x84xbf16> to vector<96x84xbf16>
    %cst_356 = arith.constant dense<0.000000e+00> : vector<112x84xf32>
    %282 = tpu.matmul %279, %281, %cst_356 {dimension_numbers = #tpu.dot_dimension_numbers<[1], [0], [0], [1], [0, 0, 1, 1], [], []>} : vector<112x96xbf16>, vector<96x84xbf16>, vector<112x84xf32> -> vector<112x84xf32>
    %283 = arith.addf %276, %282 : vector<112x84xf32>
    %284 = arith.maximumf %249, %283 : vector<112x84xf32>
    %c0_357 = arith.constant 0 : index
    %c0_358 = arith.constant 0 : index
    %285 = vector.load %arg3[%c0_357, %c0_358] : memref<1x84xf32, #tpu.memory_space<vmem>>, vector<1x84xf32>
    %286 = vector.broadcast %285 : vector<1x84xf32> to vector<112x84xf32>
    %287 = arith.addf %284, %286 : vector<112x84xf32>
    %cst_359 = arith.constant 0.000000e+00 : f32
    %288 = vector.broadcast %cst_359 : f32 to vector<112x84xf32>
    %289 = arith.maximumf %287, %288 : vector<112x84xf32>
    %290 = arith.truncf %289 : vector<112x84xf32> to vector<112x84xbf16>
    %291 = vector.shape_cast %290 : vector<112x84xbf16> to vector<7x16x84xbf16>
    %292 = vector.extract_strided_slice %145 {offsets = [0, 0, 0], sizes = [5, 16, 84], strides = [1, 1, 1]} : vector<7x16x84xbf16> to vector<5x16x84xbf16>
    %293 = vector.shape_cast %292 : vector<5x16x84xbf16> to vector<80x84xbf16>
    %c0_360 = arith.constant 0 : index
    %c0_361 = arith.constant 0 : index
    %c0_362 = arith.constant 0 : index
    %c0_363 = arith.constant 0 : index
    %294 = vector.load %arg4[%c0_360, %c0_361, %c0_362, %c0_363] : memref<5x2x84x80xbf16, #tpu.memory_space<vmem>>, vector<1x1x84x80xbf16>
    %295 = vector.shape_cast %294 : vector<1x1x84x80xbf16> to vector<84x80xbf16>
    %cst_364 = arith.constant dense<0.000000e+00> : vector<80x80xf32>
    %296 = tpu.matmul %293, %295, %cst_364 {dimension_numbers = #tpu.dot_dimension_numbers<[1], [0], [0], [1], [0, 0, 1, 1], [], []>} : vector<80x84xbf16>, vector<84x80xbf16>, vector<80x80xf32> -> vector<80x80xf32>
    %297 = vector.extract_strided_slice %291 {offsets = [0, 0, 0], sizes = [5, 16, 84], strides = [1, 1, 1]} : vector<7x16x84xbf16> to vector<5x16x84xbf16>
    %298 = vector.shape_cast %297 : vector<5x16x84xbf16> to vector<80x84xbf16>
    %c1_365 = arith.constant 1 : index
    %c0_366 = arith.constant 0 : index
    %c0_367 = arith.constant 0 : index
    %c0_368 = arith.constant 0 : index
    %299 = vector.load %arg4[%c1_365, %c0_366, %c0_367, %c0_368] : memref<5x2x84x80xbf16, #tpu.memory_space<vmem>>, vector<1x1x84x80xbf16>
    %300 = vector.shape_cast %299 : vector<1x1x84x80xbf16> to vector<84x80xbf16>
    %cst_369 = arith.constant dense<0.000000e+00> : vector<80x80xf32>
    %301 = tpu.matmul %298, %300, %cst_369 {dimension_numbers = #tpu.dot_dimension_numbers<[1], [0], [0], [1], [0, 0, 1, 1], [], []>} : vector<80x84xbf16>, vector<84x80xbf16>, vector<80x80xf32> -> vector<80x80xf32>
    %302 = arith.addf %296, %301 : vector<80x80xf32>
    %303 = vector.extract_strided_slice %145 {offsets = [1, 0, 0], sizes = [5, 16, 84], strides = [1, 1, 1]} : vector<7x16x84xbf16> to vector<5x16x84xbf16>
    %304 = vector.shape_cast %303 : vector<5x16x84xbf16> to vector<80x84xbf16>
    %c2_370 = arith.constant 2 : index
    %c0_371 = arith.constant 0 : index
    %c0_372 = arith.constant 0 : index
    %c0_373 = arith.constant 0 : index
    %305 = vector.load %arg4[%c2_370, %c0_371, %c0_372, %c0_373] : memref<5x2x84x80xbf16, #tpu.memory_space<vmem>>, vector<1x1x84x80xbf16>
    %306 = vector.shape_cast %305 : vector<1x1x84x80xbf16> to vector<84x80xbf16>
    %cst_374 = arith.constant dense<0.000000e+00> : vector<80x80xf32>
    %307 = tpu.matmul %304, %306, %cst_374 {dimension_numbers = #tpu.dot_dimension_numbers<[1], [0], [0], [1], [0, 0, 1, 1], [], []>} : vector<80x84xbf16>, vector<84x80xbf16>, vector<80x80xf32> -> vector<80x80xf32>
    %308 = arith.addf %302, %307 : vector<80x80xf32>
    %309 = vector.extract_strided_slice %291 {offsets = [1, 0, 0], sizes = [5, 16, 84], strides = [1, 1, 1]} : vector<7x16x84xbf16> to vector<5x16x84xbf16>
    %310 = vector.shape_cast %309 : vector<5x16x84xbf16> to vector<80x84xbf16>
    %c3_375 = arith.constant 3 : index
    %c0_376 = arith.constant 0 : index
    %c0_377 = arith.constant 0 : index
    %c0_378 = arith.constant 0 : index
    %311 = vector.load %arg4[%c3_375, %c0_376, %c0_377, %c0_378] : memref<5x2x84x80xbf16, #tpu.memory_space<vmem>>, vector<1x1x84x80xbf16>
    %312 = vector.shape_cast %311 : vector<1x1x84x80xbf16> to vector<84x80xbf16>
    %cst_379 = arith.constant dense<0.000000e+00> : vector<80x80xf32>
    %313 = tpu.matmul %310, %312, %cst_379 {dimension_numbers = #tpu.dot_dimension_numbers<[1], [0], [0], [1], [0, 0, 1, 1], [], []>} : vector<80x84xbf16>, vector<84x80xbf16>, vector<80x80xf32> -> vector<80x80xf32>
    %314 = arith.addf %308, %313 : vector<80x80xf32>
    %315 = vector.extract_strided_slice %145 {offsets = [2, 0, 0], sizes = [5, 16, 84], strides = [1, 1, 1]} : vector<7x16x84xbf16> to vector<5x16x84xbf16>
    %316 = vector.shape_cast %315 : vector<5x16x84xbf16> to vector<80x84xbf16>
    %c4_380 = arith.constant 4 : index
    %c0_381 = arith.constant 0 : index
    %c0_382 = arith.constant 0 : index
    %c0_383 = arith.constant 0 : index
    %317 = vector.load %arg4[%c4_380, %c0_381, %c0_382, %c0_383] : memref<5x2x84x80xbf16, #tpu.memory_space<vmem>>, vector<1x1x84x80xbf16>
    %318 = vector.shape_cast %317 : vector<1x1x84x80xbf16> to vector<84x80xbf16>
    %cst_384 = arith.constant dense<0.000000e+00> : vector<80x80xf32>
    %319 = tpu.matmul %316, %318, %cst_384 {dimension_numbers = #tpu.dot_dimension_numbers<[1], [0], [0], [1], [0, 0, 1, 1], [], []>} : vector<80x84xbf16>, vector<84x80xbf16>, vector<80x80xf32> -> vector<80x80xf32>
    %320 = arith.addf %314, %319 : vector<80x80xf32>
    %321 = vector.extract_strided_slice %145 {offsets = [0, 0, 0], sizes = [5, 16, 84], strides = [1, 1, 1]} : vector<7x16x84xbf16> to vector<5x16x84xbf16>
    %322 = vector.shape_cast %321 : vector<5x16x84xbf16> to vector<80x84xbf16>
    %c0_385 = arith.constant 0 : index
    %c1_386 = arith.constant 1 : index
    %c0_387 = arith.constant 0 : index
    %c0_388 = arith.constant 0 : index
    %323 = vector.load %arg4[%c0_385, %c1_386, %c0_387, %c0_388] : memref<5x2x84x80xbf16, #tpu.memory_space<vmem>>, vector<1x1x84x80xbf16>
    %324 = vector.shape_cast %323 : vector<1x1x84x80xbf16> to vector<84x80xbf16>
    %cst_389 = arith.constant dense<0.000000e+00> : vector<80x80xf32>
    %325 = tpu.matmul %322, %324, %cst_389 {dimension_numbers = #tpu.dot_dimension_numbers<[1], [0], [0], [1], [0, 0, 1, 1], [], []>} : vector<80x84xbf16>, vector<84x80xbf16>, vector<80x80xf32> -> vector<80x80xf32>
    %326 = vector.extract_strided_slice %291 {offsets = [0, 0, 0], sizes = [5, 16, 84], strides = [1, 1, 1]} : vector<7x16x84xbf16> to vector<5x16x84xbf16>
    %327 = vector.shape_cast %326 : vector<5x16x84xbf16> to vector<80x84xbf16>
    %c1_390 = arith.constant 1 : index
    %c1_391 = arith.constant 1 : index
    %c0_392 = arith.constant 0 : index
    %c0_393 = arith.constant 0 : index
    %328 = vector.load %arg4[%c1_390, %c1_391, %c0_392, %c0_393] : memref<5x2x84x80xbf16, #tpu.memory_space<vmem>>, vector<1x1x84x80xbf16>
    %329 = vector.shape_cast %328 : vector<1x1x84x80xbf16> to vector<84x80xbf16>
    %cst_394 = arith.constant dense<0.000000e+00> : vector<80x80xf32>
    %330 = tpu.matmul %327, %329, %cst_394 {dimension_numbers = #tpu.dot_dimension_numbers<[1], [0], [0], [1], [0, 0, 1, 1], [], []>} : vector<80x84xbf16>, vector<84x80xbf16>, vector<80x80xf32> -> vector<80x80xf32>
    %331 = arith.addf %325, %330 : vector<80x80xf32>
    %332 = vector.extract_strided_slice %145 {offsets = [1, 0, 0], sizes = [5, 16, 84], strides = [1, 1, 1]} : vector<7x16x84xbf16> to vector<5x16x84xbf16>
    %333 = vector.shape_cast %332 : vector<5x16x84xbf16> to vector<80x84xbf16>
    %c2_395 = arith.constant 2 : index
    %c1_396 = arith.constant 1 : index
    %c0_397 = arith.constant 0 : index
    %c0_398 = arith.constant 0 : index
    %334 = vector.load %arg4[%c2_395, %c1_396, %c0_397, %c0_398] : memref<5x2x84x80xbf16, #tpu.memory_space<vmem>>, vector<1x1x84x80xbf16>
    %335 = vector.shape_cast %334 : vector<1x1x84x80xbf16> to vector<84x80xbf16>
    %cst_399 = arith.constant dense<0.000000e+00> : vector<80x80xf32>
    %336 = tpu.matmul %333, %335, %cst_399 {dimension_numbers = #tpu.dot_dimension_numbers<[1], [0], [0], [1], [0, 0, 1, 1], [], []>} : vector<80x84xbf16>, vector<84x80xbf16>, vector<80x80xf32> -> vector<80x80xf32>
    %337 = arith.addf %331, %336 : vector<80x80xf32>
    %338 = vector.extract_strided_slice %291 {offsets = [1, 0, 0], sizes = [5, 16, 84], strides = [1, 1, 1]} : vector<7x16x84xbf16> to vector<5x16x84xbf16>
    %339 = vector.shape_cast %338 : vector<5x16x84xbf16> to vector<80x84xbf16>
    %c3_400 = arith.constant 3 : index
    %c1_401 = arith.constant 1 : index
    %c0_402 = arith.constant 0 : index
    %c0_403 = arith.constant 0 : index
    %340 = vector.load %arg4[%c3_400, %c1_401, %c0_402, %c0_403] : memref<5x2x84x80xbf16, #tpu.memory_space<vmem>>, vector<1x1x84x80xbf16>
    %341 = vector.shape_cast %340 : vector<1x1x84x80xbf16> to vector<84x80xbf16>
    %cst_404 = arith.constant dense<0.000000e+00> : vector<80x80xf32>
    %342 = tpu.matmul %339, %341, %cst_404 {dimension_numbers = #tpu.dot_dimension_numbers<[1], [0], [0], [1], [0, 0, 1, 1], [], []>} : vector<80x84xbf16>, vector<84x80xbf16>, vector<80x80xf32> -> vector<80x80xf32>
    %343 = arith.addf %337, %342 : vector<80x80xf32>
    %344 = vector.extract_strided_slice %145 {offsets = [2, 0, 0], sizes = [5, 16, 84], strides = [1, 1, 1]} : vector<7x16x84xbf16> to vector<5x16x84xbf16>
    %345 = vector.shape_cast %344 : vector<5x16x84xbf16> to vector<80x84xbf16>
    %c4_405 = arith.constant 4 : index
    %c1_406 = arith.constant 1 : index
    %c0_407 = arith.constant 0 : index
    %c0_408 = arith.constant 0 : index
    %346 = vector.load %arg4[%c4_405, %c1_406, %c0_407, %c0_408] : memref<5x2x84x80xbf16, #tpu.memory_space<vmem>>, vector<1x1x84x80xbf16>
    %347 = vector.shape_cast %346 : vector<1x1x84x80xbf16> to vector<84x80xbf16>
    %cst_409 = arith.constant dense<0.000000e+00> : vector<80x80xf32>
    %348 = tpu.matmul %345, %347, %cst_409 {dimension_numbers = #tpu.dot_dimension_numbers<[1], [0], [0], [1], [0, 0, 1, 1], [], []>} : vector<80x84xbf16>, vector<84x80xbf16>, vector<80x80xf32> -> vector<80x80xf32>
    %349 = arith.addf %343, %348 : vector<80x80xf32>
    %350 = arith.maximumf %320, %349 : vector<80x80xf32>
    %351 = vector.extract_strided_slice %291 {offsets = [0, 0, 0], sizes = [5, 16, 84], strides = [1, 1, 1]} : vector<7x16x84xbf16> to vector<5x16x84xbf16>
    %352 = vector.shape_cast %351 : vector<5x16x84xbf16> to vector<80x84xbf16>
    %c0_410 = arith.constant 0 : index
    %c0_411 = arith.constant 0 : index
    %c0_412 = arith.constant 0 : index
    %c0_413 = arith.constant 0 : index
    %353 = vector.load %arg4[%c0_410, %c0_411, %c0_412, %c0_413] : memref<5x2x84x80xbf16, #tpu.memory_space<vmem>>, vector<1x1x84x80xbf16>
    %354 = vector.shape_cast %353 : vector<1x1x84x80xbf16> to vector<84x80xbf16>
    %cst_414 = arith.constant dense<0.000000e+00> : vector<80x80xf32>
    %355 = tpu.matmul %352, %354, %cst_414 {dimension_numbers = #tpu.dot_dimension_numbers<[1], [0], [0], [1], [0, 0, 1, 1], [], []>} : vector<80x84xbf16>, vector<84x80xbf16>, vector<80x80xf32> -> vector<80x80xf32>
    %356 = vector.extract_strided_slice %145 {offsets = [1, 0, 0], sizes = [5, 16, 84], strides = [1, 1, 1]} : vector<7x16x84xbf16> to vector<5x16x84xbf16>
    %357 = vector.shape_cast %356 : vector<5x16x84xbf16> to vector<80x84xbf16>
    %c1_415 = arith.constant 1 : index
    %c0_416 = arith.constant 0 : index
    %c0_417 = arith.constant 0 : index
    %c0_418 = arith.constant 0 : index
    %358 = vector.load %arg4[%c1_415, %c0_416, %c0_417, %c0_418] : memref<5x2x84x80xbf16, #tpu.memory_space<vmem>>, vector<1x1x84x80xbf16>
    %359 = vector.shape_cast %358 : vector<1x1x84x80xbf16> to vector<84x80xbf16>
    %cst_419 = arith.constant dense<0.000000e+00> : vector<80x80xf32>
    %360 = tpu.matmul %357, %359, %cst_419 {dimension_numbers = #tpu.dot_dimension_numbers<[1], [0], [0], [1], [0, 0, 1, 1], [], []>} : vector<80x84xbf16>, vector<84x80xbf16>, vector<80x80xf32> -> vector<80x80xf32>
    %361 = arith.addf %355, %360 : vector<80x80xf32>
    %362 = vector.extract_strided_slice %291 {offsets = [1, 0, 0], sizes = [5, 16, 84], strides = [1, 1, 1]} : vector<7x16x84xbf16> to vector<5x16x84xbf16>
    %363 = vector.shape_cast %362 : vector<5x16x84xbf16> to vector<80x84xbf16>
    %c2_420 = arith.constant 2 : index
    %c0_421 = arith.constant 0 : index
    %c0_422 = arith.constant 0 : index
    %c0_423 = arith.constant 0 : index
    %364 = vector.load %arg4[%c2_420, %c0_421, %c0_422, %c0_423] : memref<5x2x84x80xbf16, #tpu.memory_space<vmem>>, vector<1x1x84x80xbf16>
    %365 = vector.shape_cast %364 : vector<1x1x84x80xbf16> to vector<84x80xbf16>
    %cst_424 = arith.constant dense<0.000000e+00> : vector<80x80xf32>
    %366 = tpu.matmul %363, %365, %cst_424 {dimension_numbers = #tpu.dot_dimension_numbers<[1], [0], [0], [1], [0, 0, 1, 1], [], []>} : vector<80x84xbf16>, vector<84x80xbf16>, vector<80x80xf32> -> vector<80x80xf32>
    %367 = arith.addf %361, %366 : vector<80x80xf32>
    %368 = vector.extract_strided_slice %145 {offsets = [2, 0, 0], sizes = [5, 16, 84], strides = [1, 1, 1]} : vector<7x16x84xbf16> to vector<5x16x84xbf16>
    %369 = vector.shape_cast %368 : vector<5x16x84xbf16> to vector<80x84xbf16>
    %c3_425 = arith.constant 3 : index
    %c0_426 = arith.constant 0 : index
    %c0_427 = arith.constant 0 : index
    %c0_428 = arith.constant 0 : index
    %370 = vector.load %arg4[%c3_425, %c0_426, %c0_427, %c0_428] : memref<5x2x84x80xbf16, #tpu.memory_space<vmem>>, vector<1x1x84x80xbf16>
    %371 = vector.shape_cast %370 : vector<1x1x84x80xbf16> to vector<84x80xbf16>
    %cst_429 = arith.constant dense<0.000000e+00> : vector<80x80xf32>
    %372 = tpu.matmul %369, %371, %cst_429 {dimension_numbers = #tpu.dot_dimension_numbers<[1], [0], [0], [1], [0, 0, 1, 1], [], []>} : vector<80x84xbf16>, vector<84x80xbf16>, vector<80x80xf32> -> vector<80x80xf32>
    %373 = arith.addf %367, %372 : vector<80x80xf32>
    %374 = vector.extract_strided_slice %291 {offsets = [2, 0, 0], sizes = [5, 16, 84], strides = [1, 1, 1]} : vector<7x16x84xbf16> to vector<5x16x84xbf16>
    %375 = vector.shape_cast %374 : vector<5x16x84xbf16> to vector<80x84xbf16>
    %c4_430 = arith.constant 4 : index
    %c0_431 = arith.constant 0 : index
    %c0_432 = arith.constant 0 : index
    %c0_433 = arith.constant 0 : index
    %376 = vector.load %arg4[%c4_430, %c0_431, %c0_432, %c0_433] : memref<5x2x84x80xbf16, #tpu.memory_space<vmem>>, vector<1x1x84x80xbf16>
    %377 = vector.shape_cast %376 : vector<1x1x84x80xbf16> to vector<84x80xbf16>
    %cst_434 = arith.constant dense<0.000000e+00> : vector<80x80xf32>
    %378 = tpu.matmul %375, %377, %cst_434 {dimension_numbers = #tpu.dot_dimension_numbers<[1], [0], [0], [1], [0, 0, 1, 1], [], []>} : vector<80x84xbf16>, vector<84x80xbf16>, vector<80x80xf32> -> vector<80x80xf32>
    %379 = arith.addf %373, %378 : vector<80x80xf32>
    %380 = arith.maximumf %350, %379 : vector<80x80xf32>
    %381 = vector.extract_strided_slice %291 {offsets = [0, 0, 0], sizes = [5, 16, 84], strides = [1, 1, 1]} : vector<7x16x84xbf16> to vector<5x16x84xbf16>
    %382 = vector.shape_cast %381 : vector<5x16x84xbf16> to vector<80x84xbf16>
    %c0_435 = arith.constant 0 : index
    %c1_436 = arith.constant 1 : index
    %c0_437 = arith.constant 0 : index
    %c0_438 = arith.constant 0 : index
    %383 = vector.load %arg4[%c0_435, %c1_436, %c0_437, %c0_438] : memref<5x2x84x80xbf16, #tpu.memory_space<vmem>>, vector<1x1x84x80xbf16>
    %384 = vector.shape_cast %383 : vector<1x1x84x80xbf16> to vector<84x80xbf16>
    %cst_439 = arith.constant dense<0.000000e+00> : vector<80x80xf32>
    %385 = tpu.matmul %382, %384, %cst_439 {dimension_numbers = #tpu.dot_dimension_numbers<[1], [0], [0], [1], [0, 0, 1, 1], [], []>} : vector<80x84xbf16>, vector<84x80xbf16>, vector<80x80xf32> -> vector<80x80xf32>
    %386 = vector.extract_strided_slice %145 {offsets = [1, 0, 0], sizes = [5, 16, 84], strides = [1, 1, 1]} : vector<7x16x84xbf16> to vector<5x16x84xbf16>
    %387 = vector.shape_cast %386 : vector<5x16x84xbf16> to vector<80x84xbf16>
    %c1_440 = arith.constant 1 : index
    %c1_441 = arith.constant 1 : index
    %c0_442 = arith.constant 0 : index
    %c0_443 = arith.constant 0 : index
    %388 = vector.load %arg4[%c1_440, %c1_441, %c0_442, %c0_443] : memref<5x2x84x80xbf16, #tpu.memory_space<vmem>>, vector<1x1x84x80xbf16>
    %389 = vector.shape_cast %388 : vector<1x1x84x80xbf16> to vector<84x80xbf16>
    %cst_444 = arith.constant dense<0.000000e+00> : vector<80x80xf32>
    %390 = tpu.matmul %387, %389, %cst_444 {dimension_numbers = #tpu.dot_dimension_numbers<[1], [0], [0], [1], [0, 0, 1, 1], [], []>} : vector<80x84xbf16>, vector<84x80xbf16>, vector<80x80xf32> -> vector<80x80xf32>
    %391 = arith.addf %385, %390 : vector<80x80xf32>
    %392 = vector.extract_strided_slice %291 {offsets = [1, 0, 0], sizes = [5, 16, 84], strides = [1, 1, 1]} : vector<7x16x84xbf16> to vector<5x16x84xbf16>
    %393 = vector.shape_cast %392 : vector<5x16x84xbf16> to vector<80x84xbf16>
    %c2_445 = arith.constant 2 : index
    %c1_446 = arith.constant 1 : index
    %c0_447 = arith.constant 0 : index
    %c0_448 = arith.constant 0 : index
    %394 = vector.load %arg4[%c2_445, %c1_446, %c0_447, %c0_448] : memref<5x2x84x80xbf16, #tpu.memory_space<vmem>>, vector<1x1x84x80xbf16>
    %395 = vector.shape_cast %394 : vector<1x1x84x80xbf16> to vector<84x80xbf16>
    %cst_449 = arith.constant dense<0.000000e+00> : vector<80x80xf32>
    %396 = tpu.matmul %393, %395, %cst_449 {dimension_numbers = #tpu.dot_dimension_numbers<[1], [0], [0], [1], [0, 0, 1, 1], [], []>} : vector<80x84xbf16>, vector<84x80xbf16>, vector<80x80xf32> -> vector<80x80xf32>
    %397 = arith.addf %391, %396 : vector<80x80xf32>
    %398 = vector.extract_strided_slice %145 {offsets = [2, 0, 0], sizes = [5, 16, 84], strides = [1, 1, 1]} : vector<7x16x84xbf16> to vector<5x16x84xbf16>
    %399 = vector.shape_cast %398 : vector<5x16x84xbf16> to vector<80x84xbf16>
    %c3_450 = arith.constant 3 : index
    %c1_451 = arith.constant 1 : index
    %c0_452 = arith.constant 0 : index
    %c0_453 = arith.constant 0 : index
    %400 = vector.load %arg4[%c3_450, %c1_451, %c0_452, %c0_453] : memref<5x2x84x80xbf16, #tpu.memory_space<vmem>>, vector<1x1x84x80xbf16>
    %401 = vector.shape_cast %400 : vector<1x1x84x80xbf16> to vector<84x80xbf16>
    %cst_454 = arith.constant dense<0.000000e+00> : vector<80x80xf32>
    %402 = tpu.matmul %399, %401, %cst_454 {dimension_numbers = #tpu.dot_dimension_numbers<[1], [0], [0], [1], [0, 0, 1, 1], [], []>} : vector<80x84xbf16>, vector<84x80xbf16>, vector<80x80xf32> -> vector<80x80xf32>
    %403 = arith.addf %397, %402 : vector<80x80xf32>
    %404 = vector.extract_strided_slice %291 {offsets = [2, 0, 0], sizes = [5, 16, 84], strides = [1, 1, 1]} : vector<7x16x84xbf16> to vector<5x16x84xbf16>
    %405 = vector.shape_cast %404 : vector<5x16x84xbf16> to vector<80x84xbf16>
    %c4_455 = arith.constant 4 : index
    %c1_456 = arith.constant 1 : index
    %c0_457 = arith.constant 0 : index
    %c0_458 = arith.constant 0 : index
    %406 = vector.load %arg4[%c4_455, %c1_456, %c0_457, %c0_458] : memref<5x2x84x80xbf16, #tpu.memory_space<vmem>>, vector<1x1x84x80xbf16>
    %407 = vector.shape_cast %406 : vector<1x1x84x80xbf16> to vector<84x80xbf16>
    %cst_459 = arith.constant dense<0.000000e+00> : vector<80x80xf32>
    %408 = tpu.matmul %405, %407, %cst_459 {dimension_numbers = #tpu.dot_dimension_numbers<[1], [0], [0], [1], [0, 0, 1, 1], [], []>} : vector<80x84xbf16>, vector<84x80xbf16>, vector<80x80xf32> -> vector<80x80xf32>
    %409 = arith.addf %403, %408 : vector<80x80xf32>
    %410 = arith.maximumf %380, %409 : vector<80x80xf32>
    %c0_460 = arith.constant 0 : index
    %c0_461 = arith.constant 0 : index
    %411 = vector.load %arg5[%c0_460, %c0_461] : memref<1x80xf32, #tpu.memory_space<vmem>>, vector<1x80xf32>
    %412 = vector.broadcast %411 : vector<1x80xf32> to vector<80x80xf32>
    %413 = arith.addf %410, %412 : vector<80x80xf32>
    %cst_462 = arith.constant 0.000000e+00 : f32
    %414 = vector.broadcast %cst_462 : f32 to vector<80x80xf32>
    %415 = arith.maximumf %413, %414 : vector<80x80xf32>
    %416 = arith.truncf %415 : vector<80x80xf32> to vector<80x80xbf16>
    %417 = vector.shape_cast %416 : vector<80x80xbf16> to vector<5x16x80xbf16>
    %418 = vector.extract_strided_slice %417 {offsets = [0, 0, 0], sizes = [1, 16, 80], strides = [1, 1, 1]} : vector<5x16x80xbf16> to vector<1x16x80xbf16>
    %419 = vector.shape_cast %418 : vector<1x16x80xbf16> to vector<16x80xbf16>
    %c0_463 = arith.constant 0 : index
    %c0_464 = arith.constant 0 : index
    %c0_465 = arith.constant 0 : index
    %420 = vector.load %arg6[%c0_463, %c0_464, %c0_465] : memref<5x80x128xbf16, #tpu.memory_space<vmem>>, vector<1x80x128xbf16>
    %421 = vector.shape_cast %420 : vector<1x80x128xbf16> to vector<80x128xbf16>
    %cst_466 = arith.constant dense<0.000000e+00> : vector<16x128xf32>
    %422 = tpu.matmul %419, %421, %cst_466 {dimension_numbers = #tpu.dot_dimension_numbers<[1], [0], [0], [1], [0, 0, 1, 1], [], []>} : vector<16x80xbf16>, vector<80x128xbf16>, vector<16x128xf32> -> vector<16x128xf32>
    %423 = vector.extract_strided_slice %417 {offsets = [1, 0, 0], sizes = [1, 16, 80], strides = [1, 1, 1]} : vector<5x16x80xbf16> to vector<1x16x80xbf16>
    %424 = vector.shape_cast %423 : vector<1x16x80xbf16> to vector<16x80xbf16>
    %c1_467 = arith.constant 1 : index
    %c0_468 = arith.constant 0 : index
    %c0_469 = arith.constant 0 : index
    %425 = vector.load %arg6[%c1_467, %c0_468, %c0_469] : memref<5x80x128xbf16, #tpu.memory_space<vmem>>, vector<1x80x128xbf16>
    %426 = vector.shape_cast %425 : vector<1x80x128xbf16> to vector<80x128xbf16>
    %cst_470 = arith.constant dense<0.000000e+00> : vector<16x128xf32>
    %427 = tpu.matmul %424, %426, %cst_470 {dimension_numbers = #tpu.dot_dimension_numbers<[1], [0], [0], [1], [0, 0, 1, 1], [], []>} : vector<16x80xbf16>, vector<80x128xbf16>, vector<16x128xf32> -> vector<16x128xf32>
    %428 = arith.addf %422, %427 : vector<16x128xf32>
    %429 = vector.extract_strided_slice %417 {offsets = [2, 0, 0], sizes = [1, 16, 80], strides = [1, 1, 1]} : vector<5x16x80xbf16> to vector<1x16x80xbf16>
    %430 = vector.shape_cast %429 : vector<1x16x80xbf16> to vector<16x80xbf16>
    %c2_471 = arith.constant 2 : index
    %c0_472 = arith.constant 0 : index
    %c0_473 = arith.constant 0 : index
    %431 = vector.load %arg6[%c2_471, %c0_472, %c0_473] : memref<5x80x128xbf16, #tpu.memory_space<vmem>>, vector<1x80x128xbf16>
    %432 = vector.shape_cast %431 : vector<1x80x128xbf16> to vector<80x128xbf16>
    %cst_474 = arith.constant dense<0.000000e+00> : vector<16x128xf32>
    %433 = tpu.matmul %430, %432, %cst_474 {dimension_numbers = #tpu.dot_dimension_numbers<[1], [0], [0], [1], [0, 0, 1, 1], [], []>} : vector<16x80xbf16>, vector<80x128xbf16>, vector<16x128xf32> -> vector<16x128xf32>
    %434 = arith.addf %428, %433 : vector<16x128xf32>
    %435 = vector.extract_strided_slice %417 {offsets = [3, 0, 0], sizes = [1, 16, 80], strides = [1, 1, 1]} : vector<5x16x80xbf16> to vector<1x16x80xbf16>
    %436 = vector.shape_cast %435 : vector<1x16x80xbf16> to vector<16x80xbf16>
    %c3_475 = arith.constant 3 : index
    %c0_476 = arith.constant 0 : index
    %c0_477 = arith.constant 0 : index
    %437 = vector.load %arg6[%c3_475, %c0_476, %c0_477] : memref<5x80x128xbf16, #tpu.memory_space<vmem>>, vector<1x80x128xbf16>
    %438 = vector.shape_cast %437 : vector<1x80x128xbf16> to vector<80x128xbf16>
    %cst_478 = arith.constant dense<0.000000e+00> : vector<16x128xf32>
    %439 = tpu.matmul %436, %438, %cst_478 {dimension_numbers = #tpu.dot_dimension_numbers<[1], [0], [0], [1], [0, 0, 1, 1], [], []>} : vector<16x80xbf16>, vector<80x128xbf16>, vector<16x128xf32> -> vector<16x128xf32>
    %440 = arith.addf %434, %439 : vector<16x128xf32>
    %441 = vector.extract_strided_slice %417 {offsets = [4, 0, 0], sizes = [1, 16, 80], strides = [1, 1, 1]} : vector<5x16x80xbf16> to vector<1x16x80xbf16>
    %442 = vector.shape_cast %441 : vector<1x16x80xbf16> to vector<16x80xbf16>
    %c4_479 = arith.constant 4 : index
    %c0_480 = arith.constant 0 : index
    %c0_481 = arith.constant 0 : index
    %443 = vector.load %arg6[%c4_479, %c0_480, %c0_481] : memref<5x80x128xbf16, #tpu.memory_space<vmem>>, vector<1x80x128xbf16>
    %444 = vector.shape_cast %443 : vector<1x80x128xbf16> to vector<80x128xbf16>
    %cst_482 = arith.constant dense<0.000000e+00> : vector<16x128xf32>
    %445 = tpu.matmul %442, %444, %cst_482 {dimension_numbers = #tpu.dot_dimension_numbers<[1], [0], [0], [1], [0, 0, 1, 1], [], []>} : vector<16x80xbf16>, vector<80x128xbf16>, vector<16x128xf32> -> vector<16x128xf32>
    %446 = arith.addf %440, %445 : vector<16x128xf32>
    %c0_483 = arith.constant 0 : index
    %c0_484 = arith.constant 0 : index
    %447 = vector.load %arg7[%c0_483, %c0_484] : memref<1x128xf32, #tpu.memory_space<vmem>>, vector<1x128xf32>
    %448 = vector.broadcast %447 : vector<1x128xf32> to vector<16x128xf32>
    %449 = arith.addf %446, %448 : vector<16x128xf32>
    %cst_485 = arith.constant 0.000000e+00 : f32
    %450 = vector.broadcast %cst_485 : f32 to vector<16x128xf32>
    %451 = arith.maximumf %449, %450 : vector<16x128xf32>
    %452 = arith.truncf %451 : vector<16x128xf32> to vector<16x128xbf16>
    %c0_486 = arith.constant 0 : index
    %c0_487 = arith.constant 0 : index
    %453 = vector.load %arg8[%c0_486, %c0_487] : memref<128x128xbf16, #tpu.memory_space<vmem>>, vector<128x128xbf16>
    %cst_488 = arith.constant dense<0.000000e+00> : vector<16x128xf32>
    %454 = tpu.matmul %452, %453, %cst_488 {dimension_numbers = #tpu.dot_dimension_numbers<[1], [0], [0], [1], [0, 0, 1, 1], [], []>} : vector<16x128xbf16>, vector<128x128xbf16>, vector<16x128xf32> -> vector<16x128xf32>
    %c0_489 = arith.constant 0 : index
    %c0_490 = arith.constant 0 : index
    %455 = vector.load %arg9[%c0_489, %c0_490] : memref<1x128xf32, #tpu.memory_space<vmem>>, vector<1x128xf32>
    %456 = vector.broadcast %455 : vector<1x128xf32> to vector<16x128xf32>
    %457 = arith.addf %454, %456 : vector<16x128xf32>
    %cst_491 = arith.constant 0.000000e+00 : f32
    %458 = vector.broadcast %cst_491 : f32 to vector<16x128xf32>
    %459 = arith.maximumf %457, %458 : vector<16x128xf32>
    %460 = arith.truncf %459 : vector<16x128xf32> to vector<16x128xbf16>
    %c0_492 = arith.constant 0 : index
    %c0_493 = arith.constant 0 : index
    %461 = vector.load %arg10[%c0_492, %c0_493] : memref<128x128xbf16, #tpu.memory_space<vmem>>, vector<128x128xbf16>
    %cst_494 = arith.constant dense<0.000000e+00> : vector<16x128xf32>
    %462 = tpu.matmul %460, %461, %cst_494 {dimension_numbers = #tpu.dot_dimension_numbers<[1], [0], [0], [1], [0, 0, 1, 1], [], []>} : vector<16x128xbf16>, vector<128x128xbf16>, vector<16x128xf32> -> vector<16x128xf32>
    %c0_495 = arith.constant 0 : index
    %c0_496 = arith.constant 0 : index
    %463 = vector.load %arg11[%c0_495, %c0_496] : memref<1x128xf32, #tpu.memory_space<vmem>>, vector<1x128xf32>
    %464 = vector.broadcast %463 : vector<1x128xf32> to vector<16x128xf32>
    %465 = arith.addf %462, %464 : vector<16x128xf32>
    %c0_497 = arith.constant 0 : index
    %c0_498 = arith.constant 0 : index
    %466 = vector.load %arg12[%c0_497, %c0_498] : memref<16x128xf32, #tpu.memory_space<vmem>>, vector<16x128xf32>
    tpu.vector_store %arg12[%c0_497, %c0_498], %465 {strides = array<i32>} : memref<16x128xf32, #tpu.memory_space<vmem>>, vector<16x128xf32>,
    return
  }
  func.func @transform_0(%arg0: i32) -> (i32, i32, i32, i32) {
    %c0_i32 = arith.constant 0 : i32
    %c0_i32_0 = arith.constant 0 : i32
    %c0_i32_1 = arith.constant 0 : i32
    %c0_i32_2 = arith.constant 0 : i32
    return %c0_i32, %c0_i32_0, %arg0, %c0_i32_1 : i32, i32, i32, i32
  }
  func.func @transform_1(%arg0: i32) -> (i32, i32, i32, i32) {
    %c0_i32 = arith.constant 0 : i32
    %c0_i32_0 = arith.constant 0 : i32
    %c0_i32_1 = arith.constant 0 : i32
    %c0_i32_2 = arith.constant 0 : i32
    %c0_i32_3 = arith.constant 0 : i32
    return %c0_i32, %c0_i32_0, %c0_i32_1, %c0_i32_2 : i32, i32, i32, i32
  }
  func.func @transform_2(%arg0: i32) -> (i32, i32) {
    %c0_i32 = arith.constant 0 : i32
    %c0_i32_0 = arith.constant 0 : i32
    %c0_i32_1 = arith.constant 0 : i32
    return %c0_i32, %c0_i32_0 : i32, i32
  }
  func.func @transform_3(%arg0: i32) -> (i32, i32, i32, i32) {
    %c0_i32 = arith.constant 0 : i32
    %c0_i32_0 = arith.constant 0 : i32
    %c0_i32_1 = arith.constant 0 : i32
    %c0_i32_2 = arith.constant 0 : i32
    %c0_i32_3 = arith.constant 0 : i32
    return %c0_i32, %c0_i32_0, %c0_i32_1, %c0_i32_2 : i32, i32, i32, i32
  }
  func.func @transform_4(%arg0: i32) -> (i32, i32) {
    %c0_i32 = arith.constant 0 : i32
    %c0_i32_0 = arith.constant 0 : i32
    %c0_i32_1 = arith.constant 0 : i32
    return %c0_i32, %c0_i32_0 : i32, i32
  }
  func.func @transform_5(%arg0: i32) -> (i32, i32, i32) {
    %c0_i32 = arith.constant 0 : i32
    %c0_i32_0 = arith.constant 0 : i32
    %c0_i32_1 = arith.constant 0 : i32
    %c0_i32_2 = arith.constant 0 : i32
    return %c0_i32, %c0_i32_0, %c0_i32_1 : i32, i32, i32
  }
  func.func @transform_6(%arg0: i32) -> (i32, i32) {
    %c0_i32 = arith.constant 0 : i32
    %c0_i32_0 = arith.constant 0 : i32
    %c0_i32_1 = arith.constant 0 : i32
    return %c0_i32, %c0_i32_0 : i32, i32
  }
  func.func @transform_7(%arg0: i32) -> (i32, i32) {
    %c0_i32 = arith.constant 0 : i32
    %c0_i32_0 = arith.constant 0 : i32
    %c0_i32_1 = arith.constant 0 : i32
    return %c0_i32, %c0_i32_0 : i32, i32
  }
  func.func @transform_8(%arg0: i32) -> (i32, i32) {
    %c0_i32 = arith.constant 0 : i32
    %c0_i32_0 = arith.constant 0 : i32
    %c0_i32_1 = arith.constant 0 : i32
    return %c0_i32, %c0_i32_0 : i32, i32
  }
  func.func @transform_9(%arg0: i32) -> (i32, i32) {
    %c0_i32 = arith.constant 0 : i32
    %c0_i32_0 = arith.constant 0 : i32
    %c0_i32_1 = arith.constant 0 : i32
    return %c0_i32, %c0_i32_0 : i32, i32
  }
  func.func @transform_10(%arg0: i32) -> (i32, i32) {
    %c0_i32 = arith.constant 0 : i32
    %c0_i32_0 = arith.constant 0 : i32
    %c0_i32_1 = arith.constant 0 : i32
    return %c0_i32, %c0_i32_0 : i32, i32
  }
  func.func @transform_11(%arg0: i32) -> (i32, i32) {
    %c0_i32 = arith.constant 0 : i32
    %c0_i32_0 = arith.constant 0 : i32
    return %arg0, %c0_i32 : i32, i32
  }
}

</mosaic_0001>

<llo_original>
// kernel: net_forward.1
$region0: #{net_forward.1}
  #allocation0 [shape = 'u32[]', space=smem, size = 0x4, offset = 0x4, fixed_abs, tag = 'smem constant byte address 0x4 - core index']
  #allocation1 [shape = 'u32[72,128]{1,0:T(1,128)}', space=vmem, size = 0x9000, scoped, tag = 'internal scratch']
  %s0 = inlined_call_operand.vmem [shape: bf16[4,8,16,96], index: 0, kind: input, shape index: {}]
  %s1 = inlined_call_operand.vmem [shape: bf16[5,2,96,84], index: 1, kind: input, shape index: {}]
  %s2 = inlined_call_operand.vmem [shape: f32[1,84], index: 2, kind: input, shape index: {}]
  %s3 = inlined_call_operand.vmem [shape: bf16[5,2,84,80], index: 3, kind: input, shape index: {}]
  %s4 = inlined_call_operand.vmem [shape: f32[1,80], index: 4, kind: input, shape index: {}]
  %s5 = inlined_call_operand.vmem [shape: bf16[5,80,128], index: 5, kind: input, shape index: {}]
  %s6 = inlined_call_operand.vmem [shape: f32[1,128], index: 6, kind: input, shape index: {}]
  %s7 = inlined_call_operand.vmem [shape: bf16[128,128], index: 7, kind: input, shape index: {}]
  %s8 = inlined_call_operand.vmem [shape: f32[1,128], index: 8, kind: input, shape index: {}]
  %s9 = inlined_call_operand.vmem [shape: bf16[128,128], index: 9, kind: input, shape index: {}]
  %s10 = inlined_call_operand.vmem [shape: f32[1,128], index: 10, kind: input, shape index: {}]
  %s11 = inlined_call_operand.vmem [shape: f32[16,128], index: 11, kind: output, shape index: {}]
  %s12 = sld [smem:[#allocation0]]
  $region54: #{net_forward.1} parent=0
    _
  %s14 = ssub.s32 1, %s12
  %s15 = scalar_select 0, %s14, %s12
  // Predicated region
  $region2: #{net_forward.1} parent=0 // pred_check
    _
  $region3: #{net_forward.1} parent=0 // pred_check_branch
    %17 = sbr.rel (0) target = $region5
  $region4: #{net_forward.1} parent=0 // pred_region
    _
  $region5: #{net_forward.1} parent=0 // pred_fallthru
    _
  // Predicated region
  $region6: #{net_forward.1} parent=0 // pred_check
    _
  $region7: #{net_forward.1} parent=0 // pred_check_branch
    %19 = sbr.rel (0) target = $region9
  $region8: #{net_forward.1} parent=0 // pred_region
    _
  $region9: #{net_forward.1} parent=0 // pred_fallthru
    _
  // Predicated region
  $region10: #{net_forward.1} parent=0 // pred_check
    _
  $region11: #{net_forward.1} parent=0 // pred_check_branch
    %21 = sbr.rel (0) target = $region13
  $region12: #{net_forward.1} parent=0 // pred_region
    _
  $region13: #{net_forward.1} parent=0 // pred_fallthru
    _
  // Predicated region
  $region14: #{net_forward.1} parent=0 // pred_check
    _
  $region15: #{net_forward.1} parent=0 // pred_check_branch
    %23 = sbr.rel (0) target = $region17
  $region16: #{net_forward.1} parent=0 // pred_region
    _
  $region17: #{net_forward.1} parent=0 // pred_fallthru
    _
  // Predicated region
  $region18: #{net_forward.1} parent=0 // pred_check
    _
  $region19: #{net_forward.1} parent=0 // pred_check_branch
    %25 = sbr.rel (0) target = $region21
  $region20: #{net_forward.1} parent=0 // pred_region
    _
  $region21: #{net_forward.1} parent=0 // pred_fallthru
    _
  // Predicated region
  $region22: #{net_forward.1} parent=0 // pred_check
    _
  $region23: #{net_forward.1} parent=0 // pred_check_branch
    %27 = sbr.rel (0) target = $region25
  $region24: #{net_forward.1} parent=0 // pred_region
    _
  $region25: #{net_forward.1} parent=0 // pred_fallthru
    _
  // Predicated region
  $region26: #{net_forward.1} parent=0 // pred_check
    _
  $region27: #{net_forward.1} parent=0 // pred_check_branch
    %29 = sbr.rel (0) target = $region29
  $region28: #{net_forward.1} parent=0 // pred_region
    _
  $region29: #{net_forward.1} parent=0 // pred_fallthru
    _
  // Predicated region
  $region30: #{net_forward.1} parent=0 // pred_check
    _
  $region31: #{net_forward.1} parent=0 // pred_check_branch
    %31 = sbr.rel (0) target = $region33
  $region32: #{net_forward.1} parent=0 // pred_region
    _
  $region33: #{net_forward.1} parent=0 // pred_fallthru
    _
  // Predicated region
  $region34: #{net_forward.1} parent=0 // pred_check
    _
  $region35: #{net_forward.1} parent=0 // pred_check_branch
    %33 = sbr.rel (0) target = $region37
  $region36: #{net_forward.1} parent=0 // pred_region
    _
  $region37: #{net_forward.1} parent=0 // pred_fallthru
    _
  // Predicated region
  $region38: #{net_forward.1} parent=0 // pred_check
    _
  $region39: #{net_forward.1} parent=0 // pred_check_branch
    %35 = sbr.rel (0) target = $region41
  $region40: #{net_forward.1} parent=0 // pred_region
    _
  $region41: #{net_forward.1} parent=0 // pred_fallthru
    _
  // Predicated region
  $region42: #{net_forward.1} parent=0 // pred_check
    _
  $region43: #{net_forward.1} parent=0 // pred_check_branch
    %37 = sbr.rel (0) target = $region45
  $region44: #{net_forward.1} parent=0 // pred_region
    _
  $region45: #{net_forward.1} parent=0 // pred_fallthru
    _
  %v39 = vld [vmem:[%s0] sm:$0xf]
  %v40 = vld [vmem:[%s0 + $0x4] sm:$0xf]
  %v41 = vld [vmem:[%s0 + $0x8] sm:$0xf]
  %v42 = vld [vmem:[%s0 + $0xc] sm:$0xf]
  %v43 = vld [vmem:[%s0 + $0x10] sm:$0xf]
  %v44 = vld [vmem:[%s0 + $0x14] sm:$0xf]
  %v45 = vld [vmem:[%s0 + $0x18] sm:$0xf]
  %v46 = vld [vmem:[%s0 + $0x1c] sm:$0xf]
  %v47 = vld [vmem:[%s0 + $0x20] sm:$0xf]
  %v48 = vld [vmem:[%s0 + $0x24] sm:$0xf]
  %v49 = vld [vmem:[%s0 + $0x28] sm:$0xf]
  %v50 = vld [vmem:[%s0 + $0x2c] sm:$0xf]
  %v51 = vld [vmem:[%s0 + $0x30] sm:$0xf]
  %v52 = vld [vmem:[%s0 + $0x34] sm:$0xf]
  %v53 = vld [vmem:[%s1] sm:$0xf]
  %v54 = vld [vmem:[%s1 + $0x4] sm:$0xf]
  %v55 = vld [vmem:[%s1 + $0x8] sm:$0xf]
  %v56 = vld [vmem:[%s1 + $0xc] sm:$0xf]
  %v57 = vld [vmem:[%s1 + $0x10] sm:$0xf]
  %v58 = vld [vmem:[%s1 + $0x14] sm:$0xf]
  %v59 = vld [vmem:[%s1 + $0x18] sm:$0xf]
  %v60 = vld [vmem:[%s1 + $0x1c] sm:$0xf]
  %v61 = vld [vmem:[%s1 + $0x20] sm:$0xf]
  %v62 = vld [vmem:[%s1 + $0x24] sm:$0xf]
  %v63 = vld [vmem:[%s1 + $0x28] sm:$0xf]
  %v64 = vld [vmem:[%s1 + $0x2c] sm:$0xf]
  %s65 = scalar_lea.vmem %s0, 64
  %v66 = vld [vmem:[%s65] sm:$0xf]
  %v67 = vld [vmem:[%s65 + $0x4] sm:$0xf]
  %v68 = vld [vmem:[%s65 + $0x8] sm:$0xf]
  %v69 = vld [vmem:[%s65 + $0xc] sm:$0xf]
  %v70 = vld [vmem:[%s65 + $0x10] sm:$0xf]
  %v71 = vld [vmem:[%s65 + $0x14] sm:$0xf]
  %v72 = vld [vmem:[%s65 + $0x18] sm:$0xf]
  %v73 = vld [vmem:[%s65 + $0x1c] sm:$0xf]
  %v74 = vld [vmem:[%s65 + $0x20] sm:$0xf]
  %v75 = vld [vmem:[%s65 + $0x24] sm:$0xf]
  %v76 = vld [vmem:[%s65 + $0x28] sm:$0xf]
  %v77 = vld [vmem:[%s65 + $0x2c] sm:$0xf]
  %v78 = vld [vmem:[%s65 + $0x30] sm:$0xf]
  %v79 = vld [vmem:[%s65 + $0x34] sm:$0xf]
  %s80 = scalar_lea.vmem %s1, 96
  %v81 = vld [vmem:[%s80] sm:$0xf]
  %v82 = vld [vmem:[%s80 + $0x4] sm:$0xf]
  %v83 = vld [vmem:[%s80 + $0x8] sm:$0xf]
  %v84 = vld [vmem:[%s80 + $0xc] sm:$0xf]
  %v85 = vld [vmem:[%s80 + $0x10] sm:$0xf]
  %v86 = vld [vmem:[%s80 + $0x14] sm:$0xf]
  %v87 = vld [vmem:[%s80 + $0x18] sm:$0xf]
  %v88 = vld [vmem:[%s80 + $0x1c] sm:$0xf]
  %v89 = vld [vmem:[%s80 + $0x20] sm:$0xf]
  %v90 = vld [vmem:[%s80 + $0x24] sm:$0xf]
  %v91 = vld [vmem:[%s80 + $0x28] sm:$0xf]
  %v92 = vld [vmem:[%s80 + $0x2c] sm:$0xf]
  %v107 = vunpack.c.l.b16 %v66
  %v108 = vunpack.c.l.b16 %v67
  %v109 = vunpack.c.l.b16 %v68
  %v110 = vunpack.c.l.b16 %v69
  %v111 = vunpack.c.l.b16 %v70
  %v112 = vunpack.c.l.b16 %v71
  %v113 = vunpack.c.l.b16 %v72
  %v114 = vunpack.c.l.b16 %v73
  %v115 = vunpack.c.l.b16 %v74
  %v116 = vunpack.c.l.b16 %v75
  %v117 = vunpack.c.l.b16 %v76
  %v118 = vunpack.c.l.b16 %v77
  %v119 = vunpack.c.l.b16 %v78
  %v120 = vunpack.c.l.b16 %v79
  %v121 = vpack.c.b16 %v108, %v107
  %v122 = vpack.c.b16 %v110, %v109
  %v123 = vpack.c.b16 %v112, %v111
  %v124 = vpack.c.b16 %v114, %v113
  %v125 = vpack.c.b16 %v116, %v115
  %v126 = vpack.c.b16 %v118, %v117
  %v127 = vpack.c.b16 %v120, %v119
  %v140 = vunpack.c.l.b16 %v81
  %v141 = vunpack.c.l.b16 %v82
  %v142 = vunpack.c.l.b16 %v83
  %v143 = vunpack.c.l.b16 %v84
  %v144 = vunpack.c.l.b16 %v85
  %v145 = vunpack.c.l.b16 %v86
  %v146 = vunpack.c.l.b16 %v87
  %v147 = vunpack.c.l.b16 %v88
  %v148 = vunpack.c.l.b16 %v89
  %v149 = vunpack.c.l.b16 %v90
  %v150 = vunpack.c.l.b16 %v91
  %v151 = vunpack.c.l.b16 %v92
  %v152 = vpack.c.b16 %v141, %v140
  %v153 = vpack.c.b16 %v143, %v142
  %v154 = vpack.c.b16 %v145, %v144
  %v155 = vpack.c.b16 %v147, %v146
  %v156 = vpack.c.b16 %v149, %v148
  %v157 = vpack.c.b16 %v151, %v150
  %vm164 = vcmask 785408
  %v166 = vsel %vm164, %v121, 0
  %v169 = vsel %vm164, %v122, 0
  %v172 = vsel %vm164, %v123, 0
  %v175 = vsel %vm164, %v124, 0
  %v178 = vsel %vm164, %v125, 0
  %v181 = vsel %vm164, %v126, 0
  %v184 = vsel %vm164, %v127, 0
  %186 = vmatpush.bf16.msra.mxu0 0
  %187 = vmatpush.bf16.msra.mxu0 0
  %188 = vmatpush.bf16.msra.mxu0 %v157
  %189 = vmatpush.bf16.msra.mxu0 %v156
  %190 = vmatpush.bf16.msra.mxu0 %v155
  %191 = vmatpush.bf16.msra.mxu0 %v154
  %192 = vmatpush.bf16.msra.mxu0 %v153
  %193 = vmatpush.bf16.msra.mxu0 %v152
  %194 = vmatmul.bf16.gmra.mxu0 %v166
  %v195 = vpop.f32.mrf.mxu0
  %v196 = vadd.f32 0.0, %v195
  %v197 = vpop.f32.mrf.mxu0
  %v198 = vadd.f32 0.0, %v197
  %199 = vmatmul.bf16.gmra.mxu0 %v169
  %v200 = vpop.f32.mrf.mxu0
  %v201 = vadd.f32 0.0, %v200
  %v202 = vpop.f32.mrf.mxu0
  %v203 = vadd.f32 0.0, %v202
  %204 = vmatmul.bf16.gmra.mxu0 %v172
  %v205 = vpop.f32.mrf.mxu0
  %v206 = vadd.f32 0.0, %v205
  %v207 = vpop.f32.mrf.mxu0
  %v208 = vadd.f32 0.0, %v207
  %209 = vmatmul.bf16.gmra.mxu0 %v175
  %v210 = vpop.f32.mrf.mxu0
  %v211 = vadd.f32 0.0, %v210
  %v212 = vpop.f32.mrf.mxu0
  %v213 = vadd.f32 0.0, %v212
  %214 = vmatmul.bf16.gmra.mxu0 %v178
  %v215 = vpop.f32.mrf.mxu0
  %v216 = vadd.f32 0.0, %v215
  %v217 = vpop.f32.mrf.mxu0
  %v218 = vadd.f32 0.0, %v217
  %219 = vmatmul.bf16.gmra.mxu0 %v181
  %v220 = vpop.f32.mrf.mxu0
  %v221 = vadd.f32 0.0, %v220
  %v222 = vpop.f32.mrf.mxu0
  %v223 = vadd.f32 0.0, %v222
  %224 = vmatmul.bf16.gmra.mxu0 %v184
  %v225 = vpop.f32.mrf.mxu0
  %v226 = vadd.f32 0.0, %v225
  %v227 = vpop.f32.mrf.mxu0
  %v228 = vadd.f32 0.0, %v227
  %229 = vdwg.mxu0
  %v244 = vunpack.c.l.b16 %v39
  %v245 = vunpack.c.l.b16 %v40
  %v246 = vunpack.c.l.b16 %v41
  %v247 = vunpack.c.l.b16 %v42
  %v248 = vunpack.c.l.b16 %v43
  %v249 = vunpack.c.l.b16 %v44
  %v250 = vunpack.c.l.b16 %v45
  %v251 = vunpack.c.l.b16 %v46
  %v252 = vunpack.c.l.b16 %v47
  %v253 = vunpack.c.l.b16 %v48
  %v254 = vunpack.c.l.b16 %v49
  %v255 = vunpack.c.l.b16 %v50
  %v256 = vunpack.c.l.b16 %v51
  %v257 = vunpack.c.l.b16 %v52
  %v258 = vpack.c.b16 %v245, %v244
  %v259 = vpack.c.b16 %v247, %v246
  %v260 = vpack.c.b16 %v249, %v248
  %v261 = vpack.c.b16 %v251, %v250
  %v262 = vpack.c.b16 %v253, %v252
  %v263 = vpack.c.b16 %v255, %v254
  %v264 = vpack.c.b16 %v257, %v256
  %v277 = vunpack.c.l.b16 %v53
  %v278 = vunpack.c.l.b16 %v54
  %v279 = vunpack.c.l.b16 %v55
  %v280 = vunpack.c.l.b16 %v56
  %v281 = vunpack.c.l.b16 %v57
  %v282 = vunpack.c.l.b16 %v58
  %v283 = vunpack.c.l.b16 %v59
  %v284 = vunpack.c.l.b16 %v60
  %v285 = vunpack.c.l.b16 %v61
  %v286 = vunpack.c.l.b16 %v62
  %v287 = vunpack.c.l.b16 %v63
  %v288 = vunpack.c.l.b16 %v64
  %v289 = vpack.c.b16 %v278, %v277
  %v290 = vpack.c.b16 %v280, %v279
  %v291 = vpack.c.b16 %v282, %v281
  %v292 = vpack.c.b16 %v284, %v283
  %v293 = vpack.c.b16 %v286, %v285
  %v294 = vpack.c.b16 %v288, %v287
  %v302 = vsel %vm164, %v258, 0
  %v305 = vsel %vm164, %v259, 0
  %v308 = vsel %vm164, %v260, 0
  %v311 = vsel %vm164, %v261, 0
  %v314 = vsel %vm164, %v262, 0
  %v317 = vsel %vm164, %v263, 0
  %v320 = vsel %vm164, %v264, 0
  %322 = vmatpush.bf16.msra.mxu0 0
  %323 = vmatpush.bf16.msra.mxu0 0
  %324 = vmatpush.bf16.msra.mxu0 %v294
  %325 = vmatpush.bf16.msra.mxu0 %v293
  %326 = vmatpush.bf16.msra.mxu0 %v292
  %327 = vmatpush.bf16.msra.mxu0 %v291
  %328 = vmatpush.bf16.msra.mxu0 %v290
  %329 = vmatpush.bf16.msra.mxu0 %v289
  %330 = vmatmul.bf16.gmra.mxu0 %v302
  %v331 = vpop.f32.mrf.mxu0
  %v332 = vadd.f32 %v196, %v331
  %v333 = vpop.f32.mrf.mxu0
  %v334 = vadd.f32 %v198, %v333
  %335 = vmatmul.bf16.gmra.mxu0 %v305
  %v336 = vpop.f32.mrf.mxu0
  %v337 = vadd.f32 %v201, %v336
  %v338 = vpop.f32.mrf.mxu0
  %v339 = vadd.f32 %v203, %v338
  %340 = vmatmul.bf16.gmra.mxu0 %v308
  %v341 = vpop.f32.mrf.mxu0
  %v342 = vadd.f32 %v206, %v341
  %v343 = vpop.f32.mrf.mxu0
  %v344 = vadd.f32 %v208, %v343
  %345 = vmatmul.bf16.gmra.mxu0 %v311
  %v346 = vpop.f32.mrf.mxu0
  %v347 = vadd.f32 %v211, %v346
  %v348 = vpop.f32.mrf.mxu0
  %v349 = vadd.f32 %v213, %v348
  %350 = vmatmul.bf16.gmra.mxu0 %v314
  %v351 = vpop.f32.mrf.mxu0
  %v352 = vadd.f32 %v216, %v351
  %v353 = vpop.f32.mrf.mxu0
  %v354 = vadd.f32 %v218, %v353
  %355 = vmatmul.bf16.gmra.mxu0 %v317
  %v356 = vpop.f32.mrf.mxu0
  %v357 = vadd.f32 %v221, %v356
  %v358 = vpop.f32.mrf.mxu0
  %v359 = vadd.f32 %v223, %v358
  %360 = vmatmul.bf16.gmra.mxu0 %v320
  %v361 = vpop.f32.mrf.mxu0
  %v362 = vadd.f32 %v226, %v361
  %v363 = vpop.f32.mrf.mxu0
  %v364 = vadd.f32 %v228, %v363
  %365 = vdwg.mxu0
  %s366 = scalar_lea.vmem %s0, 128
  %v367 = vld [vmem:[%s366] sm:$0xf]
  %v368 = vld [vmem:[%s366 + $0x4] sm:$0xf]
  %v369 = vld [vmem:[%s366 + $0x8] sm:$0xf]
  %v370 = vld [vmem:[%s366 + $0xc] sm:$0xf]
  %v371 = vld [vmem:[%s366 + $0x10] sm:$0xf]
  %v372 = vld [vmem:[%s366 + $0x14] sm:$0xf]
  %v373 = vld [vmem:[%s366 + $0x18] sm:$0xf]
  %v374 = vld [vmem:[%s366 + $0x1c] sm:$0xf]
  %v375 = vld [vmem:[%s366 + $0x20] sm:$0xf]
  %v376 = vld [vmem:[%s366 + $0x24] sm:$0xf]
  %v377 = vld [vmem:[%s366 + $0x28] sm:$0xf]
  %v378 = vld [vmem:[%s366 + $0x2c] sm:$0xf]
  %v379 = vld [vmem:[%s366 + $0x30] sm:$0xf]
  %v380 = vld [vmem:[%s366 + $0x34] sm:$0xf]
  %s381 = scalar_lea.vmem %s1, 192
  %v382 = vld [vmem:[%s381] sm:$0xf]
  %v383 = vld [vmem:[%s381 + $0x4] sm:$0xf]
  %v384 = vld [vmem:[%s381 + $0x8] sm:$0xf]
  %v385 = vld [vmem:[%s381 + $0xc] sm:$0xf]
  %v386 = vld [vmem:[%s381 + $0x10] sm:$0xf]
  %v387 = vld [vmem:[%s381 + $0x14] sm:$0xf]
  %v388 = vld [vmem:[%s381 + $0x18] sm:$0xf]
  %v389 = vld [vmem:[%s381 + $0x1c] sm:$0xf]
  %v390 = vld [vmem:[%s381 + $0x20] sm:$0xf]
  %v391 = vld [vmem:[%s381 + $0x24] sm:$0xf]
  %v392 = vld [vmem:[%s381 + $0x28] sm:$0xf]
  %v393 = vld [vmem:[%s381 + $0x2c] sm:$0xf]
  %v408 = vunpack.c.l.b16 %v367
  %v409 = vunpack.c.l.b16 %v368
  %v410 = vunpack.c.l.b16 %v369
  %v411 = vunpack.c.l.b16 %v370
  %v412 = vunpack.c.l.b16 %v371
  %v413 = vunpack.c.l.b16 %v372
  %v414 = vunpack.c.l.b16 %v373
  %v415 = vunpack.c.l.b16 %v374
  %v416 = vunpack.c.l.b16 %v375
  %v417 = vunpack.c.l.b16 %v376
  %v418 = vunpack.c.l.b16 %v377
  %v419 = vunpack.c.l.b16 %v378
  %v420 = vunpack.c.l.b16 %v379
  %v421 = vunpack.c.l.b16 %v380
  %v422 = vpack.c.b16 %v409, %v408
  %v423 = vpack.c.b16 %v411, %v410
  %v424 = vpack.c.b16 %v413, %v412
  %v425 = vpack.c.b16 %v415, %v414
  %v426 = vpack.c.b16 %v417, %v416
  %v427 = vpack.c.b16 %v419, %v418
  %v428 = vpack.c.b16 %v421, %v420
  %v441 = vunpack.c.l.b16 %v382
  %v442 = vunpack.c.l.b16 %v383
  %v443 = vunpack.c.l.b16 %v384
  %v444 = vunpack.c.l.b16 %v385
  %v445 = vunpack.c.l.b16 %v386
  %v446 = vunpack.c.l.b16 %v387
  %v447 = vunpack.c.l.b16 %v388
  %v448 = vunpack.c.l.b16 %v389
  %v449 = vunpack.c.l.b16 %v390
  %v450 = vunpack.c.l.b16 %v391
  %v451 = vunpack.c.l.b16 %v392
  %v452 = vunpack.c.l.b16 %v393
  %v453 = vpack.c.b16 %v442, %v441
  %v454 = vpack.c.b16 %v444, %v443
  %v455 = vpack.c.b16 %v446, %v445
  %v456 = vpack.c.b16 %v448, %v447
  %v457 = vpack.c.b16 %v450, %v449
  %v458 = vpack.c.b16 %v452, %v451
  %v466 = vsel %vm164, %v422, 0
  %v469 = vsel %vm164, %v423, 0
  %v472 = vsel %vm164, %v424, 0
  %v475 = vsel %vm164, %v425, 0
  %v478 = vsel %vm164, %v426, 0
  %v481 = vsel %vm164, %v427, 0
  %v484 = vsel %vm164, %v428, 0
  %486 = vmatpush.bf16.msra.mxu0 0
  %487 = vmatpush.bf16.msra.mxu0 0
  %488 = vmatpush.bf16.msra.mxu0 %v458
  %489 = vmatpush.bf16.msra.mxu0 %v457
  %490 = vmatpush.bf16.msra.mxu0 %v456
  %491 = vmatpush.bf16.msra.mxu0 %v455
  %492 = vmatpush.bf16.msra.mxu0 %v454
  %493 = vmatpush.bf16.msra.mxu0 %v453
  %494 = vmatmul.bf16.gmra.mxu0 %v466
  %v495 = vpop.f32.mrf.mxu0
  %v496 = vadd.f32 0.0, %v495
  %v497 = vpop.f32.mrf.mxu0
  %v498 = vadd.f32 0.0, %v497
  %499 = vmatmul.bf16.gmra.mxu0 %v469
  %v500 = vpop.f32.mrf.mxu0
  %v501 = vadd.f32 0.0, %v500
  %v502 = vpop.f32.mrf.mxu0
  %v503 = vadd.f32 0.0, %v502
  %504 = vmatmul.bf16.gmra.mxu0 %v472
  %v505 = vpop.f32.mrf.mxu0
  %v506 = vadd.f32 0.0, %v505
  %v507 = vpop.f32.mrf.mxu0
  %v508 = vadd.f32 0.0, %v507
  %509 = vmatmul.bf16.gmra.mxu0 %v475
  %v510 = vpop.f32.mrf.mxu0
  %v511 = vadd.f32 0.0, %v510
  %v512 = vpop.f32.mrf.mxu0
  %v513 = vadd.f32 0.0, %v512
  %514 = vmatmul.bf16.gmra.mxu0 %v478
  %v515 = vpop.f32.mrf.mxu0
  %v516 = vadd.f32 0.0, %v515
  %v517 = vpop.f32.mrf.mxu0
  %v518 = vadd.f32 0.0, %v517
  %519 = vmatmul.bf16.gmra.mxu0 %v481
  %v520 = vpop.f32.mrf.mxu0
  %v521 = vadd.f32 0.0, %v520
  %v522 = vpop.f32.mrf.mxu0
  %v523 = vadd.f32 0.0, %v522
  %524 = vmatmul.bf16.gmra.mxu0 %v484
  %v525 = vpop.f32.mrf.mxu0
  %v526 = vadd.f32 0.0, %v525
  %v527 = vpop.f32.mrf.mxu0
  %v528 = vadd.f32 0.0, %v527
  %529 = vdwg.mxu0
  %v530 = vadd.f32 %v332, %v496
  %v531 = vadd.f32 %v334, %v498
  %v532 = vadd.f32 %v337, %v501
  %v533 = vadd.f32 %v339, %v503
  %v534 = vadd.f32 %v342, %v506
  %v535 = vadd.f32 %v344, %v508
  %v536 = vadd.f32 %v347, %v511
  %v537 = vadd.f32 %v349, %v513
  %v538 = vadd.f32 %v352, %v516
  %v539 = vadd.f32 %v354, %v518
  %v540 = vadd.f32 %v357, %v521
  %v541 = vadd.f32 %v359, %v523
  %v542 = vadd.f32 %v362, %v526
  %v543 = vadd.f32 %v364, %v528
  %s544 = scalar_lea.vmem %s0, 192
  %v545 = vld [vmem:[%s544] sm:$0xf]
  %v546 = vld [vmem:[%s544 + $0x4] sm:$0xf]
  %v547 = vld [vmem:[%s544 + $0x8] sm:$0xf]
  %v548 = vld [vmem:[%s544 + $0xc] sm:$0xf]
  %v549 = vld [vmem:[%s544 + $0x10] sm:$0xf]
  %v550 = vld [vmem:[%s544 + $0x14] sm:$0xf]
  %v551 = vld [vmem:[%s544 + $0x18] sm:$0xf]
  %v552 = vld [vmem:[%s544 + $0x1c] sm:$0xf]
  %v553 = vld [vmem:[%s544 + $0x20] sm:$0xf]
  %v554 = vld [vmem:[%s544 + $0x24] sm:$0xf]
  %v555 = vld [vmem:[%s544 + $0x28] sm:$0xf]
  %v556 = vld [vmem:[%s544 + $0x2c] sm:$0xf]
  %v557 = vld [vmem:[%s544 + $0x30] sm:$0xf]
  %v558 = vld [vmem:[%s544 + $0x34] sm:$0xf]
  %s559 = scalar_lea.vmem %s1, 288
  %v560 = vld [vmem:[%s559] sm:$0xf]
  %v561 = vld [vmem:[%s559 + $0x4] sm:$0xf]
  %v562 = vld [vmem:[%s559 + $0x8] sm:$0xf]
  %v563 = vld [vmem:[%s559 + $0xc] sm:$0xf]
  %v564 = vld [vmem:[%s559 + $0x10] sm:$0xf]
  %v565 = vld [vmem:[%s559 + $0x14] sm:$0xf]
  %v566 = vld [vmem:[%s559 + $0x18] sm:$0xf]
  %v567 = vld [vmem:[%s559 + $0x1c] sm:$0xf]
  %v568 = vld [vmem:[%s559 + $0x20] sm:$0xf]
  %v569 = vld [vmem:[%s559 + $0x24] sm:$0xf]
  %v570 = vld [vmem:[%s559 + $0x28] sm:$0xf]
  %v571 = vld [vmem:[%s559 + $0x2c] sm:$0xf]
  %v586 = vunpack.c.l.b16 %v545
  %v587 = vunpack.c.l.b16 %v546
  %v588 = vunpack.c.l.b16 %v547
  %v589 = vunpack.c.l.b16 %v548
  %v590 = vunpack.c.l.b16 %v549
  %v591 = vunpack.c.l.b16 %v550
  %v592 = vunpack.c.l.b16 %v551
  %v593 = vunpack.c.l.b16 %v552
  %v594 = vunpack.c.l.b16 %v553
  %v595 = vunpack.c.l.b16 %v554
  %v596 = vunpack.c.l.b16 %v555
  %v597 = vunpack.c.l.b16 %v556
  %v598 = vunpack.c.l.b16 %v557
  %v599 = vunpack.c.l.b16 %v558
  %v600 = vpack.c.b16 %v587, %v586
  %v601 = vpack.c.b16 %v589, %v588
  %v602 = vpack.c.b16 %v591, %v590
  %v603 = vpack.c.b16 %v593, %v592
  %v604 = vpack.c.b16 %v595, %v594
  %v605 = vpack.c.b16 %v597, %v596
  %v606 = vpack.c.b16 %v599, %v598
  %v619 = vunpack.c.l.b16 %v560
  %v620 = vunpack.c.l.b16 %v561
  %v621 = vunpack.c.l.b16 %v562
  %v622 = vunpack.c.l.b16 %v563
  %v623 = vunpack.c.l.b16 %v564
  %v624 = vunpack.c.l.b16 %v565
  %v625 = vunpack.c.l.b16 %v566
  %v626 = vunpack.c.l.b16 %v567
  %v627 = vunpack.c.l.b16 %v568
  %v628 = vunpack.c.l.b16 %v569
  %v629 = vunpack.c.l.b16 %v570
  %v630 = vunpack.c.l.b16 %v571
  %v631 = vpack.c.b16 %v620, %v619
  %v632 = vpack.c.b16 %v622, %v621
  %v633 = vpack.c.b16 %v624, %v623
  %v634 = vpack.c.b16 %v626, %v625
  %v635 = vpack.c.b16 %v628, %v627
  %v636 = vpack.c.b16 %v630, %v629
  %v644 = vsel %vm164, %v600, 0
  %v647 = vsel %vm164, %v601, 0
  %v650 = vsel %vm164, %v602, 0
  %v653 = vsel %vm164, %v603, 0
  %v656 = vsel %vm164, %v604, 0
  %v659 = vsel %vm164, %v605, 0
  %v662 = vsel %vm164, %v606, 0
  %664 = vmatpush.bf16.msra.mxu0 0
  %665 = vmatpush.bf16.msra.mxu0 0
  %666 = vmatpush.bf16.msra.mxu0 %v636
  %667 = vmatpush.bf16.msra.mxu0 %v635
  %668 = vmatpush.bf16.msra.mxu0 %v634
  %669 = vmatpush.bf16.msra.mxu0 %v633
  %670 = vmatpush.bf16.msra.mxu0 %v632
  %671 = vmatpush.bf16.msra.mxu0 %v631
  %672 = vmatmul.bf16.gmra.mxu0 %v644
  %v673 = vpop.f32.mrf.mxu0
  %v674 = vadd.f32 0.0, %v673
  %v675 = vpop.f32.mrf.mxu0
  %v676 = vadd.f32 0.0, %v675
  %677 = vmatmul.bf16.gmra.mxu0 %v647
  %v678 = vpop.f32.mrf.mxu0
  %v679 = vadd.f32 0.0, %v678
  %v680 = vpop.f32.mrf.mxu0
  %v681 = vadd.f32 0.0, %v680
  %682 = vmatmul.bf16.gmra.mxu0 %v650
  %v683 = vpop.f32.mrf.mxu0
  %v684 = vadd.f32 0.0, %v683
  %v685 = vpop.f32.mrf.mxu0
  %v686 = vadd.f32 0.0, %v685
  %687 = vmatmul.bf16.gmra.mxu0 %v653
  %v688 = vpop.f32.mrf.mxu0
  %v689 = vadd.f32 0.0, %v688
  %v690 = vpop.f32.mrf.mxu0
  %v691 = vadd.f32 0.0, %v690
  %692 = vmatmul.bf16.gmra.mxu0 %v656
  %v693 = vpop.f32.mrf.mxu0
  %v694 = vadd.f32 0.0, %v693
  %v695 = vpop.f32.mrf.mxu0
  %v696 = vadd.f32 0.0, %v695
  %697 = vmatmul.bf16.gmra.mxu0 %v659
  %v698 = vpop.f32.mrf.mxu0
  %v699 = vadd.f32 0.0, %v698
  %v700 = vpop.f32.mrf.mxu0
  %v701 = vadd.f32 0.0, %v700
  %702 = vmatmul.bf16.gmra.mxu0 %v662
  %v703 = vpop.f32.mrf.mxu0
  %v704 = vadd.f32 0.0, %v703
  %v705 = vpop.f32.mrf.mxu0
  %v706 = vadd.f32 0.0, %v705
  %707 = vdwg.mxu0
  %v708 = vadd.f32 %v530, %v674
  %v709 = vadd.f32 %v531, %v676
  %v710 = vadd.f32 %v532, %v679
  %v711 = vadd.f32 %v533, %v681
  %v712 = vadd.f32 %v534, %v684
  %v713 = vadd.f32 %v535, %v686
  %v714 = vadd.f32 %v536, %v689
  %v715 = vadd.f32 %v537, %v691
  %v716 = vadd.f32 %v538, %v694
  %v717 = vadd.f32 %v539, %v696
  %v718 = vadd.f32 %v540, %v699
  %v719 = vadd.f32 %v541, %v701
  %v720 = vadd.f32 %v542, %v704
  %v721 = vadd.f32 %v543, %v706
  %s722 = scalar_lea.vmem %s0, 8
  %v723 = vld [vmem:[%s722] sm:$0xf]
  %v724 = vld [vmem:[%s722 + $0x4] sm:$0xf]
  %v725 = vld [vmem:[%s722 + $0x8] sm:$0xf]
  %v726 = vld [vmem:[%s722 + $0xc] sm:$0xf]
  %v727 = vld [vmem:[%s722 + $0x10] sm:$0xf]
  %v728 = vld [vmem:[%s722 + $0x14] sm:$0xf]
  %v729 = vld [vmem:[%s722 + $0x18] sm:$0xf]
  %v730 = vld [vmem:[%s722 + $0x1c] sm:$0xf]
  %v731 = vld [vmem:[%s722 + $0x20] sm:$0xf]
  %v732 = vld [vmem:[%s722 + $0x24] sm:$0xf]
  %v733 = vld [vmem:[%s722 + $0x28] sm:$0xf]
  %v734 = vld [vmem:[%s722 + $0x2c] sm:$0xf]
  %v735 = vld [vmem:[%s722 + $0x30] sm:$0xf]
  %v736 = vld [vmem:[%s722 + $0x34] sm:$0xf]
  %s737 = scalar_lea.vmem %s1, 384
  %v738 = vld [vmem:[%s737] sm:$0xf]
  %v739 = vld [vmem:[%s737 + $0x4] sm:$0xf]
  %v740 = vld [vmem:[%s737 + $0x8] sm:$0xf]
  %v741 = vld [vmem:[%s737 + $0xc] sm:$0xf]
  %v742 = vld [vmem:[%s737 + $0x10] sm:$0xf]
  %v743 = vld [vmem:[%s737 + $0x14] sm:$0xf]
  %v744 = vld [vmem:[%s737 + $0x18] sm:$0xf]
  %v745 = vld [vmem:[%s737 + $0x1c] sm:$0xf]
  %v746 = vld [vmem:[%s737 + $0x20] sm:$0xf]
  %v747 = vld [vmem:[%s737 + $0x24] sm:$0xf]
  %v748 = vld [vmem:[%s737 + $0x28] sm:$0xf]
  %v749 = vld [vmem:[%s737 + $0x2c] sm:$0xf]
  %v764 = vunpack.c.l.b16 %v723
  %v765 = vunpack.c.l.b16 %v724
  %v766 = vunpack.c.l.b16 %v725
  %v767 = vunpack.c.l.b16 %v726
  %v768 = vunpack.c.l.b16 %v727
  %v769 = vunpack.c.l.b16 %v728
  %v770 = vunpack.c.l.b16 %v729
  %v771 = vunpack.c.l.b16 %v730
  %v772 = vunpack.c.l.b16 %v731
  %v773 = vunpack.c.l.b16 %v732
  %v774 = vunpack.c.l.b16 %v733
  %v775 = vunpack.c.l.b16 %v734
  %v776 = vunpack.c.l.b16 %v735
  %v777 = vunpack.c.l.b16 %v736
  %v778 = vpack.c.b16 %v765, %v764
  %v779 = vpack.c.b16 %v767, %v766
  %v780 = vpack.c.b16 %v769, %v768
  %v781 = vpack.c.b16 %v771, %v770
  %v782 = vpack.c.b16 %v773, %v772
  %v783 = vpack.c.b16 %v775, %v774
  %v784 = vpack.c.b16 %v777, %v776
  %v797 = vunpack.c.l.b16 %v738
  %v798 = vunpack.c.l.b16 %v739
  %v799 = vunpack.c.l.b16 %v740
  %v800 = vunpack.c.l.b16 %v741
  %v801 = vunpack.c.l.b16 %v742
  %v802 = vunpack.c.l.b16 %v743
  %v803 = vunpack.c.l.b16 %v744
  %v804 = vunpack.c.l.b16 %v745
  %v805 = vunpack.c.l.b16 %v746
  %v806 = vunpack.c.l.b16 %v747
  %v807 = vunpack.c.l.b16 %v748
  %v808 = vunpack.c.l.b16 %v749
  %v809 = vpack.c.b16 %v798, %v797
  %v810 = vpack.c.b16 %v800, %v799
  %v811 = vpack.c.b16 %v802, %v801
  %v812 = vpack.c.b16 %v804, %v803
  %v813 = vpack.c.b16 %v806, %v805
  %v814 = vpack.c.b16 %v808, %v807
  %v822 = vsel %vm164, %v778, 0
  %v825 = vsel %vm164, %v779, 0
  %v828 = vsel %vm164, %v780, 0
  %v831 = vsel %vm164, %v781, 0
  %v834 = vsel %vm164, %v782, 0
  %v837 = vsel %vm164, %v783, 0
  %v840 = vsel %vm164, %v784, 0
  %842 = vmatpush.bf16.msra.mxu0 0
  %843 = vmatpush.bf16.msra.mxu0 0
  %844 = vmatpush.bf16.msra.mxu0 %v814
  %845 = vmatpush.bf16.msra.mxu0 %v813
  %846 = vmatpush.bf16.msra.mxu0 %v812
  %847 = vmatpush.bf16.msra.mxu0 %v811
  %848 = vmatpush.bf16.msra.mxu0 %v810
  %849 = vmatpush.bf16.msra.mxu0 %v809
  %850 = vmatmul.bf16.gmra.mxu0 %v822
  %v851 = vpop.f32.mrf.mxu0
  %v852 = vadd.f32 0.0, %v851
  %v853 = vpop.f32.mrf.mxu0
  %v854 = vadd.f32 0.0, %v853
  %855 = vmatmul.bf16.gmra.mxu0 %v825
  %v856 = vpop.f32.mrf.mxu0
  %v857 = vadd.f32 0.0, %v856
  %v858 = vpop.f32.mrf.mxu0
  %v859 = vadd.f32 0.0, %v858
  %860 = vmatmul.bf16.gmra.mxu0 %v828
  %v861 = vpop.f32.mrf.mxu0
  %v862 = vadd.f32 0.0, %v861
  %v863 = vpop.f32.mrf.mxu0
  %v864 = vadd.f32 0.0, %v863
  %865 = vmatmul.bf16.gmra.mxu0 %v831
  %v866 = vpop.f32.mrf.mxu0
  %v867 = vadd.f32 0.0, %v866
  %v868 = vpop.f32.mrf.mxu0
  %v869 = vadd.f32 0.0, %v868
  %870 = vmatmul.bf16.gmra.mxu0 %v834
  %v871 = vpop.f32.mrf.mxu0
  %v872 = vadd.f32 0.0, %v871
  %v873 = vpop.f32.mrf.mxu0
  %v874 = vadd.f32 0.0, %v873
  %875 = vmatmul.bf16.gmra.mxu0 %v837
  %v876 = vpop.f32.mrf.mxu0
  %v877 = vadd.f32 0.0, %v876
  %v878 = vpop.f32.mrf.mxu0
  %v879 = vadd.f32 0.0, %v878
  %880 = vmatmul.bf16.gmra.mxu0 %v840
  %v881 = vpop.f32.mrf.mxu0
  %v882 = vadd.f32 0.0, %v881
  %v883 = vpop.f32.mrf.mxu0
  %v884 = vadd.f32 0.0, %v883
  %885 = vdwg.mxu0
  %v886 = vadd.f32 %v708, %v852
  %v887 = vadd.f32 %v709, %v854
  %v888 = vadd.f32 %v710, %v857
  %v889 = vadd.f32 %v711, %v859
  %v890 = vadd.f32 %v712, %v862
  %v891 = vadd.f32 %v713, %v864
  %v892 = vadd.f32 %v714, %v867
  %v893 = vadd.f32 %v715, %v869
  %v894 = vadd.f32 %v716, %v872
  %v895 = vadd.f32 %v717, %v874
  %v896 = vadd.f32 %v718, %v877
  %v897 = vadd.f32 %v719, %v879
  %v898 = vadd.f32 %v720, %v882
  %v899 = vadd.f32 %v721, %v884
  %s900 = scalar_lea.vmem %s1, 48
  %v901 = vld [vmem:[%s900] sm:$0xf]
  %v902 = vld [vmem:[%s900 + $0x4] sm:$0xf]
  %v903 = vld [vmem:[%s900 + $0x8] sm:$0xf]
  %v904 = vld [vmem:[%s900 + $0xc] sm:$0xf]
  %v905 = vld [vmem:[%s900 + $0x10] sm:$0xf]
  %v906 = vld [vmem:[%s900 + $0x14] sm:$0xf]
  %v907 = vld [vmem:[%s900 + $0x18] sm:$0xf]
  %v908 = vld [vmem:[%s900 + $0x1c] sm:$0xf]
  %v909 = vld [vmem:[%s900 + $0x20] sm:$0xf]
  %v910 = vld [vmem:[%s900 + $0x24] sm:$0xf]
  %v911 = vld [vmem:[%s900 + $0x28] sm:$0xf]
  %v912 = vld [vmem:[%s900 + $0x2c] sm:$0xf]
  %s913 = scalar_lea.vmem %s1, 144
  %v914 = vld [vmem:[%s913] sm:$0xf]
  %v915 = vld [vmem:[%s913 + $0x4] sm:$0xf]
  %v916 = vld [vmem:[%s913 + $0x8] sm:$0xf]
  %v917 = vld [vmem:[%s913 + $0xc] sm:$0xf]
  %v918 = vld [vmem:[%s913 + $0x10] sm:$0xf]
  %v919 = vld [vmem:[%s913 + $0x14] sm:$0xf]
  %v920 = vld [vmem:[%s913 + $0x18] sm:$0xf]
  %v921 = vld [vmem:[%s913 + $0x1c] sm:$0xf]
  %v922 = vld [vmem:[%s913 + $0x20] sm:$0xf]
  %v923 = vld [vmem:[%s913 + $0x24] sm:$0xf]
  %v924 = vld [vmem:[%s913 + $0x28] sm:$0xf]
  %v925 = vld [vmem:[%s913 + $0x2c] sm:$0xf]
  %v938 = vunpack.c.l.b16 %v914
  %v939 = vunpack.c.l.b16 %v915
  %v940 = vunpack.c.l.b16 %v916
  %v941 = vunpack.c.l.b16 %v917
  %v942 = vunpack.c.l.b16 %v918
  %v943 = vunpack.c.l.b16 %v919
  %v944 = vunpack.c.l.b16 %v920
  %v945 = vunpack.c.l.b16 %v921
  %v946 = vunpack.c.l.b16 %v922
  %v947 = vunpack.c.l.b16 %v923
  %v948 = vunpack.c.l.b16 %v924
  %v949 = vunpack.c.l.b16 %v925
  %v950 = vpack.c.b16 %v939, %v938
  %v951 = vpack.c.b16 %v941, %v940
  %v952 = vpack.c.b16 %v943, %v942
  %v953 = vpack.c.b16 %v945, %v944
  %v954 = vpack.c.b16 %v947, %v946
  %v955 = vpack.c.b16 %v949, %v948
  %962 = vmatpush.bf16.msra.mxu0 0
  %963 = vmatpush.bf16.msra.mxu0 0
  %964 = vmatpush.bf16.msra.mxu0 %v955
  %965 = vmatpush.bf16.msra.mxu0 %v954
  %966 = vmatpush.bf16.msra.mxu0 %v953
  %967 = vmatpush.bf16.msra.mxu0 %v952
  %968 = vmatpush.bf16.msra.mxu0 %v951
  %969 = vmatpush.bf16.msra.mxu0 %v950
  %970 = vmatmul.bf16.gmra.mxu0 %v166
  %v971 = vpop.f32.mrf.mxu0
  %v972 = vadd.f32 0.0, %v971
  %v973 = vpop.f32.mrf.mxu0
  %v974 = vadd.f32 0.0, %v973
  %975 = vmatmul.bf16.gmra.mxu0 %v169
  %v976 = vpop.f32.mrf.mxu0
  %v977 = vadd.f32 0.0, %v976
  %v978 = vpop.f32.mrf.mxu0
  %v979 = vadd.f32 0.0, %v978
  %980 = vmatmul.bf16.gmra.mxu0 %v172
  %v981 = vpop.f32.mrf.mxu0
  %v982 = vadd.f32 0.0, %v981
  %v983 = vpop.f32.mrf.mxu0
  %v984 = vadd.f32 0.0, %v983
  %985 = vmatmul.bf16.gmra.mxu0 %v175
  %v986 = vpop.f32.mrf.mxu0
  %v987 = vadd.f32 0.0, %v986
  %v988 = vpop.f32.mrf.mxu0
  %v989 = vadd.f32 0.0, %v988
  %990 = vmatmul.bf16.gmra.mxu0 %v178
  %v991 = vpop.f32.mrf.mxu0
  %v992 = vadd.f32 0.0, %v991
  %v993 = vpop.f32.mrf.mxu0
  %v994 = vadd.f32 0.0, %v993
  %995 = vmatmul.bf16.gmra.mxu0 %v181
  %v996 = vpop.f32.mrf.mxu0
  %v997 = vadd.f32 0.0, %v996
  %v998 = vpop.f32.mrf.mxu0
  %v999 = vadd.f32 0.0, %v998
  %1000 = vmatmul.bf16.gmra.mxu0 %v184
  %v1001 = vpop.f32.mrf.mxu0
  %v1002 = vadd.f32 0.0, %v1001
  %v1003 = vpop.f32.mrf.mxu0
  %v1004 = vadd.f32 0.0, %v1003
  %1005 = vdwg.mxu0
  %v1018 = vunpack.c.l.b16 %v901
  %v1019 = vunpack.c.l.b16 %v902
  %v1020 = vunpack.c.l.b16 %v903
  %v1021 = vunpack.c.l.b16 %v904
  %v1022 = vunpack.c.l.b16 %v905
  %v1023 = vunpack.c.l.b16 %v906
  %v1024 = vunpack.c.l.b16 %v907
  %v1025 = vunpack.c.l.b16 %v908
  %v1026 = vunpack.c.l.b16 %v909
  %v1027 = vunpack.c.l.b16 %v910
  %v1028 = vunpack.c.l.b16 %v911
  %v1029 = vunpack.c.l.b16 %v912
  %v1030 = vpack.c.b16 %v1019, %v1018
  %v1031 = vpack.c.b16 %v1021, %v1020
  %v1032 = vpack.c.b16 %v1023, %v1022
  %v1033 = vpack.c.b16 %v1025, %v1024
  %v1034 = vpack.c.b16 %v1027, %v1026
  %v1035 = vpack.c.b16 %v1029, %v1028
  %1042 = vmatpush.bf16.msra.mxu0 0
  %1043 = vmatpush.bf16.msra.mxu0 0
  %1044 = vmatpush.bf16.msra.mxu0 %v1035
  %1045 = vmatpush.bf16.msra.mxu0 %v1034
  %1046 = vmatpush.bf16.msra.mxu0 %v1033
  %1047 = vmatpush.bf16.msra.mxu0 %v1032
  %1048 = vmatpush.bf16.msra.mxu0 %v1031
  %1049 = vmatpush.bf16.msra.mxu0 %v1030
  %1050 = vmatmul.bf16.gmra.mxu0 %v302
  %v1051 = vpop.f32.mrf.mxu0
  %v1052 = vadd.f32 %v972, %v1051
  %v1053 = vpop.f32.mrf.mxu0
  %v1054 = vadd.f32 %v974, %v1053
  %1055 = vmatmul.bf16.gmra.mxu0 %v305
  %v1056 = vpop.f32.mrf.mxu0
  %v1057 = vadd.f32 %v977, %v1056
  %v1058 = vpop.f32.mrf.mxu0
  %v1059 = vadd.f32 %v979, %v1058
  %1060 = vmatmul.bf16.gmra.mxu0 %v308
  %v1061 = vpop.f32.mrf.mxu0
  %v1062 = vadd.f32 %v982, %v1061
  %v1063 = vpop.f32.mrf.mxu0
  %v1064 = vadd.f32 %v984, %v1063
  %1065 = vmatmul.bf16.gmra.mxu0 %v311
  %v1066 = vpop.f32.mrf.mxu0
  %v1067 = vadd.f32 %v987, %v1066
  %v1068 = vpop.f32.mrf.mxu0
  %v1069 = vadd.f32 %v989, %v1068
  %1070 = vmatmul.bf16.gmra.mxu0 %v314
  %v1071 = vpop.f32.mrf.mxu0
  %v1072 = vadd.f32 %v992, %v1071
  %v1073 = vpop.f32.mrf.mxu0
  %v1074 = vadd.f32 %v994, %v1073
  %1075 = vmatmul.bf16.gmra.mxu0 %v317
  %v1076 = vpop.f32.mrf.mxu0
  %v1077 = vadd.f32 %v997, %v1076
  %v1078 = vpop.f32.mrf.mxu0
  %v1079 = vadd.f32 %v999, %v1078
  %1080 = vmatmul.bf16.gmra.mxu0 %v320
  %v1081 = vpop.f32.mrf.mxu0
  %v1082 = vadd.f32 %v1002, %v1081
  %v1083 = vpop.f32.mrf.mxu0
  %v1084 = vadd.f32 %v1004, %v1083
  %1085 = vdwg.mxu0
  %s1086 = scalar_lea.vmem %s1, 240
  %v1087 = vld [vmem:[%s1086] sm:$0xf]
  %v1088 = vld [vmem:[%s1086 + $0x4] sm:$0xf]
  %v1089 = vld [vmem:[%s1086 + $0x8] sm:$0xf]
  %v1090 = vld [vmem:[%s1086 + $0xc] sm:$0xf]
  %v1091 = vld [vmem:[%s1086 + $0x10] sm:$0xf]
  %v1092 = vld [vmem:[%s1086 + $0x14] sm:$0xf]
  %v1093 = vld [vmem:[%s1086 + $0x18] sm:$0xf]
  %v1094 = vld [vmem:[%s1086 + $0x1c] sm:$0xf]
  %v1095 = vld [vmem:[%s1086 + $0x20] sm:$0xf]
  %v1096 = vld [vmem:[%s1086 + $0x24] sm:$0xf]
  %v1097 = vld [vmem:[%s1086 + $0x28] sm:$0xf]
  %v1098 = vld [vmem:[%s1086 + $0x2c] sm:$0xf]
  %v1111 = vunpack.c.l.b16 %v1087
  %v1112 = vunpack.c.l.b16 %v1088
  %v1113 = vunpack.c.l.b16 %v1089
  %v1114 = vunpack.c.l.b16 %v1090
  %v1115 = vunpack.c.l.b16 %v1091
  %v1116 = vunpack.c.l.b16 %v1092
  %v1117 = vunpack.c.l.b16 %v1093
  %v1118 = vunpack.c.l.b16 %v1094
  %v1119 = vunpack.c.l.b16 %v1095
  %v1120 = vunpack.c.l.b16 %v1096
  %v1121 = vunpack.c.l.b16 %v1097
  %v1122 = vunpack.c.l.b16 %v1098
  %v1123 = vpack.c.b16 %v1112, %v1111
  %v1124 = vpack.c.b16 %v1114, %v1113
  %v1125 = vpack.c.b16 %v1116, %v1115
  %v1126 = vpack.c.b16 %v1118, %v1117
  %v1127 = vpack.c.b16 %v1120, %v1119
  %v1128 = vpack.c.b16 %v1122, %v1121
  %1135 = vmatpush.bf16.msra.mxu0 0
  %1136 = vmatpush.bf16.msra.mxu0 0
  %1137 = vmatpush.bf16.msra.mxu0 %v1128
  %1138 = vmatpush.bf16.msra.mxu0 %v1127
  %1139 = vmatpush.bf16.msra.mxu0 %v1126
  %1140 = vmatpush.bf16.msra.mxu0 %v1125
  %1141 = vmatpush.bf16.msra.mxu0 %v1124
  %1142 = vmatpush.bf16.msra.mxu0 %v1123
  %1143 = vmatmul.bf16.gmra.mxu0 %v466
  %v1144 = vpop.f32.mrf.mxu0
  %v1145 = vadd.f32 0.0, %v1144
  %v1146 = vpop.f32.mrf.mxu0
  %v1147 = vadd.f32 0.0, %v1146
  %1148 = vmatmul.bf16.gmra.mxu0 %v469
  %v1149 = vpop.f32.mrf.mxu0
  %v1150 = vadd.f32 0.0, %v1149
  %v1151 = vpop.f32.mrf.mxu0
  %v1152 = vadd.f32 0.0, %v1151
  %1153 = vmatmul.bf16.gmra.mxu0 %v472
  %v1154 = vpop.f32.mrf.mxu0
  %v1155 = vadd.f32 0.0, %v1154
  %v1156 = vpop.f32.mrf.mxu0
  %v1157 = vadd.f32 0.0, %v1156
  %1158 = vmatmul.bf16.gmra.mxu0 %v475
  %v1159 = vpop.f32.mrf.mxu0
  %v1160 = vadd.f32 0.0, %v1159
  %v1161 = vpop.f32.mrf.mxu0
  %v1162 = vadd.f32 0.0, %v1161
  %1163 = vmatmul.bf16.gmra.mxu0 %v478
  %v1164 = vpop.f32.mrf.mxu0
  %v1165 = vadd.f32 0.0, %v1164
  %v1166 = vpop.f32.mrf.mxu0
  %v1167 = vadd.f32 0.0, %v1166
  %1168 = vmatmul.bf16.gmra.mxu0 %v481
  %v1169 = vpop.f32.mrf.mxu0
  %v1170 = vadd.f32 0.0, %v1169
  %v1171 = vpop.f32.mrf.mxu0
  %v1172 = vadd.f32 0.0, %v1171
  %1173 = vmatmul.bf16.gmra.mxu0 %v484
  %v1174 = vpop.f32.mrf.mxu0
  %v1175 = vadd.f32 0.0, %v1174
  %v1176 = vpop.f32.mrf.mxu0
  %v1177 = vadd.f32 0.0, %v1176
  %1178 = vdwg.mxu0
  %v1179 = vadd.f32 %v1052, %v1145
  %v1180 = vadd.f32 %v1054, %v1147
  %v1181 = vadd.f32 %v1057, %v1150
  %v1182 = vadd.f32 %v1059, %v1152
  %v1183 = vadd.f32 %v1062, %v1155
  %v1184 = vadd.f32 %v1064, %v1157
  %v1185 = vadd.f32 %v1067, %v1160
  %v1186 = vadd.f32 %v1069, %v1162
  %v1187 = vadd.f32 %v1072, %v1165
  %v1188 = vadd.f32 %v1074, %v1167
  %v1189 = vadd.f32 %v1077, %v1170
  %v1190 = vadd.f32 %v1079, %v1172
  %v1191 = vadd.f32 %v1082, %v1175
  %v1192 = vadd.f32 %v1084, %v1177
  %s1193 = scalar_lea.vmem %s1, 336
  %v1194 = vld [vmem:[%s1193] sm:$0xf]
  %v1195 = vld [vmem:[%s1193 + $0x4] sm:$0xf]
  %v1196 = vld [vmem:[%s1193 + $0x8] sm:$0xf]
  %v1197 = vld [vmem:[%s1193 + $0xc] sm:$0xf]
  %v1198 = vld [vmem:[%s1193 + $0x10] sm:$0xf]
  %v1199 = vld [vmem:[%s1193 + $0x14] sm:$0xf]
  %v1200 = vld [vmem:[%s1193 + $0x18] sm:$0xf]
  %v1201 = vld [vmem:[%s1193 + $0x1c] sm:$0xf]
  %v1202 = vld [vmem:[%s1193 + $0x20] sm:$0xf]
  %v1203 = vld [vmem:[%s1193 + $0x24] sm:$0xf]
  %v1204 = vld [vmem:[%s1193 + $0x28] sm:$0xf]
  %v1205 = vld [vmem:[%s1193 + $0x2c] sm:$0xf]
  %v1218 = vunpack.c.l.b16 %v1194
  %v1219 = vunpack.c.l.b16 %v1195
  %v1220 = vunpack.c.l.b16 %v1196
  %v1221 = vunpack.c.l.b16 %v1197
  %v1222 = vunpack.c.l.b16 %v1198
  %v1223 = vunpack.c.l.b16 %v1199
  %v1224 = vunpack.c.l.b16 %v1200
  %v1225 = vunpack.c.l.b16 %v1201
  %v1226 = vunpack.c.l.b16 %v1202
  %v1227 = vunpack.c.l.b16 %v1203
  %v1228 = vunpack.c.l.b16 %v1204
  %v1229 = vunpack.c.l.b16 %v1205
  %v1230 = vpack.c.b16 %v1219, %v1218
  %v1231 = vpack.c.b16 %v1221, %v1220
  %v1232 = vpack.c.b16 %v1223, %v1222
  %v1233 = vpack.c.b16 %v1225, %v1224
  %v1234 = vpack.c.b16 %v1227, %v1226
  %v1235 = vpack.c.b16 %v1229, %v1228
  %1242 = vmatpush.bf16.msra.mxu0 0
  %1243 = vmatpush.bf16.msra.mxu0 0
  %1244 = vmatpush.bf16.msra.mxu0 %v1235
  %1245 = vmatpush.bf16.msra.mxu0 %v1234
  %1246 = vmatpush.bf16.msra.mxu0 %v1233
  %1247 = vmatpush.bf16.msra.mxu0 %v1232
  %1248 = vmatpush.bf16.msra.mxu0 %v1231
  %1249 = vmatpush.bf16.msra.mxu0 %v1230
  %1250 = vmatmul.bf16.gmra.mxu0 %v644
  %v1251 = vpop.f32.mrf.mxu0
  %v1252 = vadd.f32 0.0, %v1251
  %v1253 = vpop.f32.mrf.mxu0
  %v1254 = vadd.f32 0.0, %v1253
  %1255 = vmatmul.bf16.gmra.mxu0 %v647
  %v1256 = vpop.f32.mrf.mxu0
  %v1257 = vadd.f32 0.0, %v1256
  %v1258 = vpop.f32.mrf.mxu0
  %v1259 = vadd.f32 0.0, %v1258
  %1260 = vmatmul.bf16.gmra.mxu0 %v650
  %v1261 = vpop.f32.mrf.mxu0
  %v1262 = vadd.f32 0.0, %v1261
  %v1263 = vpop.f32.mrf.mxu0
  %v1264 = vadd.f32 0.0, %v1263
  %1265 = vmatmul.bf16.gmra.mxu0 %v653
  %v1266 = vpop.f32.mrf.mxu0
  %v1267 = vadd.f32 0.0, %v1266
  %v1268 = vpop.f32.mrf.mxu0
  %v1269 = vadd.f32 0.0, %v1268
  %1270 = vmatmul.bf16.gmra.mxu0 %v656
  %v1271 = vpop.f32.mrf.mxu0
  %v1272 = vadd.f32 0.0, %v1271
  %v1273 = vpop.f32.mrf.mxu0
  %v1274 = vadd.f32 0.0, %v1273
  %1275 = vmatmul.bf16.gmra.mxu0 %v659
  %v1276 = vpop.f32.mrf.mxu0
  %v1277 = vadd.f32 0.0, %v1276
  %v1278 = vpop.f32.mrf.mxu0
  %v1279 = vadd.f32 0.0, %v1278
  %1280 = vmatmul.bf16.gmra.mxu0 %v662
  %v1281 = vpop.f32.mrf.mxu0
  %v1282 = vadd.f32 0.0, %v1281
  %v1283 = vpop.f32.mrf.mxu0
  %v1284 = vadd.f32 0.0, %v1283
  %1285 = vdwg.mxu0
  %v1286 = vadd.f32 %v1179, %v1252
  %v1287 = vadd.f32 %v1180, %v1254
  %v1288 = vadd.f32 %v1181, %v1257
  %v1289 = vadd.f32 %v1182, %v1259
  %v1290 = vadd.f32 %v1183, %v1262
  %v1291 = vadd.f32 %v1184, %v1264
  %v1292 = vadd.f32 %v1185, %v1267
  %v1293 = vadd.f32 %v1186, %v1269
  %v1294 = vadd.f32 %v1187, %v1272
  %v1295 = vadd.f32 %v1188, %v1274
  %v1296 = vadd.f32 %v1189, %v1277
  %v1297 = vadd.f32 %v1190, %v1279
  %v1298 = vadd.f32 %v1191, %v1282
  %v1299 = vadd.f32 %v1192, %v1284
  %s1300 = scalar_lea.vmem %s1, 432
  %v1301 = vld [vmem:[%s1300] sm:$0xf]
  %v1302 = vld [vmem:[%s1300 + $0x4] sm:$0xf]
  %v1303 = vld [vmem:[%s1300 + $0x8] sm:$0xf]
  %v1304 = vld [vmem:[%s1300 + $0xc] sm:$0xf]
  %v1305 = vld [vmem:[%s1300 + $0x10] sm:$0xf]
  %v1306 = vld [vmem:[%s1300 + $0x14] sm:$0xf]
  %v1307 = vld [vmem:[%s1300 + $0x18] sm:$0xf]
  %v1308 = vld [vmem:[%s1300 + $0x1c] sm:$0xf]
  %v1309 = vld [vmem:[%s1300 + $0x20] sm:$0xf]
  %v1310 = vld [vmem:[%s1300 + $0x24] sm:$0xf]
  %v1311 = vld [vmem:[%s1300 + $0x28] sm:$0xf]
  %v1312 = vld [vmem:[%s1300 + $0x2c] sm:$0xf]
  %v1325 = vunpack.c.l.b16 %v1301
  %v1326 = vunpack.c.l.b16 %v1302
  %v1327 = vunpack.c.l.b16 %v1303
  %v1328 = vunpack.c.l.b16 %v1304
  %v1329 = vunpack.c.l.b16 %v1305
  %v1330 = vunpack.c.l.b16 %v1306
  %v1331 = vunpack.c.l.b16 %v1307
  %v1332 = vunpack.c.l.b16 %v1308
  %v1333 = vunpack.c.l.b16 %v1309
  %v1334 = vunpack.c.l.b16 %v1310
  %v1335 = vunpack.c.l.b16 %v1311
  %v1336 = vunpack.c.l.b16 %v1312
  %v1337 = vpack.c.b16 %v1326, %v1325
  %v1338 = vpack.c.b16 %v1328, %v1327
  %v1339 = vpack.c.b16 %v1330, %v1329
  %v1340 = vpack.c.b16 %v1332, %v1331
  %v1341 = vpack.c.b16 %v1334, %v1333
  %v1342 = vpack.c.b16 %v1336, %v1335
  %1349 = vmatpush.bf16.msra.mxu0 0
  %1350 = vmatpush.bf16.msra.mxu0 0
  %1351 = vmatpush.bf16.msra.mxu0 %v1342
  %1352 = vmatpush.bf16.msra.mxu0 %v1341
  %1353 = vmatpush.bf16.msra.mxu0 %v1340
  %1354 = vmatpush.bf16.msra.mxu0 %v1339
  %1355 = vmatpush.bf16.msra.mxu0 %v1338
  %1356 = vmatpush.bf16.msra.mxu0 %v1337
  %1357 = vmatmul.bf16.gmra.mxu0 %v822
  %v1358 = vpop.f32.mrf.mxu0
  %v1359 = vadd.f32 0.0, %v1358
  %v1360 = vpop.f32.mrf.mxu0
  %v1361 = vadd.f32 0.0, %v1360
  %1362 = vmatmul.bf16.gmra.mxu0 %v825
  %v1363 = vpop.f32.mrf.mxu0
  %v1364 = vadd.f32 0.0, %v1363
  %v1365 = vpop.f32.mrf.mxu0
  %v1366 = vadd.f32 0.0, %v1365
  %1367 = vmatmul.bf16.gmra.mxu0 %v828
  %v1368 = vpop.f32.mrf.mxu0
  %v1369 = vadd.f32 0.0, %v1368
  %v1370 = vpop.f32.mrf.mxu0
  %v1371 = vadd.f32 0.0, %v1370
  %1372 = vmatmul.bf16.gmra.mxu0 %v831
  %v1373 = vpop.f32.mrf.mxu0
  %v1374 = vadd.f32 0.0, %v1373
  %v1375 = vpop.f32.mrf.mxu0
  %v1376 = vadd.f32 0.0, %v1375
  %1377 = vmatmul.bf16.gmra.mxu0 %v834
  %v1378 = vpop.f32.mrf.mxu0
  %v1379 = vadd.f32 0.0, %v1378
  %v1380 = vpop.f32.mrf.mxu0
  %v1381 = vadd.f32 0.0, %v1380
  %1382 = vmatmul.bf16.gmra.mxu0 %v837
  %v1383 = vpop.f32.mrf.mxu0
  %v1384 = vadd.f32 0.0, %v1383
  %v1385 = vpop.f32.mrf.mxu0
  %v1386 = vadd.f32 0.0, %v1385
  %1387 = vmatmul.bf16.gmra.mxu0 %v840
  %v1388 = vpop.f32.mrf.mxu0
  %v1389 = vadd.f32 0.0, %v1388
  %v1390 = vpop.f32.mrf.mxu0
  %v1391 = vadd.f32 0.0, %v1390
  %1392 = vdwg.mxu0
  %v1393 = vadd.f32 %v1286, %v1359
  %v1394 = vadd.f32 %v1287, %v1361
  %v1395 = vadd.f32 %v1288, %v1364
  %v1396 = vadd.f32 %v1289, %v1366
  %v1397 = vadd.f32 %v1290, %v1369
  %v1398 = vadd.f32 %v1291, %v1371
  %v1399 = vadd.f32 %v1292, %v1374
  %v1400 = vadd.f32 %v1293, %v1376
  %v1401 = vadd.f32 %v1294, %v1379
  %v1402 = vadd.f32 %v1295, %v1381
  %v1403 = vadd.f32 %v1296, %v1384
  %v1404 = vadd.f32 %v1297, %v1386
  %v1405 = vadd.f32 %v1298, %v1389
  %v1406 = vadd.f32 %v1299, %v1391
  %v1407 = vmax.f32 %v886, %v1393
  %v1408 = vmax.f32 %v887, %v1394
  %v1409 = vmax.f32 %v888, %v1395
  %v1410 = vmax.f32 %v889, %v1396
  %v1411 = vmax.f32 %v890, %v1397
  %v1412 = vmax.f32 %v891, %v1398
  %v1413 = vmax.f32 %v892, %v1399
  %v1414 = vmax.f32 %v893, %v1400
  %v1415 = vmax.f32 %v894, %v1401
  %v1416 = vmax.f32 %v895, %v1402
  %v1417 = vmax.f32 %v896, %v1403
  %v1418 = vmax.f32 %v897, %v1404
  %v1419 = vmax.f32 %v898, %v1405
  %v1420 = vmax.f32 %v899, %v1406
  %1421 = vmatpush.bf16.msra.mxu0 0
  %1422 = vmatpush.bf16.msra.mxu0 0
  %1423 = vmatpush.bf16.msra.mxu0 %v157
  %1424 = vmatpush.bf16.msra.mxu0 %v156
  %1425 = vmatpush.bf16.msra.mxu0 %v155
  %1426 = vmatpush.bf16.msra.mxu0 %v154
  %1427 = vmatpush.bf16.msra.mxu0 %v153
  %1428 = vmatpush.bf16.msra.mxu0 %v152
  %1429 = vmatmul.bf16.gmra.mxu0 %v466
  %v1430 = vpop.f32.mrf.mxu0
  %v1431 = vadd.f32 0.0, %v1430
  %v1432 = vpop.f32.mrf.mxu0
  %v1433 = vadd.f32 0.0, %v1432
  %1434 = vmatmul.bf16.gmra.mxu0 %v469
  %v1435 = vpop.f32.mrf.mxu0
  %v1436 = vadd.f32 0.0, %v1435
  %v1437 = vpop.f32.mrf.mxu0
  %v1438 = vadd.f32 0.0, %v1437
  %1439 = vmatmul.bf16.gmra.mxu0 %v472
  %v1440 = vpop.f32.mrf.mxu0
  %v1441 = vadd.f32 0.0, %v1440
  %v1442 = vpop.f32.mrf.mxu0
  %v1443 = vadd.f32 0.0, %v1442
  %1444 = vmatmul.bf16.gmra.mxu0 %v475
  %v1445 = vpop.f32.mrf.mxu0
  %v1446 = vadd.f32 0.0, %v1445
  %v1447 = vpop.f32.mrf.mxu0
  %v1448 = vadd.f32 0.0, %v1447
  %1449 = vmatmul.bf16.gmra.mxu0 %v478
  %v1450 = vpop.f32.mrf.mxu0
  %v1451 = vadd.f32 0.0, %v1450
  %v1452 = vpop.f32.mrf.mxu0
  %v1453 = vadd.f32 0.0, %v1452
  %1454 = vmatmul.bf16.gmra.mxu0 %v481
  %v1455 = vpop.f32.mrf.mxu0
  %v1456 = vadd.f32 0.0, %v1455
  %v1457 = vpop.f32.mrf.mxu0
  %v1458 = vadd.f32 0.0, %v1457
  %1459 = vmatmul.bf16.gmra.mxu0 %v484
  %v1460 = vpop.f32.mrf.mxu0
  %v1461 = vadd.f32 0.0, %v1460
  %v1462 = vpop.f32.mrf.mxu0
  %v1463 = vadd.f32 0.0, %v1462
  %1464 = vdwg.mxu0
  %1465 = vmatpush.bf16.msra.mxu0 0
  %1466 = vmatpush.bf16.msra.mxu0 0
  %1467 = vmatpush.bf16.msra.mxu0 %v294
  %1468 = vmatpush.bf16.msra.mxu0 %v293
  %1469 = vmatpush.bf16.msra.mxu0 %v292
  %1470 = vmatpush.bf16.msra.mxu0 %v291
  %1471 = vmatpush.bf16.msra.mxu0 %v290
  %1472 = vmatpush.bf16.msra.mxu0 %v289
  %1473 = vmatmul.bf16.gmra.mxu0 %v166
  %v1474 = vpop.f32.mrf.mxu0
  %v1475 = vadd.f32 %v1431, %v1474
  %v1476 = vpop.f32.mrf.mxu0
  %v1477 = vadd.f32 %v1433, %v1476
  %1478 = vmatmul.bf16.gmra.mxu0 %v169
  %v1479 = vpop.f32.mrf.mxu0
  %v1480 = vadd.f32 %v1436, %v1479
  %v1481 = vpop.f32.mrf.mxu0
  %v1482 = vadd.f32 %v1438, %v1481
  %1483 = vmatmul.bf16.gmra.mxu0 %v172
  %v1484 = vpop.f32.mrf.mxu0
  %v1485 = vadd.f32 %v1441, %v1484
  %v1486 = vpop.f32.mrf.mxu0
  %v1487 = vadd.f32 %v1443, %v1486
  %1488 = vmatmul.bf16.gmra.mxu0 %v175
  %v1489 = vpop.f32.mrf.mxu0
  %v1490 = vadd.f32 %v1446, %v1489
  %v1491 = vpop.f32.mrf.mxu0
  %v1492 = vadd.f32 %v1448, %v1491
  %1493 = vmatmul.bf16.gmra.mxu0 %v178
  %v1494 = vpop.f32.mrf.mxu0
  %v1495 = vadd.f32 %v1451, %v1494
  %v1496 = vpop.f32.mrf.mxu0
  %v1497 = vadd.f32 %v1453, %v1496
  %1498 = vmatmul.bf16.gmra.mxu0 %v181
  %v1499 = vpop.f32.mrf.mxu0
  %v1500 = vadd.f32 %v1456, %v1499
  %v1501 = vpop.f32.mrf.mxu0
  %v1502 = vadd.f32 %v1458, %v1501
  %1503 = vmatmul.bf16.gmra.mxu0 %v184
  %v1504 = vpop.f32.mrf.mxu0
  %v1505 = vadd.f32 %v1461, %v1504
  %v1506 = vpop.f32.mrf.mxu0
  %v1507 = vadd.f32 %v1463, %v1506
  %1508 = vdwg.mxu0
  %1509 = vmatpush.bf16.msra.mxu0 0
  %1510 = vmatpush.bf16.msra.mxu0 0
  %1511 = vmatpush.bf16.msra.mxu0 %v458
  %1512 = vmatpush.bf16.msra.mxu0 %v457
  %1513 = vmatpush.bf16.msra.mxu0 %v456
  %1514 = vmatpush.bf16.msra.mxu0 %v455
  %1515 = vmatpush.bf16.msra.mxu0 %v454
  %1516 = vmatpush.bf16.msra.mxu0 %v453
  %1517 = vmatmul.bf16.gmra.mxu0 %v644
  %v1518 = vpop.f32.mrf.mxu0
  %v1519 = vadd.f32 0.0, %v1518
  %v1520 = vpop.f32.mrf.mxu0
  %v1521 = vadd.f32 0.0, %v1520
  %1522 = vmatmul.bf16.gmra.mxu0 %v647
  %v1523 = vpop.f32.mrf.mxu0
  %v1524 = vadd.f32 0.0, %v1523
  %v1525 = vpop.f32.mrf.mxu0
  %v1526 = vadd.f32 0.0, %v1525
  %1527 = vmatmul.bf16.gmra.mxu0 %v650
  %v1528 = vpop.f32.mrf.mxu0
  %v1529 = vadd.f32 0.0, %v1528
  %v1530 = vpop.f32.mrf.mxu0
  %v1531 = vadd.f32 0.0, %v1530
  %1532 = vmatmul.bf16.gmra.mxu0 %v653
  %v1533 = vpop.f32.mrf.mxu0
  %v1534 = vadd.f32 0.0, %v1533
  %v1535 = vpop.f32.mrf.mxu0
  %v1536 = vadd.f32 0.0, %v1535
  %1537 = vmatmul.bf16.gmra.mxu0 %v656
  %v1538 = vpop.f32.mrf.mxu0
  %v1539 = vadd.f32 0.0, %v1538
  %v1540 = vpop.f32.mrf.mxu0
  %v1541 = vadd.f32 0.0, %v1540
  %1542 = vmatmul.bf16.gmra.mxu0 %v659
  %v1543 = vpop.f32.mrf.mxu0
  %v1544 = vadd.f32 0.0, %v1543
  %v1545 = vpop.f32.mrf.mxu0
  %v1546 = vadd.f32 0.0, %v1545
  %1547 = vmatmul.bf16.gmra.mxu0 %v662
  %v1548 = vpop.f32.mrf.mxu0
  %v1549 = vadd.f32 0.0, %v1548
  %v1550 = vpop.f32.mrf.mxu0
  %v1551 = vadd.f32 0.0, %v1550
  %1552 = vdwg.mxu0
  %v1553 = vadd.f32 %v1475, %v1519
  %v1554 = vadd.f32 %v1477, %v1521
  %v1555 = vadd.f32 %v1480, %v1524
  %v1556 = vadd.f32 %v1482, %v1526
  %v1557 = vadd.f32 %v1485, %v1529
  %v1558 = vadd.f32 %v1487, %v1531
  %v1559 = vadd.f32 %v1490, %v1534
  %v1560 = vadd.f32 %v1492, %v1536
  %v1561 = vadd.f32 %v1495, %v1539
  %v1562 = vadd.f32 %v1497, %v1541
  %v1563 = vadd.f32 %v1500, %v1544
  %v1564 = vadd.f32 %v1502, %v1546
  %v1565 = vadd.f32 %v1505, %v1549
  %v1566 = vadd.f32 %v1507, %v1551
  %1567 = vmatpush.bf16.msra.mxu0 0
  %1568 = vmatpush.bf16.msra.mxu0 0
  %1569 = vmatpush.bf16.msra.mxu0 %v636
  %1570 = vmatpush.bf16.msra.mxu0 %v635
  %1571 = vmatpush.bf16.msra.mxu0 %v634
  %1572 = vmatpush.bf16.msra.mxu0 %v633
  %1573 = vmatpush.bf16.msra.mxu0 %v632
  %1574 = vmatpush.bf16.msra.mxu0 %v631
  %1575 = vmatmul.bf16.gmra.mxu0 %v822
  %v1576 = vpop.f32.mrf.mxu0
  %v1577 = vadd.f32 0.0, %v1576
  %v1578 = vpop.f32.mrf.mxu0
  %v1579 = vadd.f32 0.0, %v1578
  %1580 = vmatmul.bf16.gmra.mxu0 %v825
  %v1581 = vpop.f32.mrf.mxu0
  %v1582 = vadd.f32 0.0, %v1581
  %v1583 = vpop.f32.mrf.mxu0
  %v1584 = vadd.f32 0.0, %v1583
  %1585 = vmatmul.bf16.gmra.mxu0 %v828
  %v1586 = vpop.f32.mrf.mxu0
  %v1587 = vadd.f32 0.0, %v1586
  %v1588 = vpop.f32.mrf.mxu0
  %v1589 = vadd.f32 0.0, %v1588
  %1590 = vmatmul.bf16.gmra.mxu0 %v831
  %v1591 = vpop.f32.mrf.mxu0
  %v1592 = vadd.f32 0.0, %v1591
  %v1593 = vpop.f32.mrf.mxu0
  %v1594 = vadd.f32 0.0, %v1593
  %1595 = vmatmul.bf16.gmra.mxu0 %v834
  %v1596 = vpop.f32.mrf.mxu0
  %v1597 = vadd.f32 0.0, %v1596
  %v1598 = vpop.f32.mrf.mxu0
  %v1599 = vadd.f32 0.0, %v1598
  %1600 = vmatmul.bf16.gmra.mxu0 %v837
  %v1601 = vpop.f32.mrf.mxu0
  %v1602 = vadd.f32 0.0, %v1601
  %v1603 = vpop.f32.mrf.mxu0
  %v1604 = vadd.f32 0.0, %v1603
  %1605 = vmatmul.bf16.gmra.mxu0 %v840
  %v1606 = vpop.f32.mrf.mxu0
  %v1607 = vadd.f32 0.0, %v1606
  %v1608 = vpop.f32.mrf.mxu0
  %v1609 = vadd.f32 0.0, %v1608
  %1610 = vdwg.mxu0
  %v1611 = vadd.f32 %v1553, %v1577
  %v1612 = vadd.f32 %v1554, %v1579
  %v1613 = vadd.f32 %v1555, %v1582
  %v1614 = vadd.f32 %v1556, %v1584
  %v1615 = vadd.f32 %v1557, %v1587
  %v1616 = vadd.f32 %v1558, %v1589
  %v1617 = vadd.f32 %v1559, %v1592
  %v1618 = vadd.f32 %v1560, %v1594
  %v1619 = vadd.f32 %v1561, %v1597
  %v1620 = vadd.f32 %v1562, %v1599
  %v1621 = vadd.f32 %v1563, %v1602
  %v1622 = vadd.f32 %v1564, %v1604
  %v1623 = vadd.f32 %v1565, %v1607
  %v1624 = vadd.f32 %v1566, %v1609
  %s1625 = scalar_lea.vmem %s0, 72
  %v1626 = vld [vmem:[%s1625] sm:$0xf]
  %v1627 = vld [vmem:[%s1625 + $0x4] sm:$0xf]
  %v1628 = vld [vmem:[%s1625 + $0x8] sm:$0xf]
  %v1629 = vld [vmem:[%s1625 + $0xc] sm:$0xf]
  %v1630 = vld [vmem:[%s1625 + $0x10] sm:$0xf]
  %v1631 = vld [vmem:[%s1625 + $0x14] sm:$0xf]
  %v1632 = vld [vmem:[%s1625 + $0x18] sm:$0xf]
  %v1633 = vld [vmem:[%s1625 + $0x1c] sm:$0xf]
  %v1634 = vld [vmem:[%s1625 + $0x20] sm:$0xf]
  %v1635 = vld [vmem:[%s1625 + $0x24] sm:$0xf]
  %v1636 = vld [vmem:[%s1625 + $0x28] sm:$0xf]
  %v1637 = vld [vmem:[%s1625 + $0x2c] sm:$0xf]
  %v1638 = vld [vmem:[%s1625 + $0x30] sm:$0xf]
  %v1639 = vld [vmem:[%s1625 + $0x34] sm:$0xf]
  %v1654 = vunpack.c.l.b16 %v1626
  %v1655 = vunpack.c.l.b16 %v1627
  %v1656 = vunpack.c.l.b16 %v1628
  %v1657 = vunpack.c.l.b16 %v1629
  %v1658 = vunpack.c.l.b16 %v1630
  %v1659 = vunpack.c.l.b16 %v1631
  %v1660 = vunpack.c.l.b16 %v1632
  %v1661 = vunpack.c.l.b16 %v1633
  %v1662 = vunpack.c.l.b16 %v1634
  %v1663 = vunpack.c.l.b16 %v1635
  %v1664 = vunpack.c.l.b16 %v1636
  %v1665 = vunpack.c.l.b16 %v1637
  %v1666 = vunpack.c.l.b16 %v1638
  %v1667 = vunpack.c.l.b16 %v1639
  %v1668 = vpack.c.b16 %v1655, %v1654
  %v1669 = vpack.c.b16 %v1657, %v1656
  %v1670 = vpack.c.b16 %v1659, %v1658
  %v1671 = vpack.c.b16 %v1661, %v1660
  %v1672 = vpack.c.b16 %v1663, %v1662
  %v1673 = vpack.c.b16 %v1665, %v1664
  %v1674 = vpack.c.b16 %v1667, %v1666
  %v1676 = vsel %vm164, %v1668, 0
  %v1679 = vsel %vm164, %v1669, 0
  %v1682 = vsel %vm164, %v1670, 0
  %v1685 = vsel %vm164, %v1671, 0
  %v1688 = vsel %vm164, %v1672, 0
  %v1691 = vsel %vm164, %v1673, 0
  %v1694 = vsel %vm164, %v1674, 0
  %1696 = vmatpush.bf16.msra.mxu0 0
  %1697 = vmatpush.bf16.msra.mxu0 0
  %1698 = vmatpush.bf16.msra.mxu0 %v814
  %1699 = vmatpush.bf16.msra.mxu0 %v813
  %1700 = vmatpush.bf16.msra.mxu0 %v812
  %1701 = vmatpush.bf16.msra.mxu0 %v811
  %1702 = vmatpush.bf16.msra.mxu0 %v810
  %1703 = vmatpush.bf16.msra.mxu0 %v809
  %1704 = vmatmul.bf16.gmra.mxu0 %v1676
  %v1705 = vpop.f32.mrf.mxu0
  %v1706 = vadd.f32 0.0, %v1705
  %v1707 = vpop.f32.mrf.mxu0
  %v1708 = vadd.f32 0.0, %v1707
  %1709 = vmatmul.bf16.gmra.mxu0 %v1679
  %v1710 = vpop.f32.mrf.mxu0
  %v1711 = vadd.f32 0.0, %v1710
  %v1712 = vpop.f32.mrf.mxu0
  %v1713 = vadd.f32 0.0, %v1712
  %1714 = vmatmul.bf16.gmra.mxu0 %v1682
  %v1715 = vpop.f32.mrf.mxu0
  %v1716 = vadd.f32 0.0, %v1715
  %v1717 = vpop.f32.mrf.mxu0
  %v1718 = vadd.f32 0.0, %v1717
  %1719 = vmatmul.bf16.gmra.mxu0 %v1685
  %v1720 = vpop.f32.mrf.mxu0
  %v1721 = vadd.f32 0.0, %v1720
  %v1722 = vpop.f32.mrf.mxu0
  %v1723 = vadd.f32 0.0, %v1722
  %1724 = vmatmul.bf16.gmra.mxu0 %v1688
  %v1725 = vpop.f32.mrf.mxu0
  %v1726 = vadd.f32 0.0, %v1725
  %v1727 = vpop.f32.mrf.mxu0
  %v1728 = vadd.f32 0.0, %v1727
  %1729 = vmatmul.bf16.gmra.mxu0 %v1691
  %v1730 = vpop.f32.mrf.mxu0
  %v1731 = vadd.f32 0.0, %v1730
  %v1732 = vpop.f32.mrf.mxu0
  %v1733 = vadd.f32 0.0, %v1732
  %1734 = vmatmul.bf16.gmra.mxu0 %v1694
  %v1735 = vpop.f32.mrf.mxu0
  %v1736 = vadd.f32 0.0, %v1735
  %v1737 = vpop.f32.mrf.mxu0
  %v1738 = vadd.f32 0.0, %v1737
  %1739 = vdwg.mxu0
  %v1740 = vadd.f32 %v1611, %v1706
  %v1741 = vadd.f32 %v1612, %v1708
  %v1742 = vadd.f32 %v1613, %v1711
  %v1743 = vadd.f32 %v1614, %v1713
  %v1744 = vadd.f32 %v1615, %v1716
  %v1745 = vadd.f32 %v1616, %v1718
  %v1746 = vadd.f32 %v1617, %v1721
  %v1747 = vadd.f32 %v1618, %v1723
  %v1748 = vadd.f32 %v1619, %v1726
  %v1749 = vadd.f32 %v1620, %v1728
  %v1750 = vadd.f32 %v1621, %v1731
  %v1751 = vadd.f32 %v1622, %v1733
  %v1752 = vadd.f32 %v1623, %v1736
  %v1753 = vadd.f32 %v1624, %v1738
  %v1754 = vmax.f32 %v1407, %v1740
  %v1755 = vmax.f32 %v1408, %v1741
  %v1756 = vmax.f32 %v1409, %v1742
  %v1757 = vmax.f32 %v1410, %v1743
  %v1758 = vmax.f32 %v1411, %v1744
  %v1759 = vmax.f32 %v1412, %v1745
  %v1760 = vmax.f32 %v1413, %v1746
  %v1761 = vmax.f32 %v1414, %v1747
  %v1762 = vmax.f32 %v1415, %v1748
  %v1763 = vmax.f32 %v1416, %v1749
  %v1764 = vmax.f32 %v1417, %v1750
  %v1765 = vmax.f32 %v1418, %v1751
  %v1766 = vmax.f32 %v1419, %v1752
  %v1767 = vmax.f32 %v1420, %v1753
  %1768 = vmatpush.bf16.msra.mxu0 0
  %1769 = vmatpush.bf16.msra.mxu0 0
  %1770 = vmatpush.bf16.msra.mxu0 %v955
  %1771 = vmatpush.bf16.msra.mxu0 %v954
  %1772 = vmatpush.bf16.msra.mxu0 %v953
  %1773 = vmatpush.bf16.msra.mxu0 %v952
  %1774 = vmatpush.bf16.msra.mxu0 %v951
  %1775 = vmatpush.bf16.msra.mxu0 %v950
  %1776 = vmatmul.bf16.gmra.mxu0 %v466
  %v1777 = vpop.f32.mrf.mxu0
  %v1778 = vadd.f32 0.0, %v1777
  %v1779 = vpop.f32.mrf.mxu0
  %v1780 = vadd.f32 0.0, %v1779
  %1781 = vmatmul.bf16.gmra.mxu0 %v469
  %v1782 = vpop.f32.mrf.mxu0
  %v1783 = vadd.f32 0.0, %v1782
  %v1784 = vpop.f32.mrf.mxu0
  %v1785 = vadd.f32 0.0, %v1784
  %1786 = vmatmul.bf16.gmra.mxu0 %v472
  %v1787 = vpop.f32.mrf.mxu0
  %v1788 = vadd.f32 0.0, %v1787
  %v1789 = vpop.f32.mrf.mxu0
  %v1790 = vadd.f32 0.0, %v1789
  %1791 = vmatmul.bf16.gmra.mxu0 %v475
  %v1792 = vpop.f32.mrf.mxu0
  %v1793 = vadd.f32 0.0, %v1792
  %v1794 = vpop.f32.mrf.mxu0
  %v1795 = vadd.f32 0.0, %v1794
  %1796 = vmatmul.bf16.gmra.mxu0 %v478
  %v1797 = vpop.f32.mrf.mxu0
  %v1798 = vadd.f32 0.0, %v1797
  %v1799 = vpop.f32.mrf.mxu0
  %v1800 = vadd.f32 0.0, %v1799
  %1801 = vmatmul.bf16.gmra.mxu0 %v481
  %v1802 = vpop.f32.mrf.mxu0
  %v1803 = vadd.f32 0.0, %v1802
  %v1804 = vpop.f32.mrf.mxu0
  %v1805 = vadd.f32 0.0, %v1804
  %1806 = vmatmul.bf16.gmra.mxu0 %v484
  %v1807 = vpop.f32.mrf.mxu0
  %v1808 = vadd.f32 0.0, %v1807
  %v1809 = vpop.f32.mrf.mxu0
  %v1810 = vadd.f32 0.0, %v1809
  %1811 = vdwg.mxu0
  %1812 = vmatpush.bf16.msra.mxu0 0
  %1813 = vmatpush.bf16.msra.mxu0 0
  %1814 = vmatpush.bf16.msra.mxu0 %v1035
  %1815 = vmatpush.bf16.msra.mxu0 %v1034
  %1816 = vmatpush.bf16.msra.mxu0 %v1033
  %1817 = vmatpush.bf16.msra.mxu0 %v1032
  %1818 = vmatpush.bf16.msra.mxu0 %v1031
  %1819 = vmatpush.bf16.msra.mxu0 %v1030
  %1820 = vmatmul.bf16.gmra.mxu0 %v166
  %v1821 = vpop.f32.mrf.mxu0
  %v1822 = vadd.f32 %v1778, %v1821
  %v1823 = vpop.f32.mrf.mxu0
  %v1824 = vadd.f32 %v1780, %v1823
  %1825 = vmatmul.bf16.gmra.mxu0 %v169
  %v1826 = vpop.f32.mrf.mxu0
  %v1827 = vadd.f32 %v1783, %v1826
  %v1828 = vpop.f32.mrf.mxu0
  %v1829 = vadd.f32 %v1785, %v1828
  %1830 = vmatmul.bf16.gmra.mxu0 %v172
  %v1831 = vpop.f32.mrf.mxu0
  %v1832 = vadd.f32 %v1788, %v1831
  %v1833 = vpop.f32.mrf.mxu0
  %v1834 = vadd.f32 %v1790, %v1833
  %1835 = vmatmul.bf16.gmra.mxu0 %v175
  %v1836 = vpop.f32.mrf.mxu0
  %v1837 = vadd.f32 %v1793, %v1836
  %v1838 = vpop.f32.mrf.mxu0
  %v1839 = vadd.f32 %v1795, %v1838
  %1840 = vmatmul.bf16.gmra.mxu0 %v178
  %v1841 = vpop.f32.mrf.mxu0
  %v1842 = vadd.f32 %v1798, %v1841
  %v1843 = vpop.f32.mrf.mxu0
  %v1844 = vadd.f32 %v1800, %v1843
  %1845 = vmatmul.bf16.gmra.mxu0 %v181
  %v1846 = vpop.f32.mrf.mxu0
  %v1847 = vadd.f32 %v1803, %v1846
  %v1848 = vpop.f32.mrf.mxu0
  %v1849 = vadd.f32 %v1805, %v1848
  %1850 = vmatmul.bf16.gmra.mxu0 %v184
  %v1851 = vpop.f32.mrf.mxu0
  %v1852 = vadd.f32 %v1808, %v1851
  %v1853 = vpop.f32.mrf.mxu0
  %v1854 = vadd.f32 %v1810, %v1853
  %1855 = vdwg.mxu0
  %1856 = vmatpush.bf16.msra.mxu0 0
  %1857 = vmatpush.bf16.msra.mxu0 0
  %1858 = vmatpush.bf16.msra.mxu0 %v1128
  %1859 = vmatpush.bf16.msra.mxu0 %v1127
  %1860 = vmatpush.bf16.msra.mxu0 %v1126
  %1861 = vmatpush.bf16.msra.mxu0 %v1125
  %1862 = vmatpush.bf16.msra.mxu0 %v1124
  %1863 = vmatpush.bf16.msra.mxu0 %v1123
  %1864 = vmatmul.bf16.gmra.mxu0 %v644
  %v1865 = vpop.f32.mrf.mxu0
  %v1866 = vadd.f32 0.0, %v1865
  %v1867 = vpop.f32.mrf.mxu0
  %v1868 = vadd.f32 0.0, %v1867
  %1869 = vmatmul.bf16.gmra.mxu0 %v647
  %v1870 = vpop.f32.mrf.mxu0
  %v1871 = vadd.f32 0.0, %v1870
  %v1872 = vpop.f32.mrf.mxu0
  %v1873 = vadd.f32 0.0, %v1872
  %1874 = vmatmul.bf16.gmra.mxu0 %v650
  %v1875 = vpop.f32.mrf.mxu0
  %v1876 = vadd.f32 0.0, %v1875
  %v1877 = vpop.f32.mrf.mxu0
  %v1878 = vadd.f32 0.0, %v1877
  %1879 = vmatmul.bf16.gmra.mxu0 %v653
  %v1880 = vpop.f32.mrf.mxu0
  %v1881 = vadd.f32 0.0, %v1880
  %v1882 = vpop.f32.mrf.mxu0
  %v1883 = vadd.f32 0.0, %v1882
  %1884 = vmatmul.bf16.gmra.mxu0 %v656
  %v1885 = vpop.f32.mrf.mxu0
  %v1886 = vadd.f32 0.0, %v1885
  %v1887 = vpop.f32.mrf.mxu0
  %v1888 = vadd.f32 0.0, %v1887
  %1889 = vmatmul.bf16.gmra.mxu0 %v659
  %v1890 = vpop.f32.mrf.mxu0
  %v1891 = vadd.f32 0.0, %v1890
  %v1892 = vpop.f32.mrf.mxu0
  %v1893 = vadd.f32 0.0, %v1892
  %1894 = vmatmul.bf16.gmra.mxu0 %v662
  %v1895 = vpop.f32.mrf.mxu0
  %v1896 = vadd.f32 0.0, %v1895
  %v1897 = vpop.f32.mrf.mxu0
  %v1898 = vadd.f32 0.0, %v1897
  %1899 = vdwg.mxu0
  %v1900 = vadd.f32 %v1822, %v1866
  %v1901 = vadd.f32 %v1824, %v1868
  %v1902 = vadd.f32 %v1827, %v1871
  %v1903 = vadd.f32 %v1829, %v1873
  %v1904 = vadd.f32 %v1832, %v1876
  %v1905 = vadd.f32 %v1834, %v1878
  %v1906 = vadd.f32 %v1837, %v1881
  %v1907 = vadd.f32 %v1839, %v1883
  %v1908 = vadd.f32 %v1842, %v1886
  %v1909 = vadd.f32 %v1844, %v1888
  %v1910 = vadd.f32 %v1847, %v1891
  %v1911 = vadd.f32 %v1849, %v1893
  %v1912 = vadd.f32 %v1852, %v1896
  %v1913 = vadd.f32 %v1854, %v1898
  %1914 = vmatpush.bf16.msra.mxu0 0
  %1915 = vmatpush.bf16.msra.mxu0 0
  %1916 = vmatpush.bf16.msra.mxu0 %v1235
  %1917 = vmatpush.bf16.msra.mxu0 %v1234
  %1918 = vmatpush.bf16.msra.mxu0 %v1233
  %1919 = vmatpush.bf16.msra.mxu0 %v1232
  %1920 = vmatpush.bf16.msra.mxu0 %v1231
  %1921 = vmatpush.bf16.msra.mxu0 %v1230
  %1922 = vmatmul.bf16.gmra.mxu0 %v822
  %v1923 = vpop.f32.mrf.mxu0
  %v1924 = vadd.f32 0.0, %v1923
  %v1925 = vpop.f32.mrf.mxu0
  %v1926 = vadd.f32 0.0, %v1925
  %1927 = vmatmul.bf16.gmra.mxu0 %v825
  %v1928 = vpop.f32.mrf.mxu0
  %v1929 = vadd.f32 0.0, %v1928
  %v1930 = vpop.f32.mrf.mxu0
  %v1931 = vadd.f32 0.0, %v1930
  %1932 = vmatmul.bf16.gmra.mxu0 %v828
  %v1933 = vpop.f32.mrf.mxu0
  %v1934 = vadd.f32 0.0, %v1933
  %v1935 = vpop.f32.mrf.mxu0
  %v1936 = vadd.f32 0.0, %v1935
  %1937 = vmatmul.bf16.gmra.mxu0 %v831
  %v1938 = vpop.f32.mrf.mxu0
  %v1939 = vadd.f32 0.0, %v1938
  %v1940 = vpop.f32.mrf.mxu0
  %v1941 = vadd.f32 0.0, %v1940
  %1942 = vmatmul.bf16.gmra.mxu0 %v834
  %v1943 = vpop.f32.mrf.mxu0
  %v1944 = vadd.f32 0.0, %v1943
  %v1945 = vpop.f32.mrf.mxu0
  %v1946 = vadd.f32 0.0, %v1945
  %1947 = vmatmul.bf16.gmra.mxu0 %v837
  %v1948 = vpop.f32.mrf.mxu0
  %v1949 = vadd.f32 0.0, %v1948
  %v1950 = vpop.f32.mrf.mxu0
  %v1951 = vadd.f32 0.0, %v1950
  %1952 = vmatmul.bf16.gmra.mxu0 %v840
  %v1953 = vpop.f32.mrf.mxu0
  %v1954 = vadd.f32 0.0, %v1953
  %v1955 = vpop.f32.mrf.mxu0
  %v1956 = vadd.f32 0.0, %v1955
  %1957 = vdwg.mxu0
  %v1958 = vadd.f32 %v1900, %v1924
  %v1959 = vadd.f32 %v1901, %v1926
  %v1960 = vadd.f32 %v1902, %v1929
  %v1961 = vadd.f32 %v1903, %v1931
  %v1962 = vadd.f32 %v1904, %v1934
  %v1963 = vadd.f32 %v1905, %v1936
  %v1964 = vadd.f32 %v1906, %v1939
  %v1965 = vadd.f32 %v1907, %v1941
  %v1966 = vadd.f32 %v1908, %v1944
  %v1967 = vadd.f32 %v1909, %v1946
  %v1968 = vadd.f32 %v1910, %v1949
  %v1969 = vadd.f32 %v1911, %v1951
  %v1970 = vadd.f32 %v1912, %v1954
  %v1971 = vadd.f32 %v1913, %v1956
  %1972 = vmatpush.bf16.msra.mxu0 0
  %1973 = vmatpush.bf16.msra.mxu0 0
  %1974 = vmatpush.bf16.msra.mxu0 %v1342
  %1975 = vmatpush.bf16.msra.mxu0 %v1341
  %1976 = vmatpush.bf16.msra.mxu0 %v1340
  %1977 = vmatpush.bf16.msra.mxu0 %v1339
  %1978 = vmatpush.bf16.msra.mxu0 %v1338
  %1979 = vmatpush.bf16.msra.mxu0 %v1337
  %1980 = vmatmul.bf16.gmra.mxu0 %v1676
  %v1981 = vpop.f32.mrf.mxu0
  %v1982 = vadd.f32 0.0, %v1981
  %v1983 = vpop.f32.mrf.mxu0
  %v1984 = vadd.f32 0.0, %v1983
  %1985 = vmatmul.bf16.gmra.mxu0 %v1679
  %v1986 = vpop.f32.mrf.mxu0
  %v1987 = vadd.f32 0.0, %v1986
  %v1988 = vpop.f32.mrf.mxu0
  %v1989 = vadd.f32 0.0, %v1988
  %1990 = vmatmul.bf16.gmra.mxu0 %v1682
  %v1991 = vpop.f32.mrf.mxu0
  %v1992 = vadd.f32 0.0, %v1991
  %v1993 = vpop.f32.mrf.mxu0
  %v1994 = vadd.f32 0.0, %v1993
  %1995 = vmatmul.bf16.gmra.mxu0 %v1685
  %v1996 = vpop.f32.mrf.mxu0
  %v1997 = vadd.f32 0.0, %v1996
  %v1998 = vpop.f32.mrf.mxu0
  %v1999 = vadd.f32 0.0, %v1998
  %2000 = vmatmul.bf16.gmra.mxu0 %v1688
  %v2001 = vpop.f32.mrf.mxu0
  %v2002 = vadd.f32 0.0, %v2001
  %v2003 = vpop.f32.mrf.mxu0
  %v2004 = vadd.f32 0.0, %v2003
  %2005 = vmatmul.bf16.gmra.mxu0 %v1691
  %v2006 = vpop.f32.mrf.mxu0
  %v2007 = vadd.f32 0.0, %v2006
  %v2008 = vpop.f32.mrf.mxu0
  %v2009 = vadd.f32 0.0, %v2008
  %2010 = vmatmul.bf16.gmra.mxu0 %v1694
  %v2011 = vpop.f32.mrf.mxu0
  %v2012 = vadd.f32 0.0, %v2011
  %v2013 = vpop.f32.mrf.mxu0
  %v2014 = vadd.f32 0.0, %v2013
  %2015 = vdwg.mxu0
  %v2016 = vadd.f32 %v1958, %v1982
  %v2017 = vadd.f32 %v1959, %v1984
  %v2018 = vadd.f32 %v1960, %v1987
  %v2019 = vadd.f32 %v1961, %v1989
  %v2020 = vadd.f32 %v1962, %v1992
  %v2021 = vadd.f32 %v1963, %v1994
  %v2022 = vadd.f32 %v1964, %v1997
  %v2023 = vadd.f32 %v1965, %v1999
  %v2024 = vadd.f32 %v1966, %v2002
  %v2025 = vadd.f32 %v1967, %v2004
  %v2026 = vadd.f32 %v1968, %v2007
  %v2027 = vadd.f32 %v1969, %v2009
  %v2028 = vadd.f32 %v1970, %v2012
  %v2029 = vadd.f32 %v1971, %v2014
  %v2030 = vmax.f32 %v1754, %v2016
  %v2031 = vmax.f32 %v1755, %v2017
  %v2032 = vmax.f32 %v1756, %v2018
  %v2033 = vmax.f32 %v1757, %v2019
  %v2034 = vmax.f32 %v1758, %v2020
  %v2035 = vmax.f32 %v1759, %v2021
  %v2036 = vmax.f32 %v1760, %v2022
  %v2037 = vmax.f32 %v1761, %v2023
  %v2038 = vmax.f32 %v1762, %v2024
  %v2039 = vmax.f32 %v1763, %v2025
  %v2040 = vmax.f32 %v1764, %v2026
  %v2041 = vmax.f32 %v1765, %v2027
  %v2042 = vmax.f32 %v1766, %v2028
  %v2043 = vmax.f32 %v1767, %v2029
  %v2044 = vld [vmem:[%s2] sm:$0x1]
  %v2046 = vperm.slane %v2044, 0
  %v2048 = vadd.f32 %v2030, %v2046
  %v2049 = vadd.f32 %v2031, %v2046
  %v2050 = vadd.f32 %v2032, %v2046
  %v2051 = vadd.f32 %v2033, %v2046
  %v2052 = vadd.f32 %v2034, %v2046
  %v2053 = vadd.f32 %v2035, %v2046
  %v2054 = vadd.f32 %v2036, %v2046
  %v2055 = vadd.f32 %v2037, %v2046
  %v2056 = vadd.f32 %v2038, %v2046
  %v2057 = vadd.f32 %v2039, %v2046
  %v2058 = vadd.f32 %v2040, %v2046
  %v2059 = vadd.f32 %v2041, %v2046
  %v2060 = vadd.f32 %v2042, %v2046
  %v2061 = vadd.f32 %v2043, %v2046
  %v2062 = vmax.f32 %v2048, 0.0
  %v2063 = vmax.f32 %v2049, 0.0
  %v2064 = vmax.f32 %v2050, 0.0
  %v2065 = vmax.f32 %v2051, 0.0
  %v2066 = vmax.f32 %v2052, 0.0
  %v2067 = vmax.f32 %v2053, 0.0
  %v2068 = vmax.f32 %v2054, 0.0
  %v2069 = vmax.f32 %v2055, 0.0
  %v2070 = vmax.f32 %v2056, 0.0
  %v2071 = vmax.f32 %v2057, 0.0
  %v2072 = vmax.f32 %v2058, 0.0
  %v2073 = vmax.f32 %v2059, 0.0
  %v2074 = vmax.f32 %v2060, 0.0
  %v2075 = vmax.f32 %v2061, 0.0
  %v2076 = vpack.c.bf16 %v2062, %v2062
  %v2077 = vpack.c.bf16 %v2063, %v2063
  %v2078 = vpack.c.bf16 %v2064, %v2064
  %v2079 = vpack.c.bf16 %v2065, %v2065
  %v2080 = vpack.c.bf16 %v2066, %v2066
  %v2081 = vpack.c.bf16 %v2067, %v2067
  %v2082 = vpack.c.bf16 %v2068, %v2068
  %v2083 = vpack.c.bf16 %v2069, %v2069
  %v2084 = vpack.c.bf16 %v2070, %v2070
  %v2085 = vpack.c.bf16 %v2071, %v2071
  %v2086 = vpack.c.bf16 %v2072, %v2072
  %v2087 = vpack.c.bf16 %v2073, %v2073
  %v2088 = vpack.c.bf16 %v2074, %v2074
  %v2089 = vpack.c.bf16 %v2075, %v2075
  %2090 = vmatpush.bf16.msra.mxu0 0
  %2091 = vmatpush.bf16.msra.mxu0 0
  %2092 = vmatpush.bf16.msra.mxu0 %v157
  %2093 = vmatpush.bf16.msra.mxu0 %v156
  %2094 = vmatpush.bf16.msra.mxu0 %v155
  %2095 = vmatpush.bf16.msra.mxu0 %v154
  %2096 = vmatpush.bf16.msra.mxu0 %v153
  %2097 = vmatpush.bf16.msra.mxu0 %v152
  %2098 = vmatmul.bf16.gmra.mxu0 %v644
  %v2099 = vpop.f32.mrf.mxu0
  %v2100 = vadd.f32 0.0, %v2099
  %v2101 = vpop.f32.mrf.mxu0
  %v2102 = vadd.f32 0.0, %v2101
  %2103 = vmatmul.bf16.gmra.mxu0 %v647
  %v2104 = vpop.f32.mrf.mxu0
  %v2105 = vadd.f32 0.0, %v2104
  %v2106 = vpop.f32.mrf.mxu0
  %v2107 = vadd.f32 0.0, %v2106
  %2108 = vmatmul.bf16.gmra.mxu0 %v650
  %v2109 = vpop.f32.mrf.mxu0
  %v2110 = vadd.f32 0.0, %v2109
  %v2111 = vpop.f32.mrf.mxu0
  %v2112 = vadd.f32 0.0, %v2111
  %2113 = vmatmul.bf16.gmra.mxu0 %v653
  %v2114 = vpop.f32.mrf.mxu0
  %v2115 = vadd.f32 0.0, %v2114
  %v2116 = vpop.f32.mrf.mxu0
  %v2117 = vadd.f32 0.0, %v2116
  %2118 = vmatmul.bf16.gmra.mxu0 %v656
  %v2119 = vpop.f32.mrf.mxu0
  %v2120 = vadd.f32 0.0, %v2119
  %v2121 = vpop.f32.mrf.mxu0
  %v2122 = vadd.f32 0.0, %v2121
  %2123 = vmatmul.bf16.gmra.mxu0 %v659
  %v2124 = vpop.f32.mrf.mxu0
  %v2125 = vadd.f32 0.0, %v2124
  %v2126 = vpop.f32.mrf.mxu0
  %v2127 = vadd.f32 0.0, %v2126
  %2128 = vmatmul.bf16.gmra.mxu0 %v662
  %v2129 = vpop.f32.mrf.mxu0
  %v2130 = vadd.f32 0.0, %v2129
  %v2131 = vpop.f32.mrf.mxu0
  %v2132 = vadd.f32 0.0, %v2131
  %2133 = vdwg.mxu0
  %2134 = vmatpush.bf16.msra.mxu0 0
  %2135 = vmatpush.bf16.msra.mxu0 0
  %2136 = vmatpush.bf16.msra.mxu0 %v294
  %2137 = vmatpush.bf16.msra.mxu0 %v293
  %2138 = vmatpush.bf16.msra.mxu0 %v292
  %2139 = vmatpush.bf16.msra.mxu0 %v291
  %2140 = vmatpush.bf16.msra.mxu0 %v290
  %2141 = vmatpush.bf16.msra.mxu0 %v289
  %2142 = vmatmul.bf16.gmra.mxu0 %v466
  %v2143 = vpop.f32.mrf.mxu0
  %v2144 = vadd.f32 %v2100, %v2143
  %v2145 = vpop.f32.mrf.mxu0
  %v2146 = vadd.f32 %v2102, %v2145
  %2147 = vmatmul.bf16.gmra.mxu0 %v469
  %v2148 = vpop.f32.mrf.mxu0
  %v2149 = vadd.f32 %v2105, %v2148
  %v2150 = vpop.f32.mrf.mxu0
  %v2151 = vadd.f32 %v2107, %v2150
  %2152 = vmatmul.bf16.gmra.mxu0 %v472
  %v2153 = vpop.f32.mrf.mxu0
  %v2154 = vadd.f32 %v2110, %v2153
  %v2155 = vpop.f32.mrf.mxu0
  %v2156 = vadd.f32 %v2112, %v2155
  %2157 = vmatmul.bf16.gmra.mxu0 %v475
  %v2158 = vpop.f32.mrf.mxu0
  %v2159 = vadd.f32 %v2115, %v2158
  %v2160 = vpop.f32.mrf.mxu0
  %v2161 = vadd.f32 %v2117, %v2160
  %2162 = vmatmul.bf16.gmra.mxu0 %v478
  %v2163 = vpop.f32.mrf.mxu0
  %v2164 = vadd.f32 %v2120, %v2163
  %v2165 = vpop.f32.mrf.mxu0
  %v2166 = vadd.f32 %v2122, %v2165
  %2167 = vmatmul.bf16.gmra.mxu0 %v481
  %v2168 = vpop.f32.mrf.mxu0
  %v2169 = vadd.f32 %v2125, %v2168
  %v2170 = vpop.f32.mrf.mxu0
  %v2171 = vadd.f32 %v2127, %v2170
  %2172 = vmatmul.bf16.gmra.mxu0 %v484
  %v2173 = vpop.f32.mrf.mxu0
  %v2174 = vadd.f32 %v2130, %v2173
  %v2175 = vpop.f32.mrf.mxu0
  %v2176 = vadd.f32 %v2132, %v2175
  %2177 = vdwg.mxu0
  %2178 = vmatpush.bf16.msra.mxu0 0
  %2179 = vmatpush.bf16.msra.mxu0 0
  %2180 = vmatpush.bf16.msra.mxu0 %v458
  %2181 = vmatpush.bf16.msra.mxu0 %v457
  %2182 = vmatpush.bf16.msra.mxu0 %v456
  %2183 = vmatpush.bf16.msra.mxu0 %v455
  %2184 = vmatpush.bf16.msra.mxu0 %v454
  %2185 = vmatpush.bf16.msra.mxu0 %v453
  %2186 = vmatmul.bf16.gmra.mxu0 %v822
  %v2187 = vpop.f32.mrf.mxu0
  %v2188 = vadd.f32 0.0, %v2187
  %v2189 = vpop.f32.mrf.mxu0
  %v2190 = vadd.f32 0.0, %v2189
  %2191 = vmatmul.bf16.gmra.mxu0 %v825
  %v2192 = vpop.f32.mrf.mxu0
  %v2193 = vadd.f32 0.0, %v2192
  %v2194 = vpop.f32.mrf.mxu0
  %v2195 = vadd.f32 0.0, %v2194
  %2196 = vmatmul.bf16.gmra.mxu0 %v828
  %v2197 = vpop.f32.mrf.mxu0
  %v2198 = vadd.f32 0.0, %v2197
  %v2199 = vpop.f32.mrf.mxu0
  %v2200 = vadd.f32 0.0, %v2199
  %2201 = vmatmul.bf16.gmra.mxu0 %v831
  %v2202 = vpop.f32.mrf.mxu0
  %v2203 = vadd.f32 0.0, %v2202
  %v2204 = vpop.f32.mrf.mxu0
  %v2205 = vadd.f32 0.0, %v2204
  %2206 = vmatmul.bf16.gmra.mxu0 %v834
  %v2207 = vpop.f32.mrf.mxu0
  %v2208 = vadd.f32 0.0, %v2207
  %v2209 = vpop.f32.mrf.mxu0
  %v2210 = vadd.f32 0.0, %v2209
  %2211 = vmatmul.bf16.gmra.mxu0 %v837
  %v2212 = vpop.f32.mrf.mxu0
  %v2213 = vadd.f32 0.0, %v2212
  %v2214 = vpop.f32.mrf.mxu0
  %v2215 = vadd.f32 0.0, %v2214
  %2216 = vmatmul.bf16.gmra.mxu0 %v840
  %v2217 = vpop.f32.mrf.mxu0
  %v2218 = vadd.f32 0.0, %v2217
  %v2219 = vpop.f32.mrf.mxu0
  %v2220 = vadd.f32 0.0, %v2219
  %2221 = vdwg.mxu0
  %v2222 = vadd.f32 %v2144, %v2188
  %v2223 = vadd.f32 %v2146, %v2190
  %v2224 = vadd.f32 %v2149, %v2193
  %v2225 = vadd.f32 %v2151, %v2195
  %v2226 = vadd.f32 %v2154, %v2198
  %v2227 = vadd.f32 %v2156, %v2200
  %v2228 = vadd.f32 %v2159, %v2203
  %v2229 = vadd.f32 %v2161, %v2205
  %v2230 = vadd.f32 %v2164, %v2208
  %v2231 = vadd.f32 %v2166, %v2210
  %v2232 = vadd.f32 %v2169, %v2213
  %v2233 = vadd.f32 %v2171, %v2215
  %v2234 = vadd.f32 %v2174, %v2218
  %v2235 = vadd.f32 %v2176, %v2220
  %2236 = vmatpush.bf16.msra.mxu0 0
  %2237 = vmatpush.bf16.msra.mxu0 0
  %2238 = vmatpush.bf16.msra.mxu0 %v636
  %2239 = vmatpush.bf16.msra.mxu0 %v635
  %2240 = vmatpush.bf16.msra.mxu0 %v634
  %2241 = vmatpush.bf16.msra.mxu0 %v633
  %2242 = vmatpush.bf16.msra.mxu0 %v632
  %2243 = vmatpush.bf16.msra.mxu0 %v631
  %2244 = vmatmul.bf16.gmra.mxu0 %v1676
  %v2245 = vpop.f32.mrf.mxu0
  %v2246 = vadd.f32 0.0, %v2245
  %v2247 = vpop.f32.mrf.mxu0
  %v2248 = vadd.f32 0.0, %v2247
  %2249 = vmatmul.bf16.gmra.mxu0 %v1679
  %v2250 = vpop.f32.mrf.mxu0
  %v2251 = vadd.f32 0.0, %v2250
  %v2252 = vpop.f32.mrf.mxu0
  %v2253 = vadd.f32 0.0, %v2252
  %2254 = vmatmul.bf16.gmra.mxu0 %v1682
  %v2255 = vpop.f32.mrf.mxu0
  %v2256 = vadd.f32 0.0, %v2255
  %v2257 = vpop.f32.mrf.mxu0
  %v2258 = vadd.f32 0.0, %v2257
  %2259 = vmatmul.bf16.gmra.mxu0 %v1685
  %v2260 = vpop.f32.mrf.mxu0
  %v2261 = vadd.f32 0.0, %v2260
  %v2262 = vpop.f32.mrf.mxu0
  %v2263 = vadd.f32 0.0, %v2262
  %2264 = vmatmul.bf16.gmra.mxu0 %v1688
  %v2265 = vpop.f32.mrf.mxu0
  %v2266 = vadd.f32 0.0, %v2265
  %v2267 = vpop.f32.mrf.mxu0
  %v2268 = vadd.f32 0.0, %v2267
  %2269 = vmatmul.bf16.gmra.mxu0 %v1691
  %v2270 = vpop.f32.mrf.mxu0
  %v2271 = vadd.f32 0.0, %v2270
  %v2272 = vpop.f32.mrf.mxu0
  %v2273 = vadd.f32 0.0, %v2272
  %2274 = vmatmul.bf16.gmra.mxu0 %v1694
  %v2275 = vpop.f32.mrf.mxu0
  %v2276 = vadd.f32 0.0, %v2275
  %v2277 = vpop.f32.mrf.mxu0
  %v2278 = vadd.f32 0.0, %v2277
  %2279 = vdwg.mxu0
  %v2280 = vadd.f32 %v2222, %v2246
  %v2281 = vadd.f32 %v2223, %v2248
  %v2282 = vadd.f32 %v2224, %v2251
  %v2283 = vadd.f32 %v2225, %v2253
  %v2284 = vadd.f32 %v2226, %v2256
  %v2285 = vadd.f32 %v2227, %v2258
  %v2286 = vadd.f32 %v2228, %v2261
  %v2287 = vadd.f32 %v2229, %v2263
  %v2288 = vadd.f32 %v2230, %v2266
  %v2289 = vadd.f32 %v2231, %v2268
  %v2290 = vadd.f32 %v2232, %v2271
  %v2291 = vadd.f32 %v2233, %v2273
  %v2292 = vadd.f32 %v2234, %v2276
  %v2293 = vadd.f32 %v2235, %v2278
  %s2294 = scalar_lea.vmem %s0, 136
  %v2295 = vld [vmem:[%s2294] sm:$0xf]
  %v2296 = vld [vmem:[%s2294 + $0x4] sm:$0xf]
  %v2297 = vld [vmem:[%s2294 + $0x8] sm:$0xf]
  %v2298 = vld [vmem:[%s2294 + $0xc] sm:$0xf]
  %v2299 = vld [vmem:[%s2294 + $0x10] sm:$0xf]
  %v2300 = vld [vmem:[%s2294 + $0x14] sm:$0xf]
  %v2301 = vld [vmem:[%s2294 + $0x18] sm:$0xf]
  %v2302 = vld [vmem:[%s2294 + $0x1c] sm:$0xf]
  %v2303 = vld [vmem:[%s2294 + $0x20] sm:$0xf]
  %v2304 = vld [vmem:[%s2294 + $0x24] sm:$0xf]
  %v2305 = vld [vmem:[%s2294 + $0x28] sm:$0xf]
  %v2306 = vld [vmem:[%s2294 + $0x2c] sm:$0xf]
  %v2307 = vld [vmem:[%s2294 + $0x30] sm:$0xf]
  %v2308 = vld [vmem:[%s2294 + $0x34] sm:$0xf]
  %v2323 = vunpack.c.l.b16 %v2295
  %v2324 = vunpack.c.l.b16 %v2296
  %v2325 = vunpack.c.l.b16 %v2297
  %v2326 = vunpack.c.l.b16 %v2298
  %v2327 = vunpack.c.l.b16 %v2299
  %v2328 = vunpack.c.l.b16 %v2300
  %v2329 = vunpack.c.l.b16 %v2301
  %v2330 = vunpack.c.l.b16 %v2302
  %v2331 = vunpack.c.l.b16 %v2303
  %v2332 = vunpack.c.l.b16 %v2304
  %v2333 = vunpack.c.l.b16 %v2305
  %v2334 = vunpack.c.l.b16 %v2306
  %v2335 = vunpack.c.l.b16 %v2307
  %v2336 = vunpack.c.l.b16 %v2308
  %v2337 = vpack.c.b16 %v2324, %v2323
  %v2338 = vpack.c.b16 %v2326, %v2325
  %v2339 = vpack.c.b16 %v2328, %v2327
  %v2340 = vpack.c.b16 %v2330, %v2329
  %v2341 = vpack.c.b16 %v2332, %v2331
  %v2342 = vpack.c.b16 %v2334, %v2333
  %v2343 = vpack.c.b16 %v2336, %v2335
  %v2345 = vsel %vm164, %v2337, 0
  %v2348 = vsel %vm164, %v2338, 0
  %v2351 = vsel %vm164, %v2339, 0
  %v2354 = vsel %vm164, %v2340, 0
  %v2357 = vsel %vm164, %v2341, 0
  %v2360 = vsel %vm164, %v2342, 0
  %v2363 = vsel %vm164, %v2343, 0
  %2365 = vmatpush.bf16.msra.mxu0 0
  %2366 = vmatpush.bf16.msra.mxu0 0
  %2367 = vmatpush.bf16.msra.mxu0 %v814
  %2368 = vmatpush.bf16.msra.mxu0 %v813
  %2369 = vmatpush.bf16.msra.mxu0 %v812
  %2370 = vmatpush.bf16.msra.mxu0 %v811
  %2371 = vmatpush.bf16.msra.mxu0 %v810
  %2372 = vmatpush.bf16.msra.mxu0 %v809
  %2373 = vmatmul.bf16.gmra.mxu0 %v2345
  %v2374 = vpop.f32.mrf.mxu0
  %v2375 = vadd.f32 0.0, %v2374
  %v2376 = vpop.f32.mrf.mxu0
  %v2377 = vadd.f32 0.0, %v2376
  %2378 = vmatmul.bf16.gmra.mxu0 %v2348
  %v2379 = vpop.f32.mrf.mxu0
  %v2380 = vadd.f32 0.0, %v2379
  %v2381 = vpop.f32.mrf.mxu0
  %v2382 = vadd.f32 0.0, %v2381
  %2383 = vmatmul.bf16.gmra.mxu0 %v2351
  %v2384 = vpop.f32.mrf.mxu0
  %v2385 = vadd.f32 0.0, %v2384
  %v2386 = vpop.f32.mrf.mxu0
  %v2387 = vadd.f32 0.0, %v2386
  %2388 = vmatmul.bf16.gmra.mxu0 %v2354
  %v2389 = vpop.f32.mrf.mxu0
  %v2390 = vadd.f32 0.0, %v2389
  %v2391 = vpop.f32.mrf.mxu0
  %v2392 = vadd.f32 0.0, %v2391
  %2393 = vmatmul.bf16.gmra.mxu0 %v2357
  %v2394 = vpop.f32.mrf.mxu0
  %v2395 = vadd.f32 0.0, %v2394
  %v2396 = vpop.f32.mrf.mxu0
  %v2397 = vadd.f32 0.0, %v2396
  %2398 = vmatmul.bf16.gmra.mxu0 %v2360
  %v2399 = vpop.f32.mrf.mxu0
  %v2400 = vadd.f32 0.0, %v2399
  %v2401 = vpop.f32.mrf.mxu0
  %v2402 = vadd.f32 0.0, %v2401
  %2403 = vmatmul.bf16.gmra.mxu0 %v2363
  %v2404 = vpop.f32.mrf.mxu0
  %v2405 = vadd.f32 0.0, %v2404
  %v2406 = vpop.f32.mrf.mxu0
  %v2407 = vadd.f32 0.0, %v2406
  %2408 = vdwg.mxu0
  %v2409 = vadd.f32 %v2280, %v2375
  %v2410 = vadd.f32 %v2281, %v2377
  %v2411 = vadd.f32 %v2282, %v2380
  %v2412 = vadd.f32 %v2283, %v2382
  %v2413 = vadd.f32 %v2284, %v2385
  %v2414 = vadd.f32 %v2285, %v2387
  %v2415 = vadd.f32 %v2286, %v2390
  %v2416 = vadd.f32 %v2287, %v2392
  %v2417 = vadd.f32 %v2288, %v2395
  %v2418 = vadd.f32 %v2289, %v2397
  %v2419 = vadd.f32 %v2290, %v2400
  %v2420 = vadd.f32 %v2291, %v2402
  %v2421 = vadd.f32 %v2292, %v2405
  %v2422 = vadd.f32 %v2293, %v2407
  %2423 = vmatpush.bf16.msra.mxu0 0
  %2424 = vmatpush.bf16.msra.mxu0 0
  %2425 = vmatpush.bf16.msra.mxu0 %v955
  %2426 = vmatpush.bf16.msra.mxu0 %v954
  %2427 = vmatpush.bf16.msra.mxu0 %v953
  %2428 = vmatpush.bf16.msra.mxu0 %v952
  %2429 = vmatpush.bf16.msra.mxu0 %v951
  %2430 = vmatpush.bf16.msra.mxu0 %v950
  %2431 = vmatmul.bf16.gmra.mxu0 %v644
  %v2432 = vpop.f32.mrf.mxu0
  %v2433 = vadd.f32 0.0, %v2432
  %v2434 = vpop.f32.mrf.mxu0
  %v2435 = vadd.f32 0.0, %v2434
  %2436 = vmatmul.bf16.gmra.mxu0 %v647
  %v2437 = vpop.f32.mrf.mxu0
  %v2438 = vadd.f32 0.0, %v2437
  %v2439 = vpop.f32.mrf.mxu0
  %v2440 = vadd.f32 0.0, %v2439
  %2441 = vmatmul.bf16.gmra.mxu0 %v650
  %v2442 = vpop.f32.mrf.mxu0
  %v2443 = vadd.f32 0.0, %v2442
  %v2444 = vpop.f32.mrf.mxu0
  %v2445 = vadd.f32 0.0, %v2444
  %2446 = vmatmul.bf16.gmra.mxu0 %v653
  %v2447 = vpop.f32.mrf.mxu0
  %v2448 = vadd.f32 0.0, %v2447
  %v2449 = vpop.f32.mrf.mxu0
  %v2450 = vadd.f32 0.0, %v2449
  %2451 = vmatmul.bf16.gmra.mxu0 %v656
  %v2452 = vpop.f32.mrf.mxu0
  %v2453 = vadd.f32 0.0, %v2452
  %v2454 = vpop.f32.mrf.mxu0
  %v2455 = vadd.f32 0.0, %v2454
  %2456 = vmatmul.bf16.gmra.mxu0 %v659
  %v2457 = vpop.f32.mrf.mxu0
  %v2458 = vadd.f32 0.0, %v2457
  %v2459 = vpop.f32.mrf.mxu0
  %v2460 = vadd.f32 0.0, %v2459
  %2461 = vmatmul.bf16.gmra.mxu0 %v662
  %v2462 = vpop.f32.mrf.mxu0
  %v2463 = vadd.f32 0.0, %v2462
  %v2464 = vpop.f32.mrf.mxu0
  %v2465 = vadd.f32 0.0, %v2464
  %2466 = vdwg.mxu0
  %2467 = vmatpush.bf16.msra.mxu0 0
  %2468 = vmatpush.bf16.msra.mxu0 0
  %2469 = vmatpush.bf16.msra.mxu0 %v1035
  %2470 = vmatpush.bf16.msra.mxu0 %v1034
  %2471 = vmatpush.bf16.msra.mxu0 %v1033
  %2472 = vmatpush.bf16.msra.mxu0 %v1032
  %2473 = vmatpush.bf16.msra.mxu0 %v1031
  %2474 = vmatpush.bf16.msra.mxu0 %v1030
  %2475 = vmatmul.bf16.gmra.mxu0 %v466
  %v2476 = vpop.f32.mrf.mxu0
  %v2477 = vadd.f32 %v2433, %v2476
  %v2478 = vpop.f32.mrf.mxu0
  %v2479 = vadd.f32 %v2435, %v2478
  %2480 = vmatmul.bf16.gmra.mxu0 %v469
  %v2481 = vpop.f32.mrf.mxu0
  %v2482 = vadd.f32 %v2438, %v2481
  %v2483 = vpop.f32.mrf.mxu0
  %v2484 = vadd.f32 %v2440, %v2483
  %2485 = vmatmul.bf16.gmra.mxu0 %v472
  %v2486 = vpop.f32.mrf.mxu0
  %v2487 = vadd.f32 %v2443, %v2486
  %v2488 = vpop.f32.mrf.mxu0
  %v2489 = vadd.f32 %v2445, %v2488
  %2490 = vmatmul.bf16.gmra.mxu0 %v475
  %v2491 = vpop.f32.mrf.mxu0
  %v2492 = vadd.f32 %v2448, %v2491
  %v2493 = vpop.f32.mrf.mxu0
  %v2494 = vadd.f32 %v2450, %v2493
  %2495 = vmatmul.bf16.gmra.mxu0 %v478
  %v2496 = vpop.f32.mrf.mxu0
  %v2497 = vadd.f32 %v2453, %v2496
  %v2498 = vpop.f32.mrf.mxu0
  %v2499 = vadd.f32 %v2455, %v2498
  %2500 = vmatmul.bf16.gmra.mxu0 %v481
  %v2501 = vpop.f32.mrf.mxu0
  %v2502 = vadd.f32 %v2458, %v2501
  %v2503 = vpop.f32.mrf.mxu0
  %v2504 = vadd.f32 %v2460, %v2503
  %2505 = vmatmul.bf16.gmra.mxu0 %v484
  %v2506 = vpop.f32.mrf.mxu0
  %v2507 = vadd.f32 %v2463, %v2506
  %v2508 = vpop.f32.mrf.mxu0
  %v2509 = vadd.f32 %v2465, %v2508
  %2510 = vdwg.mxu0
  %2511 = vmatpush.bf16.msra.mxu0 0
  %2512 = vmatpush.bf16.msra.mxu0 0
  %2513 = vmatpush.bf16.msra.mxu0 %v1128
  %2514 = vmatpush.bf16.msra.mxu0 %v1127
  %2515 = vmatpush.bf16.msra.mxu0 %v1126
  %2516 = vmatpush.bf16.msra.mxu0 %v1125
  %2517 = vmatpush.bf16.msra.mxu0 %v1124
  %2518 = vmatpush.bf16.msra.mxu0 %v1123
  %2519 = vmatmul.bf16.gmra.mxu0 %v822
  %v2520 = vpop.f32.mrf.mxu0
  %v2521 = vadd.f32 0.0, %v2520
  %v2522 = vpop.f32.mrf.mxu0
  %v2523 = vadd.f32 0.0, %v2522
  %2524 = vmatmul.bf16.gmra.mxu0 %v825
  %v2525 = vpop.f32.mrf.mxu0
  %v2526 = vadd.f32 0.0, %v2525
  %v2527 = vpop.f32.mrf.mxu0
  %v2528 = vadd.f32 0.0, %v2527
  %2529 = vmatmul.bf16.gmra.mxu0 %v828
  %v2530 = vpop.f32.mrf.mxu0
  %v2531 = vadd.f32 0.0, %v2530
  %v2532 = vpop.f32.mrf.mxu0
  %v2533 = vadd.f32 0.0, %v2532
  %2534 = vmatmul.bf16.gmra.mxu0 %v831
  %v2535 = vpop.f32.mrf.mxu0
  %v2536 = vadd.f32 0.0, %v2535
  %v2537 = vpop.f32.mrf.mxu0
  %v2538 = vadd.f32 0.0, %v2537
  %2539 = vmatmul.bf16.gmra.mxu0 %v834
  %v2540 = vpop.f32.mrf.mxu0
  %v2541 = vadd.f32 0.0, %v2540
  %v2542 = vpop.f32.mrf.mxu0
  %v2543 = vadd.f32 0.0, %v2542
  %2544 = vmatmul.bf16.gmra.mxu0 %v837
  %v2545 = vpop.f32.mrf.mxu0
  %v2546 = vadd.f32 0.0, %v2545
  %v2547 = vpop.f32.mrf.mxu0
  %v2548 = vadd.f32 0.0, %v2547
  %2549 = vmatmul.bf16.gmra.mxu0 %v840
  %v2550 = vpop.f32.mrf.mxu0
  %v2551 = vadd.f32 0.0, %v2550
  %v2552 = vpop.f32.mrf.mxu0
  %v2553 = vadd.f32 0.0, %v2552
  %2554 = vdwg.mxu0
  %v2555 = vadd.f32 %v2477, %v2521
  %v2556 = vadd.f32 %v2479, %v2523
  %v2557 = vadd.f32 %v2482, %v2526
  %v2558 = vadd.f32 %v2484, %v2528
  %v2559 = vadd.f32 %v2487, %v2531
  %v2560 = vadd.f32 %v2489, %v2533
  %v2561 = vadd.f32 %v2492, %v2536
  %v2562 = vadd.f32 %v2494, %v2538
  %v2563 = vadd.f32 %v2497, %v2541
  %v2564 = vadd.f32 %v2499, %v2543
  %v2565 = vadd.f32 %v2502, %v2546
  %v2566 = vadd.f32 %v2504, %v2548
  %v2567 = vadd.f32 %v2507, %v2551
  %v2568 = vadd.f32 %v2509, %v2553
  %2569 = vmatpush.bf16.msra.mxu0 0
  %2570 = vmatpush.bf16.msra.mxu0 0
  %2571 = vmatpush.bf16.msra.mxu0 %v1235
  %2572 = vmatpush.bf16.msra.mxu0 %v1234
  %2573 = vmatpush.bf16.msra.mxu0 %v1233
  %2574 = vmatpush.bf16.msra.mxu0 %v1232
  %2575 = vmatpush.bf16.msra.mxu0 %v1231
  %2576 = vmatpush.bf16.msra.mxu0 %v1230
  %2577 = vmatmul.bf16.gmra.mxu0 %v1676
  %v2578 = vpop.f32.mrf.mxu0
  %v2579 = vadd.f32 0.0, %v2578
  %v2580 = vpop.f32.mrf.mxu0
  %v2581 = vadd.f32 0.0, %v2580
  %2582 = vmatmul.bf16.gmra.mxu0 %v1679
  %v2583 = vpop.f32.mrf.mxu0
  %v2584 = vadd.f32 0.0, %v2583
  %v2585 = vpop.f32.mrf.mxu0
  %v2586 = vadd.f32 0.0, %v2585
  %2587 = vmatmul.bf16.gmra.mxu0 %v1682
  %v2588 = vpop.f32.mrf.mxu0
  %v2589 = vadd.f32 0.0, %v2588
  %v2590 = vpop.f32.mrf.mxu0
  %v2591 = vadd.f32 0.0, %v2590
  %2592 = vmatmul.bf16.gmra.mxu0 %v1685
  %v2593 = vpop.f32.mrf.mxu0
  %v2594 = vadd.f32 0.0, %v2593
  %v2595 = vpop.f32.mrf.mxu0
  %v2596 = vadd.f32 0.0, %v2595
  %2597 = vmatmul.bf16.gmra.mxu0 %v1688
  %v2598 = vpop.f32.mrf.mxu0
  %v2599 = vadd.f32 0.0, %v2598
  %v2600 = vpop.f32.mrf.mxu0
  %v2601 = vadd.f32 0.0, %v2600
  %2602 = vmatmul.bf16.gmra.mxu0 %v1691
  %v2603 = vpop.f32.mrf.mxu0
  %v2604 = vadd.f32 0.0, %v2603
  %v2605 = vpop.f32.mrf.mxu0
  %v2606 = vadd.f32 0.0, %v2605
  %2607 = vmatmul.bf16.gmra.mxu0 %v1694
  %v2608 = vpop.f32.mrf.mxu0
  %v2609 = vadd.f32 0.0, %v2608
  %v2610 = vpop.f32.mrf.mxu0
  %v2611 = vadd.f32 0.0, %v2610
  %2612 = vdwg.mxu0
  %v2613 = vadd.f32 %v2555, %v2579
  %v2614 = vadd.f32 %v2556, %v2581
  %v2615 = vadd.f32 %v2557, %v2584
  %v2616 = vadd.f32 %v2558, %v2586
  %v2617 = vadd.f32 %v2559, %v2589
  %v2618 = vadd.f32 %v2560, %v2591
  %v2619 = vadd.f32 %v2561, %v2594
  %v2620 = vadd.f32 %v2562, %v2596
  %v2621 = vadd.f32 %v2563, %v2599
  %v2622 = vadd.f32 %v2564, %v2601
  %v2623 = vadd.f32 %v2565, %v2604
  %v2624 = vadd.f32 %v2566, %v2606
  %v2625 = vadd.f32 %v2567, %v2609
  %v2626 = vadd.f32 %v2568, %v2611
  %2627 = vmatpush.bf16.msra.mxu0 0
  %2628 = vmatpush.bf16.msra.mxu0 0
  %2629 = vmatpush.bf16.msra.mxu0 %v1342
  %2630 = vmatpush.bf16.msra.mxu0 %v1341
  %2631 = vmatpush.bf16.msra.mxu0 %v1340
  %2632 = vmatpush.bf16.msra.mxu0 %v1339
  %2633 = vmatpush.bf16.msra.mxu0 %v1338
  %2634 = vmatpush.bf16.msra.mxu0 %v1337
  %2635 = vmatmul.bf16.gmra.mxu0 %v2345
  %v2636 = vpop.f32.mrf.mxu0
  %v2637 = vadd.f32 0.0, %v2636
  %v2638 = vpop.f32.mrf.mxu0
  %v2639 = vadd.f32 0.0, %v2638
  %2640 = vmatmul.bf16.gmra.mxu0 %v2348
  %v2641 = vpop.f32.mrf.mxu0
  %v2642 = vadd.f32 0.0, %v2641
  %v2643 = vpop.f32.mrf.mxu0
  %v2644 = vadd.f32 0.0, %v2643
  %2645 = vmatmul.bf16.gmra.mxu0 %v2351
  %v2646 = vpop.f32.mrf.mxu0
  %v2647 = vadd.f32 0.0, %v2646
  %v2648 = vpop.f32.mrf.mxu0
  %v2649 = vadd.f32 0.0, %v2648
  %2650 = vmatmul.bf16.gmra.mxu0 %v2354
  %v2651 = vpop.f32.mrf.mxu0
  %v2652 = vadd.f32 0.0, %v2651
  %v2653 = vpop.f32.mrf.mxu0
  %v2654 = vadd.f32 0.0, %v2653
  %2655 = vmatmul.bf16.gmra.mxu0 %v2357
  %v2656 = vpop.f32.mrf.mxu0
  %v2657 = vadd.f32 0.0, %v2656
  %v2658 = vpop.f32.mrf.mxu0
  %v2659 = vadd.f32 0.0, %v2658
  %2660 = vmatmul.bf16.gmra.mxu0 %v2360
  %v2661 = vpop.f32.mrf.mxu0
  %v2662 = vadd.f32 0.0, %v2661
  %v2663 = vpop.f32.mrf.mxu0
  %v2664 = vadd.f32 0.0, %v2663
  %2665 = vmatmul.bf16.gmra.mxu0 %v2363
  %v2666 = vpop.f32.mrf.mxu0
  %v2667 = vadd.f32 0.0, %v2666
  %v2668 = vpop.f32.mrf.mxu0
  %v2669 = vadd.f32 0.0, %v2668
  %2670 = vdwg.mxu0
  %v2671 = vadd.f32 %v2613, %v2637
  %v2672 = vadd.f32 %v2614, %v2639
  %v2673 = vadd.f32 %v2615, %v2642
  %v2674 = vadd.f32 %v2616, %v2644
  %v2675 = vadd.f32 %v2617, %v2647
  %v2676 = vadd.f32 %v2618, %v2649
  %v2677 = vadd.f32 %v2619, %v2652
  %v2678 = vadd.f32 %v2620, %v2654
  %v2679 = vadd.f32 %v2621, %v2657
  %v2680 = vadd.f32 %v2622, %v2659
  %v2681 = vadd.f32 %v2623, %v2662
  %v2682 = vadd.f32 %v2624, %v2664
  %v2683 = vadd.f32 %v2625, %v2667
  %v2684 = vadd.f32 %v2626, %v2669
  %v2685 = vmax.f32 %v2409, %v2671
  %v2686 = vmax.f32 %v2410, %v2672
  %v2687 = vmax.f32 %v2411, %v2673
  %v2688 = vmax.f32 %v2412, %v2674
  %v2689 = vmax.f32 %v2413, %v2675
  %v2690 = vmax.f32 %v2414, %v2676
  %v2691 = vmax.f32 %v2415, %v2677
  %v2692 = vmax.f32 %v2416, %v2678
  %v2693 = vmax.f32 %v2417, %v2679
  %v2694 = vmax.f32 %v2418, %v2680
  %v2695 = vmax.f32 %v2419, %v2681
  %v2696 = vmax.f32 %v2420, %v2682
  %v2697 = vmax.f32 %v2421, %v2683
  %v2698 = vmax.f32 %v2422, %v2684
  %2699 = vmatpush.bf16.msra.mxu0 0
  %2700 = vmatpush.bf16.msra.mxu0 0
  %2701 = vmatpush.bf16.msra.mxu0 %v157
  %2702 = vmatpush.bf16.msra.mxu0 %v156
  %2703 = vmatpush.bf16.msra.mxu0 %v155
  %2704 = vmatpush.bf16.msra.mxu0 %v154
  %2705 = vmatpush.bf16.msra.mxu0 %v153
  %2706 = vmatpush.bf16.msra.mxu0 %v152
  %2707 = vmatmul.bf16.gmra.mxu0 %v822
  %v2708 = vpop.f32.mrf.mxu0
  %v2709 = vadd.f32 0.0, %v2708
  %v2710 = vpop.f32.mrf.mxu0
  %v2711 = vadd.f32 0.0, %v2710
  %2712 = vmatmul.bf16.gmra.mxu0 %v825
  %v2713 = vpop.f32.mrf.mxu0
  %v2714 = vadd.f32 0.0, %v2713
  %v2715 = vpop.f32.mrf.mxu0
  %v2716 = vadd.f32 0.0, %v2715
  %2717 = vmatmul.bf16.gmra.mxu0 %v828
  %v2718 = vpop.f32.mrf.mxu0
  %v2719 = vadd.f32 0.0, %v2718
  %v2720 = vpop.f32.mrf.mxu0
  %v2721 = vadd.f32 0.0, %v2720
  %2722 = vmatmul.bf16.gmra.mxu0 %v831
  %v2723 = vpop.f32.mrf.mxu0
  %v2724 = vadd.f32 0.0, %v2723
  %v2725 = vpop.f32.mrf.mxu0
  %v2726 = vadd.f32 0.0, %v2725
  %2727 = vmatmul.bf16.gmra.mxu0 %v834
  %v2728 = vpop.f32.mrf.mxu0
  %v2729 = vadd.f32 0.0, %v2728
  %v2730 = vpop.f32.mrf.mxu0
  %v2731 = vadd.f32 0.0, %v2730
  %2732 = vmatmul.bf16.gmra.mxu0 %v837
  %v2733 = vpop.f32.mrf.mxu0
  %v2734 = vadd.f32 0.0, %v2733
  %v2735 = vpop.f32.mrf.mxu0
  %v2736 = vadd.f32 0.0, %v2735
  %2737 = vmatmul.bf16.gmra.mxu0 %v840
  %v2738 = vpop.f32.mrf.mxu0
  %v2739 = vadd.f32 0.0, %v2738
  %v2740 = vpop.f32.mrf.mxu0
  %v2741 = vadd.f32 0.0, %v2740
  %2742 = vdwg.mxu0
  %2743 = vmatpush.bf16.msra.mxu0 0
  %2744 = vmatpush.bf16.msra.mxu0 0
  %2745 = vmatpush.bf16.msra.mxu0 %v294
  %2746 = vmatpush.bf16.msra.mxu0 %v293
  %2747 = vmatpush.bf16.msra.mxu0 %v292
  %2748 = vmatpush.bf16.msra.mxu0 %v291
  %2749 = vmatpush.bf16.msra.mxu0 %v290
  %2750 = vmatpush.bf16.msra.mxu0 %v289
  %2751 = vmatmul.bf16.gmra.mxu0 %v644
  %v2752 = vpop.f32.mrf.mxu0
  %v2753 = vadd.f32 %v2709, %v2752
  %v2754 = vpop.f32.mrf.mxu0
  %v2755 = vadd.f32 %v2711, %v2754
  %2756 = vmatmul.bf16.gmra.mxu0 %v647
  %v2757 = vpop.f32.mrf.mxu0
  %v2758 = vadd.f32 %v2714, %v2757
  %v2759 = vpop.f32.mrf.mxu0
  %v2760 = vadd.f32 %v2716, %v2759
  %2761 = vmatmul.bf16.gmra.mxu0 %v650
  %v2762 = vpop.f32.mrf.mxu0
  %v2763 = vadd.f32 %v2719, %v2762
  %v2764 = vpop.f32.mrf.mxu0
  %v2765 = vadd.f32 %v2721, %v2764
  %2766 = vmatmul.bf16.gmra.mxu0 %v653
  %v2767 = vpop.f32.mrf.mxu0
  %v2768 = vadd.f32 %v2724, %v2767
  %v2769 = vpop.f32.mrf.mxu0
  %v2770 = vadd.f32 %v2726, %v2769
  %2771 = vmatmul.bf16.gmra.mxu0 %v656
  %v2772 = vpop.f32.mrf.mxu0
  %v2773 = vadd.f32 %v2729, %v2772
  %v2774 = vpop.f32.mrf.mxu0
  %v2775 = vadd.f32 %v2731, %v2774
  %2776 = vmatmul.bf16.gmra.mxu0 %v659
  %v2777 = vpop.f32.mrf.mxu0
  %v2778 = vadd.f32 %v2734, %v2777
  %v2779 = vpop.f32.mrf.mxu0
  %v2780 = vadd.f32 %v2736, %v2779
  %2781 = vmatmul.bf16.gmra.mxu0 %v662
  %v2782 = vpop.f32.mrf.mxu0
  %v2783 = vadd.f32 %v2739, %v2782
  %v2784 = vpop.f32.mrf.mxu0
  %v2785 = vadd.f32 %v2741, %v2784
  %2786 = vdwg.mxu0
  %2787 = vmatpush.bf16.msra.mxu0 0
  %2788 = vmatpush.bf16.msra.mxu0 0
  %2789 = vmatpush.bf16.msra.mxu0 %v458
  %2790 = vmatpush.bf16.msra.mxu0 %v457
  %2791 = vmatpush.bf16.msra.mxu0 %v456
  %2792 = vmatpush.bf16.msra.mxu0 %v455
  %2793 = vmatpush.bf16.msra.mxu0 %v454
  %2794 = vmatpush.bf16.msra.mxu0 %v453
  %2795 = vmatmul.bf16.gmra.mxu0 %v1676
  %v2796 = vpop.f32.mrf.mxu0
  %v2797 = vadd.f32 0.0, %v2796
  %v2798 = vpop.f32.mrf.mxu0
  %v2799 = vadd.f32 0.0, %v2798
  %2800 = vmatmul.bf16.gmra.mxu0 %v1679
  %v2801 = vpop.f32.mrf.mxu0
  %v2802 = vadd.f32 0.0, %v2801
  %v2803 = vpop.f32.mrf.mxu0
  %v2804 = vadd.f32 0.0, %v2803
  %2805 = vmatmul.bf16.gmra.mxu0 %v1682
  %v2806 = vpop.f32.mrf.mxu0
  %v2807 = vadd.f32 0.0, %v2806
  %v2808 = vpop.f32.mrf.mxu0
  %v2809 = vadd.f32 0.0, %v2808
  %2810 = vmatmul.bf16.gmra.mxu0 %v1685
  %v2811 = vpop.f32.mrf.mxu0
  %v2812 = vadd.f32 0.0, %v2811
  %v2813 = vpop.f32.mrf.mxu0
  %v2814 = vadd.f32 0.0, %v2813
  %2815 = vmatmul.bf16.gmra.mxu0 %v1688
  %v2816 = vpop.f32.mrf.mxu0
  %v2817 = vadd.f32 0.0, %v2816
  %v2818 = vpop.f32.mrf.mxu0
  %v2819 = vadd.f32 0.0, %v2818
  %2820 = vmatmul.bf16.gmra.mxu0 %v1691
  %v2821 = vpop.f32.mrf.mxu0
  %v2822 = vadd.f32 0.0, %v2821
  %v2823 = vpop.f32.mrf.mxu0
  %v2824 = vadd.f32 0.0, %v2823
  %2825 = vmatmul.bf16.gmra.mxu0 %v1694
  %v2826 = vpop.f32.mrf.mxu0
  %v2827 = vadd.f32 0.0, %v2826
  %v2828 = vpop.f32.mrf.mxu0
  %v2829 = vadd.f32 0.0, %v2828
  %2830 = vdwg.mxu0
  %v2831 = vadd.f32 %v2753, %v2797
  %v2832 = vadd.f32 %v2755, %v2799
  %v2833 = vadd.f32 %v2758, %v2802
  %v2834 = vadd.f32 %v2760, %v2804
  %v2835 = vadd.f32 %v2763, %v2807
  %v2836 = vadd.f32 %v2765, %v2809
  %v2837 = vadd.f32 %v2768, %v2812
  %v2838 = vadd.f32 %v2770, %v2814
  %v2839 = vadd.f32 %v2773, %v2817
  %v2840 = vadd.f32 %v2775, %v2819
  %v2841 = vadd.f32 %v2778, %v2822
  %v2842 = vadd.f32 %v2780, %v2824
  %v2843 = vadd.f32 %v2783, %v2827
  %v2844 = vadd.f32 %v2785, %v2829
  %2845 = vmatpush.bf16.msra.mxu0 0
  %2846 = vmatpush.bf16.msra.mxu0 0
  %2847 = vmatpush.bf16.msra.mxu0 %v636
  %2848 = vmatpush.bf16.msra.mxu0 %v635
  %2849 = vmatpush.bf16.msra.mxu0 %v634
  %2850 = vmatpush.bf16.msra.mxu0 %v633
  %2851 = vmatpush.bf16.msra.mxu0 %v632
  %2852 = vmatpush.bf16.msra.mxu0 %v631
  %2853 = vmatmul.bf16.gmra.mxu0 %v2345
  %v2854 = vpop.f32.mrf.mxu0
  %v2855 = vadd.f32 0.0, %v2854
  %v2856 = vpop.f32.mrf.mxu0
  %v2857 = vadd.f32 0.0, %v2856
  %2858 = vmatmul.bf16.gmra.mxu0 %v2348
  %v2859 = vpop.f32.mrf.mxu0
  %v2860 = vadd.f32 0.0, %v2859
  %v2861 = vpop.f32.mrf.mxu0
  %v2862 = vadd.f32 0.0, %v2861
  %2863 = vmatmul.bf16.gmra.mxu0 %v2351
  %v2864 = vpop.f32.mrf.mxu0
  %v2865 = vadd.f32 0.0, %v2864
  %v2866 = vpop.f32.mrf.mxu0
  %v2867 = vadd.f32 0.0, %v2866
  %2868 = vmatmul.bf16.gmra.mxu0 %v2354
  %v2869 = vpop.f32.mrf.mxu0
  %v2870 = vadd.f32 0.0, %v2869
  %v2871 = vpop.f32.mrf.mxu0
  %v2872 = vadd.f32 0.0, %v2871
  %2873 = vmatmul.bf16.gmra.mxu0 %v2357
  %v2874 = vpop.f32.mrf.mxu0
  %v2875 = vadd.f32 0.0, %v2874
  %v2876 = vpop.f32.mrf.mxu0
  %v2877 = vadd.f32 0.0, %v2876
  %2878 = vmatmul.bf16.gmra.mxu0 %v2360
  %v2879 = vpop.f32.mrf.mxu0
  %v2880 = vadd.f32 0.0, %v2879
  %v2881 = vpop.f32.mrf.mxu0
  %v2882 = vadd.f32 0.0, %v2881
  %2883 = vmatmul.bf16.gmra.mxu0 %v2363
  %v2884 = vpop.f32.mrf.mxu0
  %v2885 = vadd.f32 0.0, %v2884
  %v2886 = vpop.f32.mrf.mxu0
  %v2887 = vadd.f32 0.0, %v2886
  %2888 = vdwg.mxu0
  %v2889 = vadd.f32 %v2831, %v2855
  %v2890 = vadd.f32 %v2832, %v2857
  %v2891 = vadd.f32 %v2833, %v2860
  %v2892 = vadd.f32 %v2834, %v2862
  %v2893 = vadd.f32 %v2835, %v2865
  %v2894 = vadd.f32 %v2836, %v2867
  %v2895 = vadd.f32 %v2837, %v2870
  %v2896 = vadd.f32 %v2838, %v2872
  %v2897 = vadd.f32 %v2839, %v2875
  %v2898 = vadd.f32 %v2840, %v2877
  %v2899 = vadd.f32 %v2841, %v2880
  %v2900 = vadd.f32 %v2842, %v2882
  %v2901 = vadd.f32 %v2843, %v2885
  %v2902 = vadd.f32 %v2844, %v2887
  %s2903 = scalar_lea.vmem %s0, 200
  %v2904 = vld [vmem:[%s2903] sm:$0xf]
  %v2905 = vld [vmem:[%s2903 + $0x4] sm:$0xf]
  %v2906 = vld [vmem:[%s2903 + $0x8] sm:$0xf]
  %v2907 = vld [vmem:[%s2903 + $0xc] sm:$0xf]
  %v2908 = vld [vmem:[%s2903 + $0x10] sm:$0xf]
  %v2909 = vld [vmem:[%s2903 + $0x14] sm:$0xf]
  %v2910 = vld [vmem:[%s2903 + $0x18] sm:$0xf]
  %v2911 = vld [vmem:[%s2903 + $0x1c] sm:$0xf]
  %v2912 = vld [vmem:[%s2903 + $0x20] sm:$0xf]
  %v2913 = vld [vmem:[%s2903 + $0x24] sm:$0xf]
  %v2914 = vld [vmem:[%s2903 + $0x28] sm:$0xf]
  %v2915 = vld [vmem:[%s2903 + $0x2c] sm:$0xf]
  %v2916 = vld [vmem:[%s2903 + $0x30] sm:$0xf]
  %v2917 = vld [vmem:[%s2903 + $0x34] sm:$0xf]
  %v2932 = vunpack.c.l.b16 %v2904
  %v2933 = vunpack.c.l.b16 %v2905
  %v2934 = vunpack.c.l.b16 %v2906
  %v2935 = vunpack.c.l.b16 %v2907
  %v2936 = vunpack.c.l.b16 %v2908
  %v2937 = vunpack.c.l.b16 %v2909
  %v2938 = vunpack.c.l.b16 %v2910
  %v2939 = vunpack.c.l.b16 %v2911
  %v2940 = vunpack.c.l.b16 %v2912
  %v2941 = vunpack.c.l.b16 %v2913
  %v2942 = vunpack.c.l.b16 %v2914
  %v2943 = vunpack.c.l.b16 %v2915
  %v2944 = vunpack.c.l.b16 %v2916
  %v2945 = vunpack.c.l.b16 %v2917
  %v2946 = vpack.c.b16 %v2933, %v2932
  %v2947 = vpack.c.b16 %v2935, %v2934
  %v2948 = vpack.c.b16 %v2937, %v2936
  %v2949 = vpack.c.b16 %v2939, %v2938
  %v2950 = vpack.c.b16 %v2941, %v2940
  %v2951 = vpack.c.b16 %v2943, %v2942
  %v2952 = vpack.c.b16 %v2945, %v2944
  %v2954 = vsel %vm164, %v2946, 0
  %v2957 = vsel %vm164, %v2947, 0
  %v2960 = vsel %vm164, %v2948, 0
  %v2963 = vsel %vm164, %v2949, 0
  %v2966 = vsel %vm164, %v2950, 0
  %v2969 = vsel %vm164, %v2951, 0
  %v2972 = vsel %vm164, %v2952, 0
  %2974 = vmatpush.bf16.msra.mxu0 0
  %2975 = vmatpush.bf16.msra.mxu0 0
  %2976 = vmatpush.bf16.msra.mxu0 %v814
  %2977 = vmatpush.bf16.msra.mxu0 %v813
  %2978 = vmatpush.bf16.msra.mxu0 %v812
  %2979 = vmatpush.bf16.msra.mxu0 %v811
  %2980 = vmatpush.bf16.msra.mxu0 %v810
  %2981 = vmatpush.bf16.msra.mxu0 %v809
  %2982 = vmatmul.bf16.gmra.mxu0 %v2954
  %v2983 = vpop.f32.mrf.mxu0
  %v2984 = vadd.f32 0.0, %v2983
  %v2985 = vpop.f32.mrf.mxu0
  %v2986 = vadd.f32 0.0, %v2985
  %2987 = vmatmul.bf16.gmra.mxu0 %v2957
  %v2988 = vpop.f32.mrf.mxu0
  %v2989 = vadd.f32 0.0, %v2988
  %v2990 = vpop.f32.mrf.mxu0
  %v2991 = vadd.f32 0.0, %v2990
  %2992 = vmatmul.bf16.gmra.mxu0 %v2960
  %v2993 = vpop.f32.mrf.mxu0
  %v2994 = vadd.f32 0.0, %v2993
  %v2995 = vpop.f32.mrf.mxu0
  %v2996 = vadd.f32 0.0, %v2995
  %2997 = vmatmul.bf16.gmra.mxu0 %v2963
  %v2998 = vpop.f32.mrf.mxu0
  %v2999 = vadd.f32 0.0, %v2998
  %v3000 = vpop.f32.mrf.mxu0
  %v3001 = vadd.f32 0.0, %v3000
  %3002 = vmatmul.bf16.gmra.mxu0 %v2966
  %v3003 = vpop.f32.mrf.mxu0
  %v3004 = vadd.f32 0.0, %v3003
  %v3005 = vpop.f32.mrf.mxu0
  %v3006 = vadd.f32 0.0, %v3005
  %3007 = vmatmul.bf16.gmra.mxu0 %v2969
  %v3008 = vpop.f32.mrf.mxu0
  %v3009 = vadd.f32 0.0, %v3008
  %v3010 = vpop.f32.mrf.mxu0
  %v3011 = vadd.f32 0.0, %v3010
  %3012 = vmatmul.bf16.gmra.mxu0 %v2972
  %v3013 = vpop.f32.mrf.mxu0
  %v3014 = vadd.f32 0.0, %v3013
  %v3015 = vpop.f32.mrf.mxu0
  %v3016 = vadd.f32 0.0, %v3015
  %3017 = vdwg.mxu0
  %v3018 = vadd.f32 %v2889, %v2984
  %v3019 = vadd.f32 %v2890, %v2986
  %v3020 = vadd.f32 %v2891, %v2989
  %v3021 = vadd.f32 %v2892, %v2991
  %v3022 = vadd.f32 %v2893, %v2994
  %v3023 = vadd.f32 %v2894, %v2996
  %v3024 = vadd.f32 %v2895, %v2999
  %v3025 = vadd.f32 %v2896, %v3001
  %v3026 = vadd.f32 %v2897, %v3004
  %v3027 = vadd.f32 %v2898, %v3006
  %v3028 = vadd.f32 %v2899, %v3009
  %v3029 = vadd.f32 %v2900, %v3011
  %v3030 = vadd.f32 %v2901, %v3014
  %v3031 = vadd.f32 %v2902, %v3016
  %v3032 = vmax.f32 %v2685, %v3018
  %v3033 = vmax.f32 %v2686, %v3019
  %v3034 = vmax.f32 %v2687, %v3020
  %v3035 = vmax.f32 %v2688, %v3021
  %v3036 = vmax.f32 %v2689, %v3022
  %v3037 = vmax.f32 %v2690, %v3023
  %v3038 = vmax.f32 %v2691, %v3024
  %v3039 = vmax.f32 %v2692, %v3025
  %v3040 = vmax.f32 %v2693, %v3026
  %v3041 = vmax.f32 %v2694, %v3027
  %v3042 = vmax.f32 %v2695, %v3028
  %v3043 = vmax.f32 %v2696, %v3029
  %v3044 = vmax.f32 %v2697, %v3030
  %v3045 = vmax.f32 %v2698, %v3031
  %3046 = vmatpush.bf16.msra.mxu0 0
  %3047 = vmatpush.bf16.msra.mxu0 0
  %3048 = vmatpush.bf16.msra.mxu0 %v955
  %3049 = vmatpush.bf16.msra.mxu0 %v954
  %3050 = vmatpush.bf16.msra.mxu0 %v953
  %3051 = vmatpush.bf16.msra.mxu0 %v952
  %3052 = vmatpush.bf16.msra.mxu0 %v951
  %3053 = vmatpush.bf16.msra.mxu0 %v950
  %3054 = vmatmul.bf16.gmra.mxu0 %v822
  %v3055 = vpop.f32.mrf.mxu0
  %v3056 = vadd.f32 0.0, %v3055
  %v3057 = vpop.f32.mrf.mxu0
  %v3058 = vadd.f32 0.0, %v3057
  %3059 = vmatmul.bf16.gmra.mxu0 %v825
  %v3060 = vpop.f32.mrf.mxu0
  %v3061 = vadd.f32 0.0, %v3060
  %v3062 = vpop.f32.mrf.mxu0
  %v3063 = vadd.f32 0.0, %v3062
  %3064 = vmatmul.bf16.gmra.mxu0 %v828
  %v3065 = vpop.f32.mrf.mxu0
  %v3066 = vadd.f32 0.0, %v3065
  %v3067 = vpop.f32.mrf.mxu0
  %v3068 = vadd.f32 0.0, %v3067
  %3069 = vmatmul.bf16.gmra.mxu0 %v831
  %v3070 = vpop.f32.mrf.mxu0
  %v3071 = vadd.f32 0.0, %v3070
  %v3072 = vpop.f32.mrf.mxu0
  %v3073 = vadd.f32 0.0, %v3072
  %3074 = vmatmul.bf16.gmra.mxu0 %v834
  %v3075 = vpop.f32.mrf.mxu0
  %v3076 = vadd.f32 0.0, %v3075
  %v3077 = vpop.f32.mrf.mxu0
  %v3078 = vadd.f32 0.0, %v3077
  %3079 = vmatmul.bf16.gmra.mxu0 %v837
  %v3080 = vpop.f32.mrf.mxu0
  %v3081 = vadd.f32 0.0, %v3080
  %v3082 = vpop.f32.mrf.mxu0
  %v3083 = vadd.f32 0.0, %v3082
  %3084 = vmatmul.bf16.gmra.mxu0 %v840
  %v3085 = vpop.f32.mrf.mxu0
  %v3086 = vadd.f32 0.0, %v3085
  %v3087 = vpop.f32.mrf.mxu0
  %v3088 = vadd.f32 0.0, %v3087
  %3089 = vdwg.mxu0
  %3090 = vmatpush.bf16.msra.mxu0 0
  %3091 = vmatpush.bf16.msra.mxu0 0
  %3092 = vmatpush.bf16.msra.mxu0 %v1035
  %3093 = vmatpush.bf16.msra.mxu0 %v1034
  %3094 = vmatpush.bf16.msra.mxu0 %v1033
  %3095 = vmatpush.bf16.msra.mxu0 %v1032
  %3096 = vmatpush.bf16.msra.mxu0 %v1031
  %3097 = vmatpush.bf16.msra.mxu0 %v1030
  %3098 = vmatmul.bf16.gmra.mxu0 %v644
  %v3099 = vpop.f32.mrf.mxu0
  %v3100 = vadd.f32 %v3056, %v3099
  %v3101 = vpop.f32.mrf.mxu0
  %v3102 = vadd.f32 %v3058, %v3101
  %3103 = vmatmul.bf16.gmra.mxu0 %v647
  %v3104 = vpop.f32.mrf.mxu0
  %v3105 = vadd.f32 %v3061, %v3104
  %v3106 = vpop.f32.mrf.mxu0
  %v3107 = vadd.f32 %v3063, %v3106
  %3108 = vmatmul.bf16.gmra.mxu0 %v650
  %v3109 = vpop.f32.mrf.mxu0
  %v3110 = vadd.f32 %v3066, %v3109
  %v3111 = vpop.f32.mrf.mxu0
  %v3112 = vadd.f32 %v3068, %v3111
  %3113 = vmatmul.bf16.gmra.mxu0 %v653
  %v3114 = vpop.f32.mrf.mxu0
  %v3115 = vadd.f32 %v3071, %v3114
  %v3116 = vpop.f32.mrf.mxu0
  %v3117 = vadd.f32 %v3073, %v3116
  %3118 = vmatmul.bf16.gmra.mxu0 %v656
  %v3119 = vpop.f32.mrf.mxu0
  %v3120 = vadd.f32 %v3076, %v3119
  %v3121 = vpop.f32.mrf.mxu0
  %v3122 = vadd.f32 %v3078, %v3121
  %3123 = vmatmul.bf16.gmra.mxu0 %v659
  %v3124 = vpop.f32.mrf.mxu0
  %v3125 = vadd.f32 %v3081, %v3124
  %v3126 = vpop.f32.mrf.mxu0
  %v3127 = vadd.f32 %v3083, %v3126
  %3128 = vmatmul.bf16.gmra.mxu0 %v662
  %v3129 = vpop.f32.mrf.mxu0
  %v3130 = vadd.f32 %v3086, %v3129
  %v3131 = vpop.f32.mrf.mxu0
  %v3132 = vadd.f32 %v3088, %v3131
  %3133 = vdwg.mxu0
  %3134 = vmatpush.bf16.msra.mxu0 0
  %3135 = vmatpush.bf16.msra.mxu0 0
  %3136 = vmatpush.bf16.msra.mxu0 %v1128
  %3137 = vmatpush.bf16.msra.mxu0 %v1127
  %3138 = vmatpush.bf16.msra.mxu0 %v1126
  %3139 = vmatpush.bf16.msra.mxu0 %v1125
  %3140 = vmatpush.bf16.msra.mxu0 %v1124
  %3141 = vmatpush.bf16.msra.mxu0 %v1123
  %3142 = vmatmul.bf16.gmra.mxu0 %v1676
  %v3143 = vpop.f32.mrf.mxu0
  %v3144 = vadd.f32 0.0, %v3143
  %v3145 = vpop.f32.mrf.mxu0
  %v3146 = vadd.f32 0.0, %v3145
  %3147 = vmatmul.bf16.gmra.mxu0 %v1679
  %v3148 = vpop.f32.mrf.mxu0
  %v3149 = vadd.f32 0.0, %v3148
  %v3150 = vpop.f32.mrf.mxu0
  %v3151 = vadd.f32 0.0, %v3150
  %3152 = vmatmul.bf16.gmra.mxu0 %v1682
  %v3153 = vpop.f32.mrf.mxu0
  %v3154 = vadd.f32 0.0, %v3153
  %v3155 = vpop.f32.mrf.mxu0
  %v3156 = vadd.f32 0.0, %v3155
  %3157 = vmatmul.bf16.gmra.mxu0 %v1685
  %v3158 = vpop.f32.mrf.mxu0
  %v3159 = vadd.f32 0.0, %v3158
  %v3160 = vpop.f32.mrf.mxu0
  %v3161 = vadd.f32 0.0, %v3160
  %3162 = vmatmul.bf16.gmra.mxu0 %v1688
  %v3163 = vpop.f32.mrf.mxu0
  %v3164 = vadd.f32 0.0, %v3163
  %v3165 = vpop.f32.mrf.mxu0
  %v3166 = vadd.f32 0.0, %v3165
  %3167 = vmatmul.bf16.gmra.mxu0 %v1691
  %v3168 = vpop.f32.mrf.mxu0
  %v3169 = vadd.f32 0.0, %v3168
  %v3170 = vpop.f32.mrf.mxu0
  %v3171 = vadd.f32 0.0, %v3170
  %3172 = vmatmul.bf16.gmra.mxu0 %v1694
  %v3173 = vpop.f32.mrf.mxu0
  %v3174 = vadd.f32 0.0, %v3173
  %v3175 = vpop.f32.mrf.mxu0
  %v3176 = vadd.f32 0.0, %v3175
  %3177 = vdwg.mxu0
  %v3178 = vadd.f32 %v3100, %v3144
  %v3179 = vadd.f32 %v3102, %v3146
  %v3180 = vadd.f32 %v3105, %v3149
  %v3181 = vadd.f32 %v3107, %v3151
  %v3182 = vadd.f32 %v3110, %v3154
  %v3183 = vadd.f32 %v3112, %v3156
  %v3184 = vadd.f32 %v3115, %v3159
  %v3185 = vadd.f32 %v3117, %v3161
  %v3186 = vadd.f32 %v3120, %v3164
  %v3187 = vadd.f32 %v3122, %v3166
  %v3188 = vadd.f32 %v3125, %v3169
  %v3189 = vadd.f32 %v3127, %v3171
  %v3190 = vadd.f32 %v3130, %v3174
  %v3191 = vadd.f32 %v3132, %v3176
  %3192 = vmatpush.bf16.msra.mxu0 0
  %3193 = vmatpush.bf16.msra.mxu0 0
  %3194 = vmatpush.bf16.msra.mxu0 %v1235
  %3195 = vmatpush.bf16.msra.mxu0 %v1234
  %3196 = vmatpush.bf16.msra.mxu0 %v1233
  %3197 = vmatpush.bf16.msra.mxu0 %v1232
  %3198 = vmatpush.bf16.msra.mxu0 %v1231
  %3199 = vmatpush.bf16.msra.mxu0 %v1230
  %3200 = vmatmul.bf16.gmra.mxu0 %v2345
  %v3201 = vpop.f32.mrf.mxu0
  %v3202 = vadd.f32 0.0, %v3201
  %v3203 = vpop.f32.mrf.mxu0
  %v3204 = vadd.f32 0.0, %v3203
  %3205 = vmatmul.bf16.gmra.mxu0 %v2348
  %v3206 = vpop.f32.mrf.mxu0
  %v3207 = vadd.f32 0.0, %v3206
  %v3208 = vpop.f32.mrf.mxu0
  %v3209 = vadd.f32 0.0, %v3208
  %3210 = vmatmul.bf16.gmra.mxu0 %v2351
  %v3211 = vpop.f32.mrf.mxu0
  %v3212 = vadd.f32 0.0, %v3211
  %v3213 = vpop.f32.mrf.mxu0
  %v3214 = vadd.f32 0.0, %v3213
  %3215 = vmatmul.bf16.gmra.mxu0 %v2354
  %v3216 = vpop.f32.mrf.mxu0
  %v3217 = vadd.f32 0.0, %v3216
  %v3218 = vpop.f32.mrf.mxu0
  %v3219 = vadd.f32 0.0, %v3218
  %3220 = vmatmul.bf16.gmra.mxu0 %v2357
  %v3221 = vpop.f32.mrf.mxu0
  %v3222 = vadd.f32 0.0, %v3221
  %v3223 = vpop.f32.mrf.mxu0
  %v3224 = vadd.f32 0.0, %v3223
  %3225 = vmatmul.bf16.gmra.mxu0 %v2360
  %v3226 = vpop.f32.mrf.mxu0
  %v3227 = vadd.f32 0.0, %v3226
  %v3228 = vpop.f32.mrf.mxu0
  %v3229 = vadd.f32 0.0, %v3228
  %3230 = vmatmul.bf16.gmra.mxu0 %v2363
  %v3231 = vpop.f32.mrf.mxu0
  %v3232 = vadd.f32 0.0, %v3231
  %v3233 = vpop.f32.mrf.mxu0
  %v3234 = vadd.f32 0.0, %v3233
  %3235 = vdwg.mxu0
  %v3236 = vadd.f32 %v3178, %v3202
  %v3237 = vadd.f32 %v3179, %v3204
  %v3238 = vadd.f32 %v3180, %v3207
  %v3239 = vadd.f32 %v3181, %v3209
  %v3240 = vadd.f32 %v3182, %v3212
  %v3241 = vadd.f32 %v3183, %v3214
  %v3242 = vadd.f32 %v3184, %v3217
  %v3243 = vadd.f32 %v3185, %v3219
  %v3244 = vadd.f32 %v3186, %v3222
  %v3245 = vadd.f32 %v3187, %v3224
  %v3246 = vadd.f32 %v3188, %v3227
  %v3247 = vadd.f32 %v3189, %v3229
  %v3248 = vadd.f32 %v3190, %v3232
  %v3249 = vadd.f32 %v3191, %v3234
  %3250 = vmatpush.bf16.msra.mxu0 0
  %3251 = vmatpush.bf16.msra.mxu0 0
  %3252 = vmatpush.bf16.msra.mxu0 %v1342
  %3253 = vmatpush.bf16.msra.mxu0 %v1341
  %3254 = vmatpush.bf16.msra.mxu0 %v1340
  %3255 = vmatpush.bf16.msra.mxu0 %v1339
  %3256 = vmatpush.bf16.msra.mxu0 %v1338
  %3257 = vmatpush.bf16.msra.mxu0 %v1337
  %3258 = vmatmul.bf16.gmra.mxu0 %v2954
  %v3259 = vpop.f32.mrf.mxu0
  %v3260 = vadd.f32 0.0, %v3259
  %v3261 = vpop.f32.mrf.mxu0
  %v3262 = vadd.f32 0.0, %v3261
  %3263 = vmatmul.bf16.gmra.mxu0 %v2957
  %v3264 = vpop.f32.mrf.mxu0
  %v3265 = vadd.f32 0.0, %v3264
  %v3266 = vpop.f32.mrf.mxu0
  %v3267 = vadd.f32 0.0, %v3266
  %3268 = vmatmul.bf16.gmra.mxu0 %v2960
  %v3269 = vpop.f32.mrf.mxu0
  %v3270 = vadd.f32 0.0, %v3269
  %v3271 = vpop.f32.mrf.mxu0
  %v3272 = vadd.f32 0.0, %v3271
  %3273 = vmatmul.bf16.gmra.mxu0 %v2963
  %v3274 = vpop.f32.mrf.mxu0
  %v3275 = vadd.f32 0.0, %v3274
  %v3276 = vpop.f32.mrf.mxu0
  %v3277 = vadd.f32 0.0, %v3276
  %3278 = vmatmul.bf16.gmra.mxu0 %v2966
  %v3279 = vpop.f32.mrf.mxu0
  %v3280 = vadd.f32 0.0, %v3279
  %v3281 = vpop.f32.mrf.mxu0
  %v3282 = vadd.f32 0.0, %v3281
  %3283 = vmatmul.bf16.gmra.mxu0 %v2969
  %v3284 = vpop.f32.mrf.mxu0
  %v3285 = vadd.f32 0.0, %v3284
  %v3286 = vpop.f32.mrf.mxu0
  %v3287 = vadd.f32 0.0, %v3286
  %3288 = vmatmul.bf16.gmra.mxu0 %v2972
  %v3289 = vpop.f32.mrf.mxu0
  %v3290 = vadd.f32 0.0, %v3289
  %v3291 = vpop.f32.mrf.mxu0
  %v3292 = vadd.f32 0.0, %v3291
  %3293 = vdwg.mxu0
  %v3294 = vadd.f32 %v3236, %v3260
  %v3295 = vadd.f32 %v3237, %v3262
  %v3296 = vadd.f32 %v3238, %v3265
  %v3297 = vadd.f32 %v3239, %v3267
  %v3298 = vadd.f32 %v3240, %v3270
  %v3299 = vadd.f32 %v3241, %v3272
  %v3300 = vadd.f32 %v3242, %v3275
  %v3301 = vadd.f32 %v3243, %v3277
  %v3302 = vadd.f32 %v3244, %v3280
  %v3303 = vadd.f32 %v3245, %v3282
  %v3304 = vadd.f32 %v3246, %v3285
  %v3305 = vadd.f32 %v3247, %v3287
  %v3306 = vadd.f32 %v3248, %v3290
  %v3307 = vadd.f32 %v3249, %v3292
  %v3308 = vmax.f32 %v3032, %v3294
  %v3309 = vmax.f32 %v3033, %v3295
  %v3310 = vmax.f32 %v3034, %v3296
  %v3311 = vmax.f32 %v3035, %v3297
  %v3312 = vmax.f32 %v3036, %v3298
  %v3313 = vmax.f32 %v3037, %v3299
  %v3314 = vmax.f32 %v3038, %v3300
  %v3315 = vmax.f32 %v3039, %v3301
  %v3316 = vmax.f32 %v3040, %v3302
  %v3317 = vmax.f32 %v3041, %v3303
  %v3318 = vmax.f32 %v3042, %v3304
  %v3319 = vmax.f32 %v3043, %v3305
  %v3320 = vmax.f32 %v3044, %v3306
  %v3321 = vmax.f32 %v3045, %v3307
  %v3322 = vadd.f32 %v3308, %v2046
  %v3323 = vadd.f32 %v3309, %v2046
  %v3324 = vadd.f32 %v3310, %v2046
  %v3325 = vadd.f32 %v3311, %v2046
  %v3326 = vadd.f32 %v3312, %v2046
  %v3327 = vadd.f32 %v3313, %v2046
  %v3328 = vadd.f32 %v3314, %v2046
  %v3329 = vadd.f32 %v3315, %v2046
  %v3330 = vadd.f32 %v3316, %v2046
  %v3331 = vadd.f32 %v3317, %v2046
  %v3332 = vadd.f32 %v3318, %v2046
  %v3333 = vadd.f32 %v3319, %v2046
  %v3334 = vadd.f32 %v3320, %v2046
  %v3335 = vadd.f32 %v3321, %v2046
  %v3336 = vmax.f32 %v3322, 0.0
  %v3337 = vmax.f32 %v3323, 0.0
  %v3338 = vmax.f32 %v3324, 0.0
  %v3339 = vmax.f32 %v3325, 0.0
  %v3340 = vmax.f32 %v3326, 0.0
  %v3341 = vmax.f32 %v3327, 0.0
  %v3342 = vmax.f32 %v3328, 0.0
  %v3343 = vmax.f32 %v3329, 0.0
  %v3344 = vmax.f32 %v3330, 0.0
  %v3345 = vmax.f32 %v3331, 0.0
  %v3346 = vmax.f32 %v3332, 0.0
  %v3347 = vmax.f32 %v3333, 0.0
  %v3348 = vmax.f32 %v3334, 0.0
  %v3349 = vmax.f32 %v3335, 0.0
  %v3350 = vpack.c.bf16 %v3336, %v3336
  %v3351 = vpack.c.bf16 %v3337, %v3337
  %v3352 = vpack.c.bf16 %v3338, %v3338
  %v3353 = vpack.c.bf16 %v3339, %v3339
  %v3354 = vpack.c.bf16 %v3340, %v3340
  %v3355 = vpack.c.bf16 %v3341, %v3341
  %v3356 = vpack.c.bf16 %v3342, %v3342
  %v3357 = vpack.c.bf16 %v3343, %v3343
  %v3358 = vpack.c.bf16 %v3344, %v3344
  %v3359 = vpack.c.bf16 %v3345, %v3345
  %v3360 = vpack.c.bf16 %v3346, %v3346
  %v3361 = vpack.c.bf16 %v3347, %v3347
  %v3362 = vpack.c.bf16 %v3348, %v3348
  %v3363 = vpack.c.bf16 %v3349, %v3349
  %v3364 = vld [vmem:[%s3] sm:$0xf]
  %v3365 = vld [vmem:[%s3 + $0x4] sm:$0xf]
  %v3366 = vld [vmem:[%s3 + $0x8] sm:$0xf]
  %v3367 = vld [vmem:[%s3 + $0xc] sm:$0xf]
  %v3368 = vld [vmem:[%s3 + $0x10] sm:$0xf]
  %v3369 = vld [vmem:[%s3 + $0x14] sm:$0xf]
  %v3370 = vld [vmem:[%s3 + $0x18] sm:$0xf]
  %v3371 = vld [vmem:[%s3 + $0x1c] sm:$0xf]
  %v3372 = vld [vmem:[%s3 + $0x20] sm:$0xf]
  %v3373 = vld [vmem:[%s3 + $0x24] sm:$0xf]
  %v3374 = vld [vmem:[%s3 + $0x28] sm:$0x3]
  %s3375 = scalar_lea.vmem %s3, 88
  %v3376 = vld [vmem:[%s3375] sm:$0xf]
  %v3377 = vld [vmem:[%s3375 + $0x4] sm:$0xf]
  %v3378 = vld [vmem:[%s3375 + $0x8] sm:$0xf]
  %v3379 = vld [vmem:[%s3375 + $0xc] sm:$0xf]
  %v3380 = vld [vmem:[%s3375 + $0x10] sm:$0xf]
  %v3381 = vld [vmem:[%s3375 + $0x14] sm:$0xf]
  %v3382 = vld [vmem:[%s3375 + $0x18] sm:$0xf]
  %v3383 = vld [vmem:[%s3375 + $0x1c] sm:$0xf]
  %v3384 = vld [vmem:[%s3375 + $0x20] sm:$0xf]
  %v3385 = vld [vmem:[%s3375 + $0x24] sm:$0xf]
  %v3386 = vld [vmem:[%s3375 + $0x28] sm:$0x3]
  %v3397 = vunpack.c.l.b16 %v3350
  %v3398 = vunpack.c.l.b16 %v3351
  %v3399 = vunpack.c.l.b16 %v3352
  %v3400 = vunpack.c.l.b16 %v3353
  %v3401 = vunpack.c.l.b16 %v3354
  %v3402 = vunpack.c.l.b16 %v3355
  %v3403 = vunpack.c.l.b16 %v3356
  %v3404 = vunpack.c.l.b16 %v3357
  %v3405 = vunpack.c.l.b16 %v3358
  %v3406 = vunpack.c.l.b16 %v3359
  %v3407 = vpack.c.b16 %v3398, %v3397
  %v3408 = vpack.c.b16 %v3400, %v3399
  %v3409 = vpack.c.b16 %v3402, %v3401
  %v3410 = vpack.c.b16 %v3404, %v3403
  %v3411 = vpack.c.b16 %v3406, %v3405
  %v3423 = vunpack.c.l.b16 %v3376
  %v3424 = vunpack.c.l.b16 %v3377
  %v3425 = vunpack.c.l.b16 %v3378
  %v3426 = vunpack.c.l.b16 %v3379
  %v3427 = vunpack.c.l.b16 %v3380
  %v3428 = vunpack.c.l.b16 %v3381
  %v3429 = vunpack.c.l.b16 %v3382
  %v3430 = vunpack.c.l.b16 %v3383
  %v3431 = vunpack.c.l.b16 %v3384
  %v3432 = vunpack.c.l.b16 %v3385
  %v3433 = vunpack.c.l.b16 %v3386
  %v3434 = vpack.c.b16 %v3424, %v3423
  %v3435 = vpack.c.b16 %v3426, %v3425
  %v3436 = vpack.c.b16 %v3428, %v3427
  %v3437 = vpack.c.b16 %v3430, %v3429
  %v3438 = vpack.c.b16 %v3432, %v3431
  %v3439 = vpack.c.b16 %v3433, %v3433
  %vm3445 = vcmask 687104
  %v3447 = vsel %vm3445, %v3407, 0
  %v3450 = vsel %vm3445, %v3408, 0
  %v3453 = vsel %vm3445, %v3409, 0
  %v3456 = vsel %vm3445, %v3410, 0
  %v3459 = vsel %vm3445, %v3411, 0
  %vm3461 = vcmask 1041408
  %v3463 = vsel %vm3461, %v3439, 0
  %3465 = vmatpush.bf16.msra.mxu0 0
  %3466 = vmatpush.bf16.msra.mxu0 0
  %3467 = vmatpush.bf16.msra.mxu0 %v3463
  %3468 = vmatpush.bf16.msra.mxu0 %v3438
  %3469 = vmatpush.bf16.msra.mxu0 %v3437
  %3470 = vmatpush.bf16.msra.mxu0 %v3436
  %3471 = vmatpush.bf16.msra.mxu0 %v3435
  %3472 = vmatpush.bf16.msra.mxu0 %v3434
  %3473 = vmatmul.bf16.gmra.mxu0 %v3447
  %v3474 = vpop.f32.mrf.mxu0
  %v3475 = vadd.f32 0.0, %v3474
  %v3476 = vpop.f32.mrf.mxu0
  %v3477 = vadd.f32 0.0, %v3476
  %3478 = vmatmul.bf16.gmra.mxu0 %v3450
  %v3479 = vpop.f32.mrf.mxu0
  %v3480 = vadd.f32 0.0, %v3479
  %v3481 = vpop.f32.mrf.mxu0
  %v3482 = vadd.f32 0.0, %v3481
  %3483 = vmatmul.bf16.gmra.mxu0 %v3453
  %v3484 = vpop.f32.mrf.mxu0
  %v3485 = vadd.f32 0.0, %v3484
  %v3486 = vpop.f32.mrf.mxu0
  %v3487 = vadd.f32 0.0, %v3486
  %3488 = vmatmul.bf16.gmra.mxu0 %v3456
  %v3489 = vpop.f32.mrf.mxu0
  %v3490 = vadd.f32 0.0, %v3489
  %v3491 = vpop.f32.mrf.mxu0
  %v3492 = vadd.f32 0.0, %v3491
  %3493 = vmatmul.bf16.gmra.mxu0 %v3459
  %v3494 = vpop.f32.mrf.mxu0
  %v3495 = vadd.f32 0.0, %v3494
  %v3496 = vpop.f32.mrf.mxu0
  %v3497 = vadd.f32 0.0, %v3496
  %3498 = vdwg.mxu0
  %v3509 = vunpack.c.l.b16 %v2076
  %v3510 = vunpack.c.l.b16 %v2077
  %v3511 = vunpack.c.l.b16 %v2078
  %v3512 = vunpack.c.l.b16 %v2079
  %v3513 = vunpack.c.l.b16 %v2080
  %v3514 = vunpack.c.l.b16 %v2081
  %v3515 = vunpack.c.l.b16 %v2082
  %v3516 = vunpack.c.l.b16 %v2083
  %v3517 = vunpack.c.l.b16 %v2084
  %v3518 = vunpack.c.l.b16 %v2085
  %v3519 = vpack.c.b16 %v3510, %v3509
  %v3520 = vpack.c.b16 %v3512, %v3511
  %v3521 = vpack.c.b16 %v3514, %v3513
  %v3522 = vpack.c.b16 %v3516, %v3515
  %v3523 = vpack.c.b16 %v3518, %v3517
  %v3535 = vunpack.c.l.b16 %v3364
  %v3536 = vunpack.c.l.b16 %v3365
  %v3537 = vunpack.c.l.b16 %v3366
  %v3538 = vunpack.c.l.b16 %v3367
  %v3539 = vunpack.c.l.b16 %v3368
  %v3540 = vunpack.c.l.b16 %v3369
  %v3541 = vunpack.c.l.b16 %v3370
  %v3542 = vunpack.c.l.b16 %v3371
  %v3543 = vunpack.c.l.b16 %v3372
  %v3544 = vunpack.c.l.b16 %v3373
  %v3545 = vunpack.c.l.b16 %v3374
  %v3546 = vpack.c.b16 %v3536, %v3535
  %v3547 = vpack.c.b16 %v3538, %v3537
  %v3548 = vpack.c.b16 %v3540, %v3539
  %v3549 = vpack.c.b16 %v3542, %v3541
  %v3550 = vpack.c.b16 %v3544, %v3543
  %v3551 = vpack.c.b16 %v3545, %v3545
  %v3558 = vsel %vm3445, %v3519, 0
  %v3561 = vsel %vm3445, %v3520, 0
  %v3564 = vsel %vm3445, %v3521, 0
  %v3567 = vsel %vm3445, %v3522, 0
  %v3570 = vsel %vm3445, %v3523, 0
  %v3573 = vsel %vm3461, %v3551, 0
  %3575 = vmatpush.bf16.msra.mxu0 0
  %3576 = vmatpush.bf16.msra.mxu0 0
  %3577 = vmatpush.bf16.msra.mxu0 %v3573
  %3578 = vmatpush.bf16.msra.mxu0 %v3550
  %3579 = vmatpush.bf16.msra.mxu0 %v3549
  %3580 = vmatpush.bf16.msra.mxu0 %v3548
  %3581 = vmatpush.bf16.msra.mxu0 %v3547
  %3582 = vmatpush.bf16.msra.mxu0 %v3546
  %3583 = vmatmul.bf16.gmra.mxu0 %v3558
  %v3584 = vpop.f32.mrf.mxu0
  %v3585 = vadd.f32 %v3475, %v3584
  %v3586 = vpop.f32.mrf.mxu0
  %v3587 = vadd.f32 %v3477, %v3586
  %3588 = vmatmul.bf16.gmra.mxu0 %v3561
  %v3589 = vpop.f32.mrf.mxu0
  %v3590 = vadd.f32 %v3480, %v3589
  %v3591 = vpop.f32.mrf.mxu0
  %v3592 = vadd.f32 %v3482, %v3591
  %3593 = vmatmul.bf16.gmra.mxu0 %v3564
  %v3594 = vpop.f32.mrf.mxu0
  %v3595 = vadd.f32 %v3485, %v3594
  %v3596 = vpop.f32.mrf.mxu0
  %v3597 = vadd.f32 %v3487, %v3596
  %3598 = vmatmul.bf16.gmra.mxu0 %v3567
  %v3599 = vpop.f32.mrf.mxu0
  %v3600 = vadd.f32 %v3490, %v3599
  %v3601 = vpop.f32.mrf.mxu0
  %v3602 = vadd.f32 %v3492, %v3601
  %3603 = vmatmul.bf16.gmra.mxu0 %v3570
  %v3604 = vpop.f32.mrf.mxu0
  %v3605 = vadd.f32 %v3495, %v3604
  %v3606 = vpop.f32.mrf.mxu0
  %v3607 = vadd.f32 %v3497, %v3606
  %3608 = vdwg.mxu0
  %s3609 = scalar_lea.vmem %s3, 176
  %v3610 = vld [vmem:[%s3609] sm:$0xf]
  %v3611 = vld [vmem:[%s3609 + $0x4] sm:$0xf]
  %v3612 = vld [vmem:[%s3609 + $0x8] sm:$0xf]
  %v3613 = vld [vmem:[%s3609 + $0xc] sm:$0xf]
  %v3614 = vld [vmem:[%s3609 + $0x10] sm:$0xf]
  %v3615 = vld [vmem:[%s3609 + $0x14] sm:$0xf]
  %v3616 = vld [vmem:[%s3609 + $0x18] sm:$0xf]
  %v3617 = vld [vmem:[%s3609 + $0x1c] sm:$0xf]
  %v3618 = vld [vmem:[%s3609 + $0x20] sm:$0xf]
  %v3619 = vld [vmem:[%s3609 + $0x24] sm:$0xf]
  %v3620 = vld [vmem:[%s3609 + $0x28] sm:$0x3]
  %v3623 = vunpack.c.l.b16 %v2086
  %v3624 = vunpack.c.l.b16 %v2087
  %v3625 = vpack.c.b16 %v3624, %v3623
  %v3637 = vunpack.c.l.b16 %v3610
  %v3638 = vunpack.c.l.b16 %v3611
  %v3639 = vunpack.c.l.b16 %v3612
  %v3640 = vunpack.c.l.b16 %v3613
  %v3641 = vunpack.c.l.b16 %v3614
  %v3642 = vunpack.c.l.b16 %v3615
  %v3643 = vunpack.c.l.b16 %v3616
  %v3644 = vunpack.c.l.b16 %v3617
  %v3645 = vunpack.c.l.b16 %v3618
  %v3646 = vunpack.c.l.b16 %v3619
  %v3647 = vunpack.c.l.b16 %v3620
  %v3648 = vpack.c.b16 %v3638, %v3637
  %v3649 = vpack.c.b16 %v3640, %v3639
  %v3650 = vpack.c.b16 %v3642, %v3641
  %v3651 = vpack.c.b16 %v3644, %v3643
  %v3652 = vpack.c.b16 %v3646, %v3645
  %v3653 = vpack.c.b16 %v3647, %v3647
  %v3660 = vsel %vm3445, %v3625, 0
  %v3663 = vsel %vm3461, %v3653, 0
  %3665 = vmatpush.bf16.msra.mxu0 0
  %3666 = vmatpush.bf16.msra.mxu0 0
  %3667 = vmatpush.bf16.msra.mxu0 %v3663
  %3668 = vmatpush.bf16.msra.mxu0 %v3652
  %3669 = vmatpush.bf16.msra.mxu0 %v3651
  %3670 = vmatpush.bf16.msra.mxu0 %v3650
  %3671 = vmatpush.bf16.msra.mxu0 %v3649
  %3672 = vmatpush.bf16.msra.mxu0 %v3648
  %3673 = vmatmul.bf16.gmra.mxu0 %v3561
  %v3674 = vpop.f32.mrf.mxu0
  %v3675 = vadd.f32 0.0, %v3674
  %v3676 = vpop.f32.mrf.mxu0
  %v3677 = vadd.f32 0.0, %v3676
  %3678 = vmatmul.bf16.gmra.mxu0 %v3564
  %v3679 = vpop.f32.mrf.mxu0
  %v3680 = vadd.f32 0.0, %v3679
  %v3681 = vpop.f32.mrf.mxu0
  %v3682 = vadd.f32 0.0, %v3681
  %3683 = vmatmul.bf16.gmra.mxu0 %v3567
  %v3684 = vpop.f32.mrf.mxu0
  %v3685 = vadd.f32 0.0, %v3684
  %v3686 = vpop.f32.mrf.mxu0
  %v3687 = vadd.f32 0.0, %v3686
  %3688 = vmatmul.bf16.gmra.mxu0 %v3570
  %v3689 = vpop.f32.mrf.mxu0
  %v3690 = vadd.f32 0.0, %v3689
  %v3691 = vpop.f32.mrf.mxu0
  %v3692 = vadd.f32 0.0, %v3691
  %3693 = vmatmul.bf16.gmra.mxu0 %v3660
  %v3694 = vpop.f32.mrf.mxu0
  %v3695 = vadd.f32 0.0, %v3694
  %v3696 = vpop.f32.mrf.mxu0
  %v3697 = vadd.f32 0.0, %v3696
  %3698 = vdwg.mxu0
  %v3699 = vadd.f32 %v3585, %v3675
  %v3700 = vadd.f32 %v3587, %v3677
  %v3701 = vadd.f32 %v3590, %v3680
  %v3702 = vadd.f32 %v3592, %v3682
  %v3703 = vadd.f32 %v3595, %v3685
  %v3704 = vadd.f32 %v3597, %v3687
  %v3705 = vadd.f32 %v3600, %v3690
  %v3706 = vadd.f32 %v3602, %v3692
  %v3707 = vadd.f32 %v3605, %v3695
  %v3708 = vadd.f32 %v3607, %v3697
  %s3709 = scalar_lea.vmem %s3, 264
  %v3710 = vld [vmem:[%s3709] sm:$0xf]
  %v3711 = vld [vmem:[%s3709 + $0x4] sm:$0xf]
  %v3712 = vld [vmem:[%s3709 + $0x8] sm:$0xf]
  %v3713 = vld [vmem:[%s3709 + $0xc] sm:$0xf]
  %v3714 = vld [vmem:[%s3709 + $0x10] sm:$0xf]
  %v3715 = vld [vmem:[%s3709 + $0x14] sm:$0xf]
  %v3716 = vld [vmem:[%s3709 + $0x18] sm:$0xf]
  %v3717 = vld [vmem:[%s3709 + $0x1c] sm:$0xf]
  %v3718 = vld [vmem:[%s3709 + $0x20] sm:$0xf]
  %v3719 = vld [vmem:[%s3709 + $0x24] sm:$0xf]
  %v3720 = vld [vmem:[%s3709 + $0x28] sm:$0x3]
  %v3723 = vunpack.c.l.b16 %v3360
  %v3724 = vunpack.c.l.b16 %v3361
  %v3725 = vpack.c.b16 %v3724, %v3723
  %v3737 = vunpack.c.l.b16 %v3710
  %v3738 = vunpack.c.l.b16 %v3711
  %v3739 = vunpack.c.l.b16 %v3712
  %v3740 = vunpack.c.l.b16 %v3713
  %v3741 = vunpack.c.l.b16 %v3714
  %v3742 = vunpack.c.l.b16 %v3715
  %v3743 = vunpack.c.l.b16 %v3716
  %v3744 = vunpack.c.l.b16 %v3717
  %v3745 = vunpack.c.l.b16 %v3718
  %v3746 = vunpack.c.l.b16 %v3719
  %v3747 = vunpack.c.l.b16 %v3720
  %v3748 = vpack.c.b16 %v3738, %v3737
  %v3749 = vpack.c.b16 %v3740, %v3739
  %v3750 = vpack.c.b16 %v3742, %v3741
  %v3751 = vpack.c.b16 %v3744, %v3743
  %v3752 = vpack.c.b16 %v3746, %v3745
  %v3753 = vpack.c.b16 %v3747, %v3747
  %v3760 = vsel %vm3445, %v3725, 0
  %v3763 = vsel %vm3461, %v3753, 0
  %3765 = vmatpush.bf16.msra.mxu0 0
  %3766 = vmatpush.bf16.msra.mxu0 0
  %3767 = vmatpush.bf16.msra.mxu0 %v3763
  %3768 = vmatpush.bf16.msra.mxu0 %v3752
  %3769 = vmatpush.bf16.msra.mxu0 %v3751
  %3770 = vmatpush.bf16.msra.mxu0 %v3750
  %3771 = vmatpush.bf16.msra.mxu0 %v3749
  %3772 = vmatpush.bf16.msra.mxu0 %v3748
  %3773 = vmatmul.bf16.gmra.mxu0 %v3450
  %v3774 = vpop.f32.mrf.mxu0
  %v3775 = vadd.f32 0.0, %v3774
  %v3776 = vpop.f32.mrf.mxu0
  %v3777 = vadd.f32 0.0, %v3776
  %3778 = vmatmul.bf16.gmra.mxu0 %v3453
  %v3779 = vpop.f32.mrf.mxu0
  %v3780 = vadd.f32 0.0, %v3779
  %v3781 = vpop.f32.mrf.mxu0
  %v3782 = vadd.f32 0.0, %v3781
  %3783 = vmatmul.bf16.gmra.mxu0 %v3456
  %v3784 = vpop.f32.mrf.mxu0
  %v3785 = vadd.f32 0.0, %v3784
  %v3786 = vpop.f32.mrf.mxu0
  %v3787 = vadd.f32 0.0, %v3786
  %3788 = vmatmul.bf16.gmra.mxu0 %v3459
  %v3789 = vpop.f32.mrf.mxu0
  %v3790 = vadd.f32 0.0, %v3789
  %v3791 = vpop.f32.mrf.mxu0
  %v3792 = vadd.f32 0.0, %v3791
  %3793 = vmatmul.bf16.gmra.mxu0 %v3760
  %v3794 = vpop.f32.mrf.mxu0
  %v3795 = vadd.f32 0.0, %v3794
  %v3796 = vpop.f32.mrf.mxu0
  %v3797 = vadd.f32 0.0, %v3796
  %3798 = vdwg.mxu0
  %v3799 = vadd.f32 %v3699, %v3775
  %v3800 = vadd.f32 %v3700, %v3777
  %v3801 = vadd.f32 %v3701, %v3780
  %v3802 = vadd.f32 %v3702, %v3782
  %v3803 = vadd.f32 %v3703, %v3785
  %v3804 = vadd.f32 %v3704, %v3787
  %v3805 = vadd.f32 %v3705, %v3790
  %v3806 = vadd.f32 %v3706, %v3792
  %v3807 = vadd.f32 %v3707, %v3795
  %v3808 = vadd.f32 %v3708, %v3797
  %s3809 = scalar_lea.vmem %s3, 352
  %v3810 = vld [vmem:[%s3809] sm:$0xf]
  %v3811 = vld [vmem:[%s3809 + $0x4] sm:$0xf]
  %v3812 = vld [vmem:[%s3809 + $0x8] sm:$0xf]
  %v3813 = vld [vmem:[%s3809 + $0xc] sm:$0xf]
  %v3814 = vld [vmem:[%s3809 + $0x10] sm:$0xf]
  %v3815 = vld [vmem:[%s3809 + $0x14] sm:$0xf]
  %v3816 = vld [vmem:[%s3809 + $0x18] sm:$0xf]
  %v3817 = vld [vmem:[%s3809 + $0x1c] sm:$0xf]
  %v3818 = vld [vmem:[%s3809 + $0x20] sm:$0xf]
  %v3819 = vld [vmem:[%s3809 + $0x24] sm:$0xf]
  %v3820 = vld [vmem:[%s3809 + $0x28] sm:$0x3]
  %v3823 = vunpack.c.l.b16 %v2088
  %v3824 = vunpack.c.l.b16 %v2089
  %v3825 = vpack.c.b16 %v3824, %v3823
  %v3837 = vunpack.c.l.b16 %v3810
  %v3838 = vunpack.c.l.b16 %v3811
  %v3839 = vunpack.c.l.b16 %v3812
  %v3840 = vunpack.c.l.b16 %v3813
  %v3841 = vunpack.c.l.b16 %v3814
  %v3842 = vunpack.c.l.b16 %v3815
  %v3843 = vunpack.c.l.b16 %v3816
  %v3844 = vunpack.c.l.b16 %v3817
  %v3845 = vunpack.c.l.b16 %v3818
  %v3846 = vunpack.c.l.b16 %v3819
  %v3847 = vunpack.c.l.b16 %v3820
  %v3848 = vpack.c.b16 %v3838, %v3837
  %v3849 = vpack.c.b16 %v3840, %v3839
  %v3850 = vpack.c.b16 %v3842, %v3841
  %v3851 = vpack.c.b16 %v3844, %v3843
  %v3852 = vpack.c.b16 %v3846, %v3845
  %v3853 = vpack.c.b16 %v3847, %v3847
  %v3860 = vsel %vm3445, %v3825, 0
  %v3863 = vsel %vm3461, %v3853, 0
  %3865 = vmatpush.bf16.msra.mxu0 0
  %3866 = vmatpush.bf16.msra.mxu0 0
  %3867 = vmatpush.bf16.msra.mxu0 %v3863
  %3868 = vmatpush.bf16.msra.mxu0 %v3852
  %3869 = vmatpush.bf16.msra.mxu0 %v3851
  %3870 = vmatpush.bf16.msra.mxu0 %v3850
  %3871 = vmatpush.bf16.msra.mxu0 %v3849
  %3872 = vmatpush.bf16.msra.mxu0 %v3848
  %3873 = vmatmul.bf16.gmra.mxu0 %v3564
  %v3874 = vpop.f32.mrf.mxu0
  %v3875 = vadd.f32 0.0, %v3874
  %v3876 = vpop.f32.mrf.mxu0
  %v3877 = vadd.f32 0.0, %v3876
  %3878 = vmatmul.bf16.gmra.mxu0 %v3567
  %v3879 = vpop.f32.mrf.mxu0
  %v3880 = vadd.f32 0.0, %v3879
  %v3881 = vpop.f32.mrf.mxu0
  %v3882 = vadd.f32 0.0, %v3881
  %3883 = vmatmul.bf16.gmra.mxu0 %v3570
  %v3884 = vpop.f32.mrf.mxu0
  %v3885 = vadd.f32 0.0, %v3884
  %v3886 = vpop.f32.mrf.mxu0
  %v3887 = vadd.f32 0.0, %v3886
  %3888 = vmatmul.bf16.gmra.mxu0 %v3660
  %v3889 = vpop.f32.mrf.mxu0
  %v3890 = vadd.f32 0.0, %v3889
  %v3891 = vpop.f32.mrf.mxu0
  %v3892 = vadd.f32 0.0, %v3891
  %3893 = vmatmul.bf16.gmra.mxu0 %v3860
  %v3894 = vpop.f32.mrf.mxu0
  %v3895 = vadd.f32 0.0, %v3894
  %v3896 = vpop.f32.mrf.mxu0
  %v3897 = vadd.f32 0.0, %v3896
  %3898 = vdwg.mxu0
  %v3899 = vadd.f32 %v3799, %v3875
  %v3900 = vadd.f32 %v3800, %v3877
  %v3901 = vadd.f32 %v3801, %v3880
  %v3902 = vadd.f32 %v3802, %v3882
  %v3903 = vadd.f32 %v3803, %v3885
  %v3904 = vadd.f32 %v3804, %v3887
  %v3905 = vadd.f32 %v3805, %v3890
  %v3906 = vadd.f32 %v3806, %v3892
  %v3907 = vadd.f32 %v3807, %v3895
  %v3908 = vadd.f32 %v3808, %v3897
  %s3909 = scalar_lea.vmem %s3, 44
  %v3910 = vld [vmem:[%s3909] sm:$0xf]
  %v3911 = vld [vmem:[%s3909 + $0x4] sm:$0xf]
  %v3912 = vld [vmem:[%s3909 + $0x8] sm:$0xf]
  %v3913 = vld [vmem:[%s3909 + $0xc] sm:$0xf]
  %v3914 = vld [vmem:[%s3909 + $0x10] sm:$0xf]
  %v3915 = vld [vmem:[%s3909 + $0x14] sm:$0xf]
  %v3916 = vld [vmem:[%s3909 + $0x18] sm:$0xf]
  %v3917 = vld [vmem:[%s3909 + $0x1c] sm:$0xf]
  %v3918 = vld [vmem:[%s3909 + $0x20] sm:$0xf]
  %v3919 = vld [vmem:[%s3909 + $0x24] sm:$0xf]
  %v3920 = vld [vmem:[%s3909 + $0x28] sm:$0x3]
  %s3921 = scalar_lea.vmem %s3, 132
  %v3922 = vld [vmem:[%s3921] sm:$0xf]
  %v3923 = vld [vmem:[%s3921 + $0x4] sm:$0xf]
  %v3924 = vld [vmem:[%s3921 + $0x8] sm:$0xf]
  %v3925 = vld [vmem:[%s3921 + $0xc] sm:$0xf]
  %v3926 = vld [vmem:[%s3921 + $0x10] sm:$0xf]
  %v3927 = vld [vmem:[%s3921 + $0x14] sm:$0xf]
  %v3928 = vld [vmem:[%s3921 + $0x18] sm:$0xf]
  %v3929 = vld [vmem:[%s3921 + $0x1c] sm:$0xf]
  %v3930 = vld [vmem:[%s3921 + $0x20] sm:$0xf]
  %v3931 = vld [vmem:[%s3921 + $0x24] sm:$0xf]
  %v3932 = vld [vmem:[%s3921 + $0x28] sm:$0x3]
  %v3944 = vunpack.c.l.b16 %v3922
  %v3945 = vunpack.c.l.b16 %v3923
  %v3946 = vunpack.c.l.b16 %v3924
  %v3947 = vunpack.c.l.b16 %v3925
  %v3948 = vunpack.c.l.b16 %v3926
  %v3949 = vunpack.c.l.b16 %v3927
  %v3950 = vunpack.c.l.b16 %v3928
  %v3951 = vunpack.c.l.b16 %v3929
  %v3952 = vunpack.c.l.b16 %v3930
  %v3953 = vunpack.c.l.b16 %v3931
  %v3954 = vunpack.c.l.b16 %v3932
  %v3955 = vpack.c.b16 %v3945, %v3944
  %v3956 = vpack.c.b16 %v3947, %v3946
  %v3957 = vpack.c.b16 %v3949, %v3948
  %v3958 = vpack.c.b16 %v3951, %v3950
  %v3959 = vpack.c.b16 %v3953, %v3952
  %v3960 = vpack.c.b16 %v3954, %v3954
  %v3967 = vsel %vm3461, %v3960, 0
  %3969 = vmatpush.bf16.msra.mxu0 0
  %3970 = vmatpush.bf16.msra.mxu0 0
  %3971 = vmatpush.bf16.msra.mxu0 %v3967
  %3972 = vmatpush.bf16.msra.mxu0 %v3959
  %3973 = vmatpush.bf16.msra.mxu0 %v3958
  %3974 = vmatpush.bf16.msra.mxu0 %v3957
  %3975 = vmatpush.bf16.msra.mxu0 %v3956
  %3976 = vmatpush.bf16.msra.mxu0 %v3955
  %3977 = vmatmul.bf16.gmra.mxu0 %v3447
  %v3978 = vpop.f32.mrf.mxu0
  %v3979 = vadd.f32 0.0, %v3978
  %v3980 = vpop.f32.mrf.mxu0
  %v3981 = vadd.f32 0.0, %v3980
  %3982 = vmatmul.bf16.gmra.mxu0 %v3450
  %v3983 = vpop.f32.mrf.mxu0
  %v3984 = vadd.f32 0.0, %v3983
  %v3985 = vpop.f32.mrf.mxu0
  %v3986 = vadd.f32 0.0, %v3985
  %3987 = vmatmul.bf16.gmra.mxu0 %v3453
  %v3988 = vpop.f32.mrf.mxu0
  %v3989 = vadd.f32 0.0, %v3988
  %v3990 = vpop.f32.mrf.mxu0
  %v3991 = vadd.f32 0.0, %v3990
  %3992 = vmatmul.bf16.gmra.mxu0 %v3456
  %v3993 = vpop.f32.mrf.mxu0
  %v3994 = vadd.f32 0.0, %v3993
  %v3995 = vpop.f32.mrf.mxu0
  %v3996 = vadd.f32 0.0, %v3995
  %3997 = vmatmul.bf16.gmra.mxu0 %v3459
  %v3998 = vpop.f32.mrf.mxu0
  %v3999 = vadd.f32 0.0, %v3998
  %v4000 = vpop.f32.mrf.mxu0
  %v4001 = vadd.f32 0.0, %v4000
  %4002 = vdwg.mxu0
  %v4014 = vunpack.c.l.b16 %v3910
  %v4015 = vunpack.c.l.b16 %v3911
  %v4016 = vunpack.c.l.b16 %v3912
  %v4017 = vunpack.c.l.b16 %v3913
  %v4018 = vunpack.c.l.b16 %v3914
  %v4019 = vunpack.c.l.b16 %v3915
  %v4020 = vunpack.c.l.b16 %v3916
  %v4021 = vunpack.c.l.b16 %v3917
  %v4022 = vunpack.c.l.b16 %v3918
  %v4023 = vunpack.c.l.b16 %v3919
  %v4024 = vunpack.c.l.b16 %v3920
  %v4025 = vpack.c.b16 %v4015, %v4014
  %v4026 = vpack.c.b16 %v4017, %v4016
  %v4027 = vpack.c.b16 %v4019, %v4018
  %v4028 = vpack.c.b16 %v4021, %v4020
  %v4029 = vpack.c.b16 %v4023, %v4022
  %v4030 = vpack.c.b16 %v4024, %v4024
  %v4037 = vsel %vm3461, %v4030, 0
  %4039 = vmatpush.bf16.msra.mxu0 0
  %4040 = vmatpush.bf16.msra.mxu0 0
  %4041 = vmatpush.bf16.msra.mxu0 %v4037
  %4042 = vmatpush.bf16.msra.mxu0 %v4029
  %4043 = vmatpush.bf16.msra.mxu0 %v4028
  %4044 = vmatpush.bf16.msra.mxu0 %v4027
  %4045 = vmatpush.bf16.msra.mxu0 %v4026
  %4046 = vmatpush.bf16.msra.mxu0 %v4025
  %4047 = vmatmul.bf16.gmra.mxu0 %v3558
  %v4048 = vpop.f32.mrf.mxu0
  %v4049 = vadd.f32 %v3979, %v4048
  %v4050 = vpop.f32.mrf.mxu0
  %v4051 = vadd.f32 %v3981, %v4050
  %4052 = vmatmul.bf16.gmra.mxu0 %v3561
  %v4053 = vpop.f32.mrf.mxu0
  %v4054 = vadd.f32 %v3984, %v4053
  %v4055 = vpop.f32.mrf.mxu0
  %v4056 = vadd.f32 %v3986, %v4055
  %4057 = vmatmul.bf16.gmra.mxu0 %v3564
  %v4058 = vpop.f32.mrf.mxu0
  %v4059 = vadd.f32 %v3989, %v4058
  %v4060 = vpop.f32.mrf.mxu0
  %v4061 = vadd.f32 %v3991, %v4060
  %4062 = vmatmul.bf16.gmra.mxu0 %v3567
  %v4063 = vpop.f32.mrf.mxu0
  %v4064 = vadd.f32 %v3994, %v4063
  %v4065 = vpop.f32.mrf.mxu0
  %v4066 = vadd.f32 %v3996, %v4065
  %4067 = vmatmul.bf16.gmra.mxu0 %v3570
  %v4068 = vpop.f32.mrf.mxu0
  %v4069 = vadd.f32 %v3999, %v4068
  %v4070 = vpop.f32.mrf.mxu0
  %v4071 = vadd.f32 %v4001, %v4070
  %4072 = vdwg.mxu0
  %s4073 = scalar_lea.vmem %s3, 220
  %v4074 = vld [vmem:[%s4073] sm:$0xf]
  %v4075 = vld [vmem:[%s4073 + $0x4] sm:$0xf]
  %v4076 = vld [vmem:[%s4073 + $0x8] sm:$0xf]
  %v4077 = vld [vmem:[%s4073 + $0xc] sm:$0xf]
  %v4078 = vld [vmem:[%s4073 + $0x10] sm:$0xf]
  %v4079 = vld [vmem:[%s4073 + $0x14] sm:$0xf]
  %v4080 = vld [vmem:[%s4073 + $0x18] sm:$0xf]
  %v4081 = vld [vmem:[%s4073 + $0x1c] sm:$0xf]
  %v4082 = vld [vmem:[%s4073 + $0x20] sm:$0xf]
  %v4083 = vld [vmem:[%s4073 + $0x24] sm:$0xf]
  %v4084 = vld [vmem:[%s4073 + $0x28] sm:$0x3]
  %v4096 = vunpack.c.l.b16 %v4074
  %v4097 = vunpack.c.l.b16 %v4075
  %v4098 = vunpack.c.l.b16 %v4076
  %v4099 = vunpack.c.l.b16 %v4077
  %v4100 = vunpack.c.l.b16 %v4078
  %v4101 = vunpack.c.l.b16 %v4079
  %v4102 = vunpack.c.l.b16 %v4080
  %v4103 = vunpack.c.l.b16 %v4081
  %v4104 = vunpack.c.l.b16 %v4082
  %v4105 = vunpack.c.l.b16 %v4083
  %v4106 = vunpack.c.l.b16 %v4084
  %v4107 = vpack.c.b16 %v4097, %v4096
  %v4108 = vpack.c.b16 %v4099, %v4098
  %v4109 = vpack.c.b16 %v4101, %v4100
  %v4110 = vpack.c.b16 %v4103, %v4102
  %v4111 = vpack.c.b16 %v4105, %v4104
  %v4112 = vpack.c.b16 %v4106, %v4106
  %v4119 = vsel %vm3461, %v4112, 0
  %4121 = vmatpush.bf16.msra.mxu0 0
  %4122 = vmatpush.bf16.msra.mxu0 0
  %4123 = vmatpush.bf16.msra.mxu0 %v4119
  %4124 = vmatpush.bf16.msra.mxu0 %v4111
  %4125 = vmatpush.bf16.msra.mxu0 %v4110
  %4126 = vmatpush.bf16.msra.mxu0 %v4109
  %4127 = vmatpush.bf16.msra.mxu0 %v4108
  %4128 = vmatpush.bf16.msra.mxu0 %v4107
  %4129 = vmatmul.bf16.gmra.mxu0 %v3561
  %v4130 = vpop.f32.mrf.mxu0
  %v4131 = vadd.f32 0.0, %v4130
  %v4132 = vpop.f32.mrf.mxu0
  %v4133 = vadd.f32 0.0, %v4132
  %4134 = vmatmul.bf16.gmra.mxu0 %v3564
  %v4135 = vpop.f32.mrf.mxu0
  %v4136 = vadd.f32 0.0, %v4135
  %v4137 = vpop.f32.mrf.mxu0
  %v4138 = vadd.f32 0.0, %v4137
  %4139 = vmatmul.bf16.gmra.mxu0 %v3567
  %v4140 = vpop.f32.mrf.mxu0
  %v4141 = vadd.f32 0.0, %v4140
  %v4142 = vpop.f32.mrf.mxu0
  %v4143 = vadd.f32 0.0, %v4142
  %4144 = vmatmul.bf16.gmra.mxu0 %v3570
  %v4145 = vpop.f32.mrf.mxu0
  %v4146 = vadd.f32 0.0, %v4145
  %v4147 = vpop.f32.mrf.mxu0
  %v4148 = vadd.f32 0.0, %v4147
  %4149 = vmatmul.bf16.gmra.mxu0 %v3660
  %v4150 = vpop.f32.mrf.mxu0
  %v4151 = vadd.f32 0.0, %v4150
  %v4152 = vpop.f32.mrf.mxu0
  %v4153 = vadd.f32 0.0, %v4152
  %4154 = vdwg.mxu0
  %v4155 = vadd.f32 %v4049, %v4131
  %v4156 = vadd.f32 %v4051, %v4133
  %v4157 = vadd.f32 %v4054, %v4136
  %v4158 = vadd.f32 %v4056, %v4138
  %v4159 = vadd.f32 %v4059, %v4141
  %v4160 = vadd.f32 %v4061, %v4143
  %v4161 = vadd.f32 %v4064, %v4146
  %v4162 = vadd.f32 %v4066, %v4148
  %v4163 = vadd.f32 %v4069, %v4151
  %v4164 = vadd.f32 %v4071, %v4153
  %s4165 = scalar_lea.vmem %s3, 308
  %v4166 = vld [vmem:[%s4165] sm:$0xf]
  %v4167 = vld [vmem:[%s4165 + $0x4] sm:$0xf]
  %v4168 = vld [vmem:[%s4165 + $0x8] sm:$0xf]
  %v4169 = vld [vmem:[%s4165 + $0xc] sm:$0xf]
  %v4170 = vld [vmem:[%s4165 + $0x10] sm:$0xf]
  %v4171 = vld [vmem:[%s4165 + $0x14] sm:$0xf]
  %v4172 = vld [vmem:[%s4165 + $0x18] sm:$0xf]
  %v4173 = vld [vmem:[%s4165 + $0x1c] sm:$0xf]
  %v4174 = vld [vmem:[%s4165 + $0x20] sm:$0xf]
  %v4175 = vld [vmem:[%s4165 + $0x24] sm:$0xf]
  %v4176 = vld [vmem:[%s4165 + $0x28] sm:$0x3]
  %v4188 = vunpack.c.l.b16 %v4166
  %v4189 = vunpack.c.l.b16 %v4167
  %v4190 = vunpack.c.l.b16 %v4168
  %v4191 = vunpack.c.l.b16 %v4169
  %v4192 = vunpack.c.l.b16 %v4170
  %v4193 = vunpack.c.l.b16 %v4171
  %v4194 = vunpack.c.l.b16 %v4172
  %v4195 = vunpack.c.l.b16 %v4173
  %v4196 = vunpack.c.l.b16 %v4174
  %v4197 = vunpack.c.l.b16 %v4175
  %v4198 = vunpack.c.l.b16 %v4176
  %v4199 = vpack.c.b16 %v4189, %v4188
  %v4200 = vpack.c.b16 %v4191, %v4190
  %v4201 = vpack.c.b16 %v4193, %v4192
  %v4202 = vpack.c.b16 %v4195, %v4194
  %v4203 = vpack.c.b16 %v4197, %v4196
  %v4204 = vpack.c.b16 %v4198, %v4198
  %v4211 = vsel %vm3461, %v4204, 0
  %4213 = vmatpush.bf16.msra.mxu0 0
  %4214 = vmatpush.bf16.msra.mxu0 0
  %4215 = vmatpush.bf16.msra.mxu0 %v4211
  %4216 = vmatpush.bf16.msra.mxu0 %v4203
  %4217 = vmatpush.bf16.msra.mxu0 %v4202
  %4218 = vmatpush.bf16.msra.mxu0 %v4201
  %4219 = vmatpush.bf16.msra.mxu0 %v4200
  %4220 = vmatpush.bf16.msra.mxu0 %v4199
  %4221 = vmatmul.bf16.gmra.mxu0 %v3450
  %v4222 = vpop.f32.mrf.mxu0
  %v4223 = vadd.f32 0.0, %v4222
  %v4224 = vpop.f32.mrf.mxu0
  %v4225 = vadd.f32 0.0, %v4224
  %4226 = vmatmul.bf16.gmra.mxu0 %v3453
  %v4227 = vpop.f32.mrf.mxu0
  %v4228 = vadd.f32 0.0, %v4227
  %v4229 = vpop.f32.mrf.mxu0
  %v4230 = vadd.f32 0.0, %v4229
  %4231 = vmatmul.bf16.gmra.mxu0 %v3456
  %v4232 = vpop.f32.mrf.mxu0
  %v4233 = vadd.f32 0.0, %v4232
  %v4234 = vpop.f32.mrf.mxu0
  %v4235 = vadd.f32 0.0, %v4234
  %4236 = vmatmul.bf16.gmra.mxu0 %v3459
  %v4237 = vpop.f32.mrf.mxu0
  %v4238 = vadd.f32 0.0, %v4237
  %v4239 = vpop.f32.mrf.mxu0
  %v4240 = vadd.f32 0.0, %v4239
  %4241 = vmatmul.bf16.gmra.mxu0 %v3760
  %v4242 = vpop.f32.mrf.mxu0
  %v4243 = vadd.f32 0.0, %v4242
  %v4244 = vpop.f32.mrf.mxu0
  %v4245 = vadd.f32 0.0, %v4244
  %4246 = vdwg.mxu0
  %v4247 = vadd.f32 %v4155, %v4223
  %v4248 = vadd.f32 %v4156, %v4225
  %v4249 = vadd.f32 %v4157, %v4228
  %v4250 = vadd.f32 %v4158, %v4230
  %v4251 = vadd.f32 %v4159, %v4233
  %v4252 = vadd.f32 %v4160, %v4235
  %v4253 = vadd.f32 %v4161, %v4238
  %v4254 = vadd.f32 %v4162, %v4240
  %v4255 = vadd.f32 %v4163, %v4243
  %v4256 = vadd.f32 %v4164, %v4245
  %s4257 = scalar_lea.vmem %s3, 396
  %v4258 = vld [vmem:[%s4257] sm:$0xf]
  %v4259 = vld [vmem:[%s4257 + $0x4] sm:$0xf]
  %v4260 = vld [vmem:[%s4257 + $0x8] sm:$0xf]
  %v4261 = vld [vmem:[%s4257 + $0xc] sm:$0xf]
  %v4262 = vld [vmem:[%s4257 + $0x10] sm:$0xf]
  %v4263 = vld [vmem:[%s4257 + $0x14] sm:$0xf]
  %v4264 = vld [vmem:[%s4257 + $0x18] sm:$0xf]
  %v4265 = vld [vmem:[%s4257 + $0x1c] sm:$0xf]
  %v4266 = vld [vmem:[%s4257 + $0x20] sm:$0xf]
  %v4267 = vld [vmem:[%s4257 + $0x24] sm:$0xf]
  %v4268 = vld [vmem:[%s4257 + $0x28] sm:$0x3]
  %v4280 = vunpack.c.l.b16 %v4258
  %v4281 = vunpack.c.l.b16 %v4259
  %v4282 = vunpack.c.l.b16 %v4260
  %v4283 = vunpack.c.l.b16 %v4261
  %v4284 = vunpack.c.l.b16 %v4262
  %v4285 = vunpack.c.l.b16 %v4263
  %v4286 = vunpack.c.l.b16 %v4264
  %v4287 = vunpack.c.l.b16 %v4265
  %v4288 = vunpack.c.l.b16 %v4266
  %v4289 = vunpack.c.l.b16 %v4267
  %v4290 = vunpack.c.l.b16 %v4268
  %v4291 = vpack.c.b16 %v4281, %v4280
  %v4292 = vpack.c.b16 %v4283, %v4282
  %v4293 = vpack.c.b16 %v4285, %v4284
  %v4294 = vpack.c.b16 %v4287, %v4286
  %v4295 = vpack.c.b16 %v4289, %v4288
  %v4296 = vpack.c.b16 %v4290, %v4290
  %v4303 = vsel %vm3461, %v4296, 0
  %4305 = vmatpush.bf16.msra.mxu0 0
  %4306 = vmatpush.bf16.msra.mxu0 0
  %4307 = vmatpush.bf16.msra.mxu0 %v4303
  %4308 = vmatpush.bf16.msra.mxu0 %v4295
  %4309 = vmatpush.bf16.msra.mxu0 %v4294
  %4310 = vmatpush.bf16.msra.mxu0 %v4293
  %4311 = vmatpush.bf16.msra.mxu0 %v4292
  %4312 = vmatpush.bf16.msra.mxu0 %v4291
  %4313 = vmatmul.bf16.gmra.mxu0 %v3564
  %v4314 = vpop.f32.mrf.mxu0
  %v4315 = vadd.f32 0.0, %v4314
  %v4316 = vpop.f32.mrf.mxu0
  %v4317 = vadd.f32 0.0, %v4316
  %4318 = vmatmul.bf16.gmra.mxu0 %v3567
  %v4319 = vpop.f32.mrf.mxu0
  %v4320 = vadd.f32 0.0, %v4319
  %v4321 = vpop.f32.mrf.mxu0
  %v4322 = vadd.f32 0.0, %v4321
  %4323 = vmatmul.bf16.gmra.mxu0 %v3570
  %v4324 = vpop.f32.mrf.mxu0
  %v4325 = vadd.f32 0.0, %v4324
  %v4326 = vpop.f32.mrf.mxu0
  %v4327 = vadd.f32 0.0, %v4326
  %4328 = vmatmul.bf16.gmra.mxu0 %v3660
  %v4329 = vpop.f32.mrf.mxu0
  %v4330 = vadd.f32 0.0, %v4329
  %v4331 = vpop.f32.mrf.mxu0
  %v4332 = vadd.f32 0.0, %v4331
  %4333 = vmatmul.bf16.gmra.mxu0 %v3860
  %v4334 = vpop.f32.mrf.mxu0
  %v4335 = vadd.f32 0.0, %v4334
  %v4336 = vpop.f32.mrf.mxu0
  %v4337 = vadd.f32 0.0, %v4336
  %4338 = vdwg.mxu0
  %v4339 = vadd.f32 %v4247, %v4315
  %v4340 = vadd.f32 %v4248, %v4317
  %v4341 = vadd.f32 %v4249, %v4320
  %v4342 = vadd.f32 %v4250, %v4322
  %v4343 = vadd.f32 %v4251, %v4325
  %v4344 = vadd.f32 %v4252, %v4327
  %v4345 = vadd.f32 %v4253, %v4330
  %v4346 = vadd.f32 %v4254, %v4332
  %v4347 = vadd.f32 %v4255, %v4335
  %v4348 = vadd.f32 %v4256, %v4337
  %v4349 = vmax.f32 %v3899, %v4339
  %v4350 = vmax.f32 %v3900, %v4340
  %v4351 = vmax.f32 %v3901, %v4341
  %v4352 = vmax.f32 %v3902, %v4342
  %v4353 = vmax.f32 %v3903, %v4343
  %v4354 = vmax.f32 %v3904, %v4344
  %v4355 = vmax.f32 %v3905, %v4345
  %v4356 = vmax.f32 %v3906, %v4346
  %v4357 = vmax.f32 %v3907, %v4347
  %v4358 = vmax.f32 %v3908, %v4348
  %4359 = vmatpush.bf16.msra.mxu0 0
  %4360 = vmatpush.bf16.msra.mxu0 0
  %4361 = vmatpush.bf16.msra.mxu0 %v3463
  %4362 = vmatpush.bf16.msra.mxu0 %v3438
  %4363 = vmatpush.bf16.msra.mxu0 %v3437
  %4364 = vmatpush.bf16.msra.mxu0 %v3436
  %4365 = vmatpush.bf16.msra.mxu0 %v3435
  %4366 = vmatpush.bf16.msra.mxu0 %v3434
  %4367 = vmatmul.bf16.gmra.mxu0 %v3561
  %v4368 = vpop.f32.mrf.mxu0
  %v4369 = vadd.f32 0.0, %v4368
  %v4370 = vpop.f32.mrf.mxu0
  %v4371 = vadd.f32 0.0, %v4370
  %4372 = vmatmul.bf16.gmra.mxu0 %v3564
  %v4373 = vpop.f32.mrf.mxu0
  %v4374 = vadd.f32 0.0, %v4373
  %v4375 = vpop.f32.mrf.mxu0
  %v4376 = vadd.f32 0.0, %v4375
  %4377 = vmatmul.bf16.gmra.mxu0 %v3567
  %v4378 = vpop.f32.mrf.mxu0
  %v4379 = vadd.f32 0.0, %v4378
  %v4380 = vpop.f32.mrf.mxu0
  %v4381 = vadd.f32 0.0, %v4380
  %4382 = vmatmul.bf16.gmra.mxu0 %v3570
  %v4383 = vpop.f32.mrf.mxu0
  %v4384 = vadd.f32 0.0, %v4383
  %v4385 = vpop.f32.mrf.mxu0
  %v4386 = vadd.f32 0.0, %v4385
  %4387 = vmatmul.bf16.gmra.mxu0 %v3660
  %v4388 = vpop.f32.mrf.mxu0
  %v4389 = vadd.f32 0.0, %v4388
  %v4390 = vpop.f32.mrf.mxu0
  %v4391 = vadd.f32 0.0, %v4390
  %4392 = vdwg.mxu0
  %4393 = vmatpush.bf16.msra.mxu0 0
  %4394 = vmatpush.bf16.msra.mxu0 0
  %4395 = vmatpush.bf16.msra.mxu0 %v3573
  %4396 = vmatpush.bf16.msra.mxu0 %v3550
  %4397 = vmatpush.bf16.msra.mxu0 %v3549
  %4398 = vmatpush.bf16.msra.mxu0 %v3548
  %4399 = vmatpush.bf16.msra.mxu0 %v3547
  %4400 = vmatpush.bf16.msra.mxu0 %v3546
  %4401 = vmatmul.bf16.gmra.mxu0 %v3447
  %v4402 = vpop.f32.mrf.mxu0
  %v4403 = vadd.f32 %v4369, %v4402
  %v4404 = vpop.f32.mrf.mxu0
  %v4405 = vadd.f32 %v4371, %v4404
  %4406 = vmatmul.bf16.gmra.mxu0 %v3450
  %v4407 = vpop.f32.mrf.mxu0
  %v4408 = vadd.f32 %v4374, %v4407
  %v4409 = vpop.f32.mrf.mxu0
  %v4410 = vadd.f32 %v4376, %v4409
  %4411 = vmatmul.bf16.gmra.mxu0 %v3453
  %v4412 = vpop.f32.mrf.mxu0
  %v4413 = vadd.f32 %v4379, %v4412
  %v4414 = vpop.f32.mrf.mxu0
  %v4415 = vadd.f32 %v4381, %v4414
  %4416 = vmatmul.bf16.gmra.mxu0 %v3456
  %v4417 = vpop.f32.mrf.mxu0
  %v4418 = vadd.f32 %v4384, %v4417
  %v4419 = vpop.f32.mrf.mxu0
  %v4420 = vadd.f32 %v4386, %v4419
  %4421 = vmatmul.bf16.gmra.mxu0 %v3459
  %v4422 = vpop.f32.mrf.mxu0
  %v4423 = vadd.f32 %v4389, %v4422
  %v4424 = vpop.f32.mrf.mxu0
  %v4425 = vadd.f32 %v4391, %v4424
  %4426 = vdwg.mxu0
  %4427 = vmatpush.bf16.msra.mxu0 0
  %4428 = vmatpush.bf16.msra.mxu0 0
  %4429 = vmatpush.bf16.msra.mxu0 %v3663
  %4430 = vmatpush.bf16.msra.mxu0 %v3652
  %4431 = vmatpush.bf16.msra.mxu0 %v3651
  %4432 = vmatpush.bf16.msra.mxu0 %v3650
  %4433 = vmatpush.bf16.msra.mxu0 %v3649
  %4434 = vmatpush.bf16.msra.mxu0 %v3648
  %4435 = vmatmul.bf16.gmra.mxu0 %v3450
  %v4436 = vpop.f32.mrf.mxu0
  %v4437 = vadd.f32 0.0, %v4436
  %v4438 = vpop.f32.mrf.mxu0
  %v4439 = vadd.f32 0.0, %v4438
  %4440 = vmatmul.bf16.gmra.mxu0 %v3453
  %v4441 = vpop.f32.mrf.mxu0
  %v4442 = vadd.f32 0.0, %v4441
  %v4443 = vpop.f32.mrf.mxu0
  %v4444 = vadd.f32 0.0, %v4443
  %4445 = vmatmul.bf16.gmra.mxu0 %v3456
  %v4446 = vpop.f32.mrf.mxu0
  %v4447 = vadd.f32 0.0, %v4446
  %v4448 = vpop.f32.mrf.mxu0
  %v4449 = vadd.f32 0.0, %v4448
  %4450 = vmatmul.bf16.gmra.mxu0 %v3459
  %v4451 = vpop.f32.mrf.mxu0
  %v4452 = vadd.f32 0.0, %v4451
  %v4453 = vpop.f32.mrf.mxu0
  %v4454 = vadd.f32 0.0, %v4453
  %4455 = vmatmul.bf16.gmra.mxu0 %v3760
  %v4456 = vpop.f32.mrf.mxu0
  %v4457 = vadd.f32 0.0, %v4456
  %v4458 = vpop.f32.mrf.mxu0
  %v4459 = vadd.f32 0.0, %v4458
  %4460 = vdwg.mxu0
  %v4461 = vadd.f32 %v4403, %v4437
  %v4462 = vadd.f32 %v4405, %v4439
  %v4463 = vadd.f32 %v4408, %v4442
  %v4464 = vadd.f32 %v4410, %v4444
  %v4465 = vadd.f32 %v4413, %v4447
  %v4466 = vadd.f32 %v4415, %v4449
  %v4467 = vadd.f32 %v4418, %v4452
  %v4468 = vadd.f32 %v4420, %v4454
  %v4469 = vadd.f32 %v4423, %v4457
  %v4470 = vadd.f32 %v4425, %v4459
  %4471 = vmatpush.bf16.msra.mxu0 0
  %4472 = vmatpush.bf16.msra.mxu0 0
  %4473 = vmatpush.bf16.msra.mxu0 %v3763
  %4474 = vmatpush.bf16.msra.mxu0 %v3752
  %4475 = vmatpush.bf16.msra.mxu0 %v3751
  %4476 = vmatpush.bf16.msra.mxu0 %v3750
  %4477 = vmatpush.bf16.msra.mxu0 %v3749
  %4478 = vmatpush.bf16.msra.mxu0 %v3748
  %4479 = vmatmul.bf16.gmra.mxu0 %v3564
  %v4480 = vpop.f32.mrf.mxu0
  %v4481 = vadd.f32 0.0, %v4480
  %v4482 = vpop.f32.mrf.mxu0
  %v4483 = vadd.f32 0.0, %v4482
  %4484 = vmatmul.bf16.gmra.mxu0 %v3567
  %v4485 = vpop.f32.mrf.mxu0
  %v4486 = vadd.f32 0.0, %v4485
  %v4487 = vpop.f32.mrf.mxu0
  %v4488 = vadd.f32 0.0, %v4487
  %4489 = vmatmul.bf16.gmra.mxu0 %v3570
  %v4490 = vpop.f32.mrf.mxu0
  %v4491 = vadd.f32 0.0, %v4490
  %v4492 = vpop.f32.mrf.mxu0
  %v4493 = vadd.f32 0.0, %v4492
  %4494 = vmatmul.bf16.gmra.mxu0 %v3660
  %v4495 = vpop.f32.mrf.mxu0
  %v4496 = vadd.f32 0.0, %v4495
  %v4497 = vpop.f32.mrf.mxu0
  %v4498 = vadd.f32 0.0, %v4497
  %4499 = vmatmul.bf16.gmra.mxu0 %v3860
  %v4500 = vpop.f32.mrf.mxu0
  %v4501 = vadd.f32 0.0, %v4500
  %v4502 = vpop.f32.mrf.mxu0
  %v4503 = vadd.f32 0.0, %v4502
  %4504 = vdwg.mxu0
  %v4505 = vadd.f32 %v4461, %v4481
  %v4506 = vadd.f32 %v4462, %v4483
  %v4507 = vadd.f32 %v4463, %v4486
  %v4508 = vadd.f32 %v4464, %v4488
  %v4509 = vadd.f32 %v4465, %v4491
  %v4510 = vadd.f32 %v4466, %v4493
  %v4511 = vadd.f32 %v4467, %v4496
  %v4512 = vadd.f32 %v4468, %v4498
  %v4513 = vadd.f32 %v4469, %v4501
  %v4514 = vadd.f32 %v4470, %v4503
  %v4517 = vunpack.c.l.b16 %v3362
  %v4518 = vunpack.c.l.b16 %v3363
  %v4519 = vpack.c.b16 %v4518, %v4517
  %v4521 = vsel %vm3445, %v4519, 0
  %4523 = vmatpush.bf16.msra.mxu0 0
  %4524 = vmatpush.bf16.msra.mxu0 0
  %4525 = vmatpush.bf16.msra.mxu0 %v3863
  %4526 = vmatpush.bf16.msra.mxu0 %v3852
  %4527 = vmatpush.bf16.msra.mxu0 %v3851
  %4528 = vmatpush.bf16.msra.mxu0 %v3850
  %4529 = vmatpush.bf16.msra.mxu0 %v3849
  %4530 = vmatpush.bf16.msra.mxu0 %v3848
  %4531 = vmatmul.bf16.gmra.mxu0 %v3453
  %v4532 = vpop.f32.mrf.mxu0
  %v4533 = vadd.f32 0.0, %v4532
  %v4534 = vpop.f32.mrf.mxu0
  %v4535 = vadd.f32 0.0, %v4534
  %4536 = vmatmul.bf16.gmra.mxu0 %v3456
  %v4537 = vpop.f32.mrf.mxu0
  %v4538 = vadd.f32 0.0, %v4537
  %v4539 = vpop.f32.mrf.mxu0
  %v4540 = vadd.f32 0.0, %v4539
  %4541 = vmatmul.bf16.gmra.mxu0 %v3459
  %v4542 = vpop.f32.mrf.mxu0
  %v4543 = vadd.f32 0.0, %v4542
  %v4544 = vpop.f32.mrf.mxu0
  %v4545 = vadd.f32 0.0, %v4544
  %4546 = vmatmul.bf16.gmra.mxu0 %v3760
  %v4547 = vpop.f32.mrf.mxu0
  %v4548 = vadd.f32 0.0, %v4547
  %v4549 = vpop.f32.mrf.mxu0
  %v4550 = vadd.f32 0.0, %v4549
  %4551 = vmatmul.bf16.gmra.mxu0 %v4521
  %v4552 = vpop.f32.mrf.mxu0
  %v4553 = vadd.f32 0.0, %v4552
  %v4554 = vpop.f32.mrf.mxu0
  %v4555 = vadd.f32 0.0, %v4554
  %4556 = vdwg.mxu0
  %v4557 = vadd.f32 %v4505, %v4533
  %v4558 = vadd.f32 %v4506, %v4535
  %v4559 = vadd.f32 %v4507, %v4538
  %v4560 = vadd.f32 %v4508, %v4540
  %v4561 = vadd.f32 %v4509, %v4543
  %v4562 = vadd.f32 %v4510, %v4545
  %v4563 = vadd.f32 %v4511, %v4548
  %v4564 = vadd.f32 %v4512, %v4550
  %v4565 = vadd.f32 %v4513, %v4553
  %v4566 = vadd.f32 %v4514, %v4555
  %v4567 = vmax.f32 %v4349, %v4557
  %v4568 = vmax.f32 %v4350, %v4558
  %v4569 = vmax.f32 %v4351, %v4559
  %v4570 = vmax.f32 %v4352, %v4560
  %v4571 = vmax.f32 %v4353, %v4561
  %v4572 = vmax.f32 %v4354, %v4562
  %v4573 = vmax.f32 %v4355, %v4563
  %v4574 = vmax.f32 %v4356, %v4564
  %v4575 = vmax.f32 %v4357, %v4565
  %v4576 = vmax.f32 %v4358, %v4566
  %4577 = vmatpush.bf16.msra.mxu0 0
  %4578 = vmatpush.bf16.msra.mxu0 0
  %4579 = vmatpush.bf16.msra.mxu0 %v3967
  %4580 = vmatpush.bf16.msra.mxu0 %v3959
  %4581 = vmatpush.bf16.msra.mxu0 %v3958
  %4582 = vmatpush.bf16.msra.mxu0 %v3957
  %4583 = vmatpush.bf16.msra.mxu0 %v3956
  %4584 = vmatpush.bf16.msra.mxu0 %v3955
  %4585 = vmatmul.bf16.gmra.mxu0 %v3561
  %v4586 = vpop.f32.mrf.mxu0
  %v4587 = vadd.f32 0.0, %v4586
  %v4588 = vpop.f32.mrf.mxu0
  %v4589 = vadd.f32 0.0, %v4588
  %4590 = vmatmul.bf16.gmra.mxu0 %v3564
  %v4591 = vpop.f32.mrf.mxu0
  %v4592 = vadd.f32 0.0, %v4591
  %v4593 = vpop.f32.mrf.mxu0
  %v4594 = vadd.f32 0.0, %v4593
  %4595 = vmatmul.bf16.gmra.mxu0 %v3567
  %v4596 = vpop.f32.mrf.mxu0
  %v4597 = vadd.f32 0.0, %v4596
  %v4598 = vpop.f32.mrf.mxu0
  %v4599 = vadd.f32 0.0, %v4598
  %4600 = vmatmul.bf16.gmra.mxu0 %v3570
  %v4601 = vpop.f32.mrf.mxu0
  %v4602 = vadd.f32 0.0, %v4601
  %v4603 = vpop.f32.mrf.mxu0
  %v4604 = vadd.f32 0.0, %v4603
  %4605 = vmatmul.bf16.gmra.mxu0 %v3660
  %v4606 = vpop.f32.mrf.mxu0
  %v4607 = vadd.f32 0.0, %v4606
  %v4608 = vpop.f32.mrf.mxu0
  %v4609 = vadd.f32 0.0, %v4608
  %4610 = vdwg.mxu0
  %4611 = vmatpush.bf16.msra.mxu0 0
  %4612 = vmatpush.bf16.msra.mxu0 0
  %4613 = vmatpush.bf16.msra.mxu0 %v4037
  %4614 = vmatpush.bf16.msra.mxu0 %v4029
  %4615 = vmatpush.bf16.msra.mxu0 %v4028
  %4616 = vmatpush.bf16.msra.mxu0 %v4027
  %4617 = vmatpush.bf16.msra.mxu0 %v4026
  %4618 = vmatpush.bf16.msra.mxu0 %v4025
  %4619 = vmatmul.bf16.gmra.mxu0 %v3447
  %v4620 = vpop.f32.mrf.mxu0
  %v4621 = vadd.f32 %v4587, %v4620
  %v4622 = vpop.f32.mrf.mxu0
  %v4623 = vadd.f32 %v4589, %v4622
  %4624 = vmatmul.bf16.gmra.mxu0 %v3450
  %v4625 = vpop.f32.mrf.mxu0
  %v4626 = vadd.f32 %v4592, %v4625
  %v4627 = vpop.f32.mrf.mxu0
  %v4628 = vadd.f32 %v4594, %v4627
  %4629 = vmatmul.bf16.gmra.mxu0 %v3453
  %v4630 = vpop.f32.mrf.mxu0
  %v4631 = vadd.f32 %v4597, %v4630
  %v4632 = vpop.f32.mrf.mxu0
  %v4633 = vadd.f32 %v4599, %v4632
  %4634 = vmatmul.bf16.gmra.mxu0 %v3456
  %v4635 = vpop.f32.mrf.mxu0
  %v4636 = vadd.f32 %v4602, %v4635
  %v4637 = vpop.f32.mrf.mxu0
  %v4638 = vadd.f32 %v4604, %v4637
  %4639 = vmatmul.bf16.gmra.mxu0 %v3459
  %v4640 = vpop.f32.mrf.mxu0
  %v4641 = vadd.f32 %v4607, %v4640
  %v4642 = vpop.f32.mrf.mxu0
  %v4643 = vadd.f32 %v4609, %v4642
  %4644 = vdwg.mxu0
  %4645 = vmatpush.bf16.msra.mxu0 0
  %4646 = vmatpush.bf16.msra.mxu0 0
  %4647 = vmatpush.bf16.msra.mxu0 %v4119
  %4648 = vmatpush.bf16.msra.mxu0 %v4111
  %4649 = vmatpush.bf16.msra.mxu0 %v4110
  %4650 = vmatpush.bf16.msra.mxu0 %v4109
  %4651 = vmatpush.bf16.msra.mxu0 %v4108
  %4652 = vmatpush.bf16.msra.mxu0 %v4107
  %4653 = vmatmul.bf16.gmra.mxu0 %v3450
  %v4654 = vpop.f32.mrf.mxu0
  %v4655 = vadd.f32 0.0, %v4654
  %v4656 = vpop.f32.mrf.mxu0
  %v4657 = vadd.f32 0.0, %v4656
  %4658 = vmatmul.bf16.gmra.mxu0 %v3453
  %v4659 = vpop.f32.mrf.mxu0
  %v4660 = vadd.f32 0.0, %v4659
  %v4661 = vpop.f32.mrf.mxu0
  %v4662 = vadd.f32 0.0, %v4661
  %4663 = vmatmul.bf16.gmra.mxu0 %v3456
  %v4664 = vpop.f32.mrf.mxu0
  %v4665 = vadd.f32 0.0, %v4664
  %v4666 = vpop.f32.mrf.mxu0
  %v4667 = vadd.f32 0.0, %v4666
  %4668 = vmatmul.bf16.gmra.mxu0 %v3459
  %v4669 = vpop.f32.mrf.mxu0
  %v4670 = vadd.f32 0.0, %v4669
  %v4671 = vpop.f32.mrf.mxu0
  %v4672 = vadd.f32 0.0, %v4671
  %4673 = vmatmul.bf16.gmra.mxu0 %v3760
  %v4674 = vpop.f32.mrf.mxu0
  %v4675 = vadd.f32 0.0, %v4674
  %v4676 = vpop.f32.mrf.mxu0
  %v4677 = vadd.f32 0.0, %v4676
  %4678 = vdwg.mxu0
  %v4679 = vadd.f32 %v4621, %v4655
  %v4680 = vadd.f32 %v4623, %v4657
  %v4681 = vadd.f32 %v4626, %v4660
  %v4682 = vadd.f32 %v4628, %v4662
  %v4683 = vadd.f32 %v4631, %v4665
  %v4684 = vadd.f32 %v4633, %v4667
  %v4685 = vadd.f32 %v4636, %v4670
  %v4686 = vadd.f32 %v4638, %v4672
  %v4687 = vadd.f32 %v4641, %v4675
  %v4688 = vadd.f32 %v4643, %v4677
  %4689 = vmatpush.bf16.msra.mxu0 0
  %4690 = vmatpush.bf16.msra.mxu0 0
  %4691 = vmatpush.bf16.msra.mxu0 %v4211
  %4692 = vmatpush.bf16.msra.mxu0 %v4203
  %4693 = vmatpush.bf16.msra.mxu0 %v4202
  %4694 = vmatpush.bf16.msra.mxu0 %v4201
  %4695 = vmatpush.bf16.msra.mxu0 %v4200
  %4696 = vmatpush.bf16.msra.mxu0 %v4199
  %4697 = vmatmul.bf16.gmra.mxu0 %v3564
  %v4698 = vpop.f32.mrf.mxu0
  %v4699 = vadd.f32 0.0, %v4698
  %v4700 = vpop.f32.mrf.mxu0
  %v4701 = vadd.f32 0.0, %v4700
  %4702 = vmatmul.bf16.gmra.mxu0 %v3567
  %v4703 = vpop.f32.mrf.mxu0
  %v4704 = vadd.f32 0.0, %v4703
  %v4705 = vpop.f32.mrf.mxu0
  %v4706 = vadd.f32 0.0, %v4705
  %4707 = vmatmul.bf16.gmra.mxu0 %v3570
  %v4708 = vpop.f32.mrf.mxu0
  %v4709 = vadd.f32 0.0, %v4708
  %v4710 = vpop.f32.mrf.mxu0
  %v4711 = vadd.f32 0.0, %v4710
  %4712 = vmatmul.bf16.gmra.mxu0 %v3660
  %v4713 = vpop.f32.mrf.mxu0
  %v4714 = vadd.f32 0.0, %v4713
  %v4715 = vpop.f32.mrf.mxu0
  %v4716 = vadd.f32 0.0, %v4715
  %4717 = vmatmul.bf16.gmra.mxu0 %v3860
  %v4718 = vpop.f32.mrf.mxu0
  %v4719 = vadd.f32 0.0, %v4718
  %v4720 = vpop.f32.mrf.mxu0
  %v4721 = vadd.f32 0.0, %v4720
  %4722 = vdwg.mxu0
  %v4723 = vadd.f32 %v4679, %v4699
  %v4724 = vadd.f32 %v4680, %v4701
  %v4725 = vadd.f32 %v4681, %v4704
  %v4726 = vadd.f32 %v4682, %v4706
  %v4727 = vadd.f32 %v4683, %v4709
  %v4728 = vadd.f32 %v4684, %v4711
  %v4729 = vadd.f32 %v4685, %v4714
  %v4730 = vadd.f32 %v4686, %v4716
  %v4731 = vadd.f32 %v4687, %v4719
  %v4732 = vadd.f32 %v4688, %v4721
  %4733 = vmatpush.bf16.msra.mxu0 0
  %4734 = vmatpush.bf16.msra.mxu0 0
  %4735 = vmatpush.bf16.msra.mxu0 %v4303
  %4736 = vmatpush.bf16.msra.mxu0 %v4295
  %4737 = vmatpush.bf16.msra.mxu0 %v4294
  %4738 = vmatpush.bf16.msra.mxu0 %v4293
  %4739 = vmatpush.bf16.msra.mxu0 %v4292
  %4740 = vmatpush.bf16.msra.mxu0 %v4291
  %4741 = vmatmul.bf16.gmra.mxu0 %v3453
  %v4742 = vpop.f32.mrf.mxu0
  %v4743 = vadd.f32 0.0, %v4742
  %v4744 = vpop.f32.mrf.mxu0
  %v4745 = vadd.f32 0.0, %v4744
  %4746 = vmatmul.bf16.gmra.mxu0 %v3456
  %v4747 = vpop.f32.mrf.mxu0
  %v4748 = vadd.f32 0.0, %v4747
  %v4749 = vpop.f32.mrf.mxu0
  %v4750 = vadd.f32 0.0, %v4749
  %4751 = vmatmul.bf16.gmra.mxu0 %v3459
  %v4752 = vpop.f32.mrf.mxu0
  %v4753 = vadd.f32 0.0, %v4752
  %v4754 = vpop.f32.mrf.mxu0
  %v4755 = vadd.f32 0.0, %v4754
  %4756 = vmatmul.bf16.gmra.mxu0 %v3760
  %v4757 = vpop.f32.mrf.mxu0
  %v4758 = vadd.f32 0.0, %v4757
  %v4759 = vpop.f32.mrf.mxu0
  %v4760 = vadd.f32 0.0, %v4759
  %4761 = vmatmul.bf16.gmra.mxu0 %v4521
  %v4762 = vpop.f32.mrf.mxu0
  %v4763 = vadd.f32 0.0, %v4762
  %v4764 = vpop.f32.mrf.mxu0
  %v4765 = vadd.f32 0.0, %v4764
  %4766 = vdwg.mxu0
  %v4767 = vadd.f32 %v4723, %v4743
  %v4768 = vadd.f32 %v4724, %v4745
  %v4769 = vadd.f32 %v4725, %v4748
  %v4770 = vadd.f32 %v4726, %v4750
  %v4771 = vadd.f32 %v4727, %v4753
  %v4772 = vadd.f32 %v4728, %v4755
  %v4773 = vadd.f32 %v4729, %v4758
  %v4774 = vadd.f32 %v4730, %v4760
  %v4775 = vadd.f32 %v4731, %v4763
  %v4776 = vadd.f32 %v4732, %v4765
  %v4777 = vmax.f32 %v4567, %v4767
  %v4778 = vmax.f32 %v4568, %v4768
  %v4779 = vmax.f32 %v4569, %v4769
  %v4780 = vmax.f32 %v4570, %v4770
  %v4781 = vmax.f32 %v4571, %v4771
  %v4782 = vmax.f32 %v4572, %v4772
  %v4783 = vmax.f32 %v4573, %v4773
  %v4784 = vmax.f32 %v4574, %v4774
  %v4785 = vmax.f32 %v4575, %v4775
  %v4786 = vmax.f32 %v4576, %v4776
  %v4787 = vld [vmem:[%s4] sm:$0x1]
  %v4789 = vperm.slane %v4787, 0
  %v4791 = vadd.f32 %v4777, %v4789
  %v4792 = vadd.f32 %v4778, %v4789
  %v4793 = vadd.f32 %v4779, %v4789
  %v4794 = vadd.f32 %v4780, %v4789
  %v4795 = vadd.f32 %v4781, %v4789
  %v4796 = vadd.f32 %v4782, %v4789
  %v4797 = vadd.f32 %v4783, %v4789
  %v4798 = vadd.f32 %v4784, %v4789
  %v4799 = vadd.f32 %v4785, %v4789
  %v4800 = vadd.f32 %v4786, %v4789
  %v4801 = vmax.f32 %v4791, 0.0
  %v4802 = vmax.f32 %v4792, 0.0
  %v4803 = vmax.f32 %v4793, 0.0
  %v4804 = vmax.f32 %v4794, 0.0
  %v4805 = vmax.f32 %v4795, 0.0
  %v4806 = vmax.f32 %v4796, 0.0
  %v4807 = vmax.f32 %v4797, 0.0
  %v4808 = vmax.f32 %v4798, 0.0
  %v4809 = vmax.f32 %v4799, 0.0
  %v4810 = vmax.f32 %v4800, 0.0
  %v4811 = vpack.c.bf16 %v4801, %v4801
  %v4812 = vpack.c.bf16 %v4802, %v4802
  %v4813 = vpack.c.bf16 %v4803, %v4803
  %v4814 = vpack.c.bf16 %v4804, %v4804
  %v4815 = vpack.c.bf16 %v4805, %v4805
  %v4816 = vpack.c.bf16 %v4806, %v4806
  %v4817 = vpack.c.bf16 %v4807, %v4807
  %v4818 = vpack.c.bf16 %v4808, %v4808
  %v4819 = vpack.c.bf16 %v4809, %v4809
  %v4820 = vpack.c.bf16 %v4810, %v4810
  %v4821 = vld [vmem:[%s5] sm:$0xf]
  %v4822 = vld [vmem:[%s5 + $0x4] sm:$0xf]
  %v4823 = vld [vmem:[%s5 + $0x8] sm:$0xf]
  %v4824 = vld [vmem:[%s5 + $0xc] sm:$0xf]
  %v4825 = vld [vmem:[%s5 + $0x10] sm:$0xf]
  %v4826 = vld [vmem:[%s5 + $0x14] sm:$0xf]
  %v4827 = vld [vmem:[%s5 + $0x18] sm:$0xf]
  %v4828 = vld [vmem:[%s5 + $0x1c] sm:$0xf]
  %v4829 = vld [vmem:[%s5 + $0x20] sm:$0xf]
  %v4830 = vld [vmem:[%s5 + $0x24] sm:$0xf]
  %s4831 = scalar_lea.vmem %s5, 40
  %v4832 = vld [vmem:[%s4831] sm:$0xf]
  %v4833 = vld [vmem:[%s4831 + $0x4] sm:$0xf]
  %v4834 = vld [vmem:[%s4831 + $0x8] sm:$0xf]
  %v4835 = vld [vmem:[%s4831 + $0xc] sm:$0xf]
  %v4836 = vld [vmem:[%s4831 + $0x10] sm:$0xf]
  %v4837 = vld [vmem:[%s4831 + $0x14] sm:$0xf]
  %v4838 = vld [vmem:[%s4831 + $0x18] sm:$0xf]
  %v4839 = vld [vmem:[%s4831 + $0x1c] sm:$0xf]
  %v4840 = vld [vmem:[%s4831 + $0x20] sm:$0xf]
  %v4841 = vld [vmem:[%s4831 + $0x24] sm:$0xf]
  %v4844 = vunpack.c.l.b16 %v4813
  %v4845 = vunpack.c.l.b16 %v4814
  %v4846 = vpack.c.b16 %v4845, %v4844
  %v4857 = vunpack.c.l.b16 %v4832
  %v4858 = vunpack.c.l.b16 %v4833
  %v4859 = vunpack.c.l.b16 %v4834
  %v4860 = vunpack.c.l.b16 %v4835
  %v4861 = vunpack.c.l.b16 %v4836
  %v4862 = vunpack.c.l.b16 %v4837
  %v4863 = vunpack.c.l.b16 %v4838
  %v4864 = vunpack.c.l.b16 %v4839
  %v4865 = vunpack.c.l.b16 %v4840
  %v4866 = vunpack.c.l.b16 %v4841
  %v4867 = vpack.c.b16 %v4858, %v4857
  %v4868 = vpack.c.b16 %v4860, %v4859
  %v4869 = vpack.c.b16 %v4862, %v4861
  %v4870 = vpack.c.b16 %v4864, %v4863
  %v4871 = vpack.c.b16 %v4866, %v4865
  %vm4877 = vcmask 654336
  %v4879 = vsel %vm4877, %v4846, 0
  %4881 = vmatpush.bf16.msra.mxu0 0
  %4882 = vmatpush.bf16.msra.mxu0 0
  %4883 = vmatpush.bf16.msra.mxu0 0
  %4884 = vmatpush.bf16.msra.mxu0 %v4871
  %4885 = vmatpush.bf16.msra.mxu0 %v4870
  %4886 = vmatpush.bf16.msra.mxu0 %v4869
  %4887 = vmatpush.bf16.msra.mxu0 %v4868
  %4888 = vmatpush.bf16.msra.mxu0 %v4867
  %4889 = vmatmul.bf16.gmra.mxu0 %v4879
  %v4890 = vpop.f32.mrf.mxu0
  %v4891 = vadd.f32 0.0, %v4890
  %v4892 = vpop.f32.mrf.mxu0
  %v4893 = vadd.f32 0.0, %v4892
  %4894 = vdwg.mxu0
  %v4897 = vunpack.c.l.b16 %v4811
  %v4898 = vunpack.c.l.b16 %v4812
  %v4899 = vpack.c.b16 %v4898, %v4897
  %v4910 = vunpack.c.l.b16 %v4821
  %v4911 = vunpack.c.l.b16 %v4822
  %v4912 = vunpack.c.l.b16 %v4823
  %v4913 = vunpack.c.l.b16 %v4824
  %v4914 = vunpack.c.l.b16 %v4825
  %v4915 = vunpack.c.l.b16 %v4826
  %v4916 = vunpack.c.l.b16 %v4827
  %v4917 = vunpack.c.l.b16 %v4828
  %v4918 = vunpack.c.l.b16 %v4829
  %v4919 = vunpack.c.l.b16 %v4830
  %v4920 = vpack.c.b16 %v4911, %v4910
  %v4921 = vpack.c.b16 %v4913, %v4912
  %v4922 = vpack.c.b16 %v4915, %v4914
  %v4923 = vpack.c.b16 %v4917, %v4916
  %v4924 = vpack.c.b16 %v4919, %v4918
  %v4931 = vsel %vm4877, %v4899, 0
  %4933 = vmatpush.bf16.msra.mxu0 0
  %4934 = vmatpush.bf16.msra.mxu0 0
  %4935 = vmatpush.bf16.msra.mxu0 0
  %4936 = vmatpush.bf16.msra.mxu0 %v4924
  %4937 = vmatpush.bf16.msra.mxu0 %v4923
  %4938 = vmatpush.bf16.msra.mxu0 %v4922
  %4939 = vmatpush.bf16.msra.mxu0 %v4921
  %4940 = vmatpush.bf16.msra.mxu0 %v4920
  %4941 = vmatmul.bf16.gmra.mxu0 %v4931
  %v4942 = vpop.f32.mrf.mxu0
  %v4943 = vadd.f32 %v4891, %v4942
  %v4944 = vpop.f32.mrf.mxu0
  %v4945 = vadd.f32 %v4893, %v4944
  %4946 = vdwg.mxu0
  %s4947 = scalar_lea.vmem %s5, 80
  %v4948 = vld [vmem:[%s4947] sm:$0xf]
  %v4949 = vld [vmem:[%s4947 + $0x4] sm:$0xf]
  %v4950 = vld [vmem:[%s4947 + $0x8] sm:$0xf]
  %v4951 = vld [vmem:[%s4947 + $0xc] sm:$0xf]
  %v4952 = vld [vmem:[%s4947 + $0x10] sm:$0xf]
  %v4953 = vld [vmem:[%s4947 + $0x14] sm:$0xf]
  %v4954 = vld [vmem:[%s4947 + $0x18] sm:$0xf]
  %v4955 = vld [vmem:[%s4947 + $0x1c] sm:$0xf]
  %v4956 = vld [vmem:[%s4947 + $0x20] sm:$0xf]
  %v4957 = vld [vmem:[%s4947 + $0x24] sm:$0xf]
  %v4960 = vunpack.c.l.b16 %v4815
  %v4961 = vunpack.c.l.b16 %v4816
  %v4962 = vpack.c.b16 %v4961, %v4960
  %v4973 = vunpack.c.l.b16 %v4948
  %v4974 = vunpack.c.l.b16 %v4949
  %v4975 = vunpack.c.l.b16 %v4950
  %v4976 = vunpack.c.l.b16 %v4951
  %v4977 = vunpack.c.l.b16 %v4952
  %v4978 = vunpack.c.l.b16 %v4953
  %v4979 = vunpack.c.l.b16 %v4954
  %v4980 = vunpack.c.l.b16 %v4955
  %v4981 = vunpack.c.l.b16 %v4956
  %v4982 = vunpack.c.l.b16 %v4957
  %v4983 = vpack.c.b16 %v4974, %v4973
  %v4984 = vpack.c.b16 %v4976, %v4975
  %v4985 = vpack.c.b16 %v4978, %v4977
  %v4986 = vpack.c.b16 %v4980, %v4979
  %v4987 = vpack.c.b16 %v4982, %v4981
  %v4994 = vsel %vm4877, %v4962, 0
  %4996 = vmatpush.bf16.msra.mxu0 0
  %4997 = vmatpush.bf16.msra.mxu0 0
  %4998 = vmatpush.bf16.msra.mxu0 0
  %4999 = vmatpush.bf16.msra.mxu0 %v4987
  %5000 = vmatpush.bf16.msra.mxu0 %v4986
  %5001 = vmatpush.bf16.msra.mxu0 %v4985
  %5002 = vmatpush.bf16.msra.mxu0 %v4984
  %5003 = vmatpush.bf16.msra.mxu0 %v4983
  %5004 = vmatmul.bf16.gmra.mxu0 %v4994
  %v5005 = vpop.f32.mrf.mxu0
  %v5006 = vadd.f32 0.0, %v5005
  %v5007 = vpop.f32.mrf.mxu0
  %v5008 = vadd.f32 0.0, %v5007
  %5009 = vdwg.mxu0
  %v5010 = vadd.f32 %v4943, %v5006
  %v5011 = vadd.f32 %v4945, %v5008
  %s5012 = scalar_lea.vmem %s5, 120
  %v5013 = vld [vmem:[%s5012] sm:$0xf]
  %v5014 = vld [vmem:[%s5012 + $0x4] sm:$0xf]
  %v5015 = vld [vmem:[%s5012 + $0x8] sm:$0xf]
  %v5016 = vld [vmem:[%s5012 + $0xc] sm:$0xf]
  %v5017 = vld [vmem:[%s5012 + $0x10] sm:$0xf]
  %v5018 = vld [vmem:[%s5012 + $0x14] sm:$0xf]
  %v5019 = vld [vmem:[%s5012 + $0x18] sm:$0xf]
  %v5020 = vld [vmem:[%s5012 + $0x1c] sm:$0xf]
  %v5021 = vld [vmem:[%s5012 + $0x20] sm:$0xf]
  %v5022 = vld [vmem:[%s5012 + $0x24] sm:$0xf]
  %v5025 = vunpack.c.l.b16 %v4817
  %v5026 = vunpack.c.l.b16 %v4818
  %v5027 = vpack.c.b16 %v5026, %v5025
  %v5038 = vunpack.c.l.b16 %v5013
  %v5039 = vunpack.c.l.b16 %v5014
  %v5040 = vunpack.c.l.b16 %v5015
  %v5041 = vunpack.c.l.b16 %v5016
  %v5042 = vunpack.c.l.b16 %v5017
  %v5043 = vunpack.c.l.b16 %v5018
  %v5044 = vunpack.c.l.b16 %v5019
  %v5045 = vunpack.c.l.b16 %v5020
  %v5046 = vunpack.c.l.b16 %v5021
  %v5047 = vunpack.c.l.b16 %v5022
  %v5048 = vpack.c.b16 %v5039, %v5038
  %v5049 = vpack.c.b16 %v5041, %v5040
  %v5050 = vpack.c.b16 %v5043, %v5042
  %v5051 = vpack.c.b16 %v5045, %v5044
  %v5052 = vpack.c.b16 %v5047, %v5046
  %v5059 = vsel %vm4877, %v5027, 0
  %5061 = vmatpush.bf16.msra.mxu0 0
  %5062 = vmatpush.bf16.msra.mxu0 0
  %5063 = vmatpush.bf16.msra.mxu0 0
  %5064 = vmatpush.bf16.msra.mxu0 %v5052
  %5065 = vmatpush.bf16.msra.mxu0 %v5051
  %5066 = vmatpush.bf16.msra.mxu0 %v5050
  %5067 = vmatpush.bf16.msra.mxu0 %v5049
  %5068 = vmatpush.bf16.msra.mxu0 %v5048
  %5069 = vmatmul.bf16.gmra.mxu0 %v5059
  %v5070 = vpop.f32.mrf.mxu0
  %v5071 = vadd.f32 0.0, %v5070
  %v5072 = vpop.f32.mrf.mxu0
  %v5073 = vadd.f32 0.0, %v5072
  %5074 = vdwg.mxu0
  %v5075 = vadd.f32 %v5010, %v5071
  %v5076 = vadd.f32 %v5011, %v5073
  %s5077 = scalar_lea.vmem %s5, 160
  %v5078 = vld [vmem:[%s5077] sm:$0xf]
  %v5079 = vld [vmem:[%s5077 + $0x4] sm:$0xf]
  %v5080 = vld [vmem:[%s5077 + $0x8] sm:$0xf]
  %v5081 = vld [vmem:[%s5077 + $0xc] sm:$0xf]
  %v5082 = vld [vmem:[%s5077 + $0x10] sm:$0xf]
  %v5083 = vld [vmem:[%s5077 + $0x14] sm:$0xf]
  %v5084 = vld [vmem:[%s5077 + $0x18] sm:$0xf]
  %v5085 = vld [vmem:[%s5077 + $0x1c] sm:$0xf]
  %v5086 = vld [vmem:[%s5077 + $0x20] sm:$0xf]
  %v5087 = vld [vmem:[%s5077 + $0x24] sm:$0xf]
  %v5090 = vunpack.c.l.b16 %v4819
  %v5091 = vunpack.c.l.b16 %v4820
  %v5092 = vpack.c.b16 %v5091, %v5090
  %v5103 = vunpack.c.l.b16 %v5078
  %v5104 = vunpack.c.l.b16 %v5079
  %v5105 = vunpack.c.l.b16 %v5080
  %v5106 = vunpack.c.l.b16 %v5081
  %v5107 = vunpack.c.l.b16 %v5082
  %v5108 = vunpack.c.l.b16 %v5083
  %v5109 = vunpack.c.l.b16 %v5084
  %v5110 = vunpack.c.l.b16 %v5085
  %v5111 = vunpack.c.l.b16 %v5086
  %v5112 = vunpack.c.l.b16 %v5087
  %v5113 = vpack.c.b16 %v5104, %v5103
  %v5114 = vpack.c.b16 %v5106, %v5105
  %v5115 = vpack.c.b16 %v5108, %v5107
  %v5116 = vpack.c.b16 %v5110, %v5109
  %v5117 = vpack.c.b16 %v5112, %v5111
  %v5124 = vsel %vm4877, %v5092, 0
  %5126 = vmatpush.bf16.msra.mxu0 0
  %5127 = vmatpush.bf16.msra.mxu0 0
  %5128 = vmatpush.bf16.msra.mxu0 0
  %5129 = vmatpush.bf16.msra.mxu0 %v5117
  %5130 = vmatpush.bf16.msra.mxu0 %v5116
  %5131 = vmatpush.bf16.msra.mxu0 %v5115
  %5132 = vmatpush.bf16.msra.mxu0 %v5114
  %5133 = vmatpush.bf16.msra.mxu0 %v5113
  %5134 = vmatmul.bf16.gmra.mxu0 %v5124
  %v5135 = vpop.f32.mrf.mxu0
  %v5136 = vadd.f32 0.0, %v5135
  %v5137 = vpop.f32.mrf.mxu0
  %v5138 = vadd.f32 0.0, %v5137
  %5139 = vdwg.mxu0
  %v5140 = vadd.f32 %v5075, %v5136
  %v5141 = vadd.f32 %v5076, %v5138
  %v5142 = vld [vmem:[%s6] sm:$0x1]
  %v5144 = vperm.slane %v5142, 0
  %v5146 = vadd.f32 %v5140, %v5144
  %v5147 = vadd.f32 %v5141, %v5144
  %v5148 = vmax.f32 %v5146, 0.0
  %v5149 = vmax.f32 %v5147, 0.0
  %v5150 = vpack.c.bf16 %v5149, %v5148
  %v5151 = vld [vmem:[%s7] sm:$0xf]
  %v5152 = vld [vmem:[%s7 + $0x4] sm:$0xf]
  %v5153 = vld [vmem:[%s7 + $0x8] sm:$0xf]
  %v5154 = vld [vmem:[%s7 + $0xc] sm:$0xf]
  %v5155 = vld [vmem:[%s7 + $0x10] sm:$0xf]
  %v5156 = vld [vmem:[%s7 + $0x14] sm:$0xf]
  %v5157 = vld [vmem:[%s7 + $0x18] sm:$0xf]
  %v5158 = vld [vmem:[%s7 + $0x1c] sm:$0xf]
  %v5159 = vld [vmem:[%s7 + $0x20] sm:$0xf]
  %v5160 = vld [vmem:[%s7 + $0x24] sm:$0xf]
  %v5161 = vld [vmem:[%s7 + $0x28] sm:$0xf]
  %v5162 = vld [vmem:[%s7 + $0x2c] sm:$0xf]
  %v5163 = vld [vmem:[%s7 + $0x30] sm:$0xf]
  %v5164 = vld [vmem:[%s7 + $0x34] sm:$0xf]
  %v5165 = vld [vmem:[%s7 + $0x38] sm:$0xf]
  %v5166 = vld [vmem:[%s7 + $0x3c] sm:$0xf]
  %v5167 = vld [vmem:[%s8] sm:$0x1]
  %v5169 = vperm.slane %v5167, 0
  %v5187 = vunpack.c.l.b16 %v5151
  %v5188 = vunpack.c.l.b16 %v5152
  %v5189 = vunpack.c.l.b16 %v5153
  %v5190 = vunpack.c.l.b16 %v5154
  %v5191 = vunpack.c.l.b16 %v5155
  %v5192 = vunpack.c.l.b16 %v5156
  %v5193 = vunpack.c.l.b16 %v5157
  %v5194 = vunpack.c.l.b16 %v5158
  %v5195 = vunpack.c.l.b16 %v5159
  %v5196 = vunpack.c.l.b16 %v5160
  %v5197 = vunpack.c.l.b16 %v5161
  %v5198 = vunpack.c.l.b16 %v5162
  %v5199 = vunpack.c.l.b16 %v5163
  %v5200 = vunpack.c.l.b16 %v5164
  %v5201 = vunpack.c.l.b16 %v5165
  %v5202 = vunpack.c.l.b16 %v5166
  %v5203 = vpack.c.b16 %v5188, %v5187
  %v5204 = vpack.c.b16 %v5190, %v5189
  %v5205 = vpack.c.b16 %v5192, %v5191
  %v5206 = vpack.c.b16 %v5194, %v5193
  %v5207 = vpack.c.b16 %v5196, %v5195
  %v5208 = vpack.c.b16 %v5198, %v5197
  %v5209 = vpack.c.b16 %v5200, %v5199
  %v5210 = vpack.c.b16 %v5202, %v5201
  %5219 = vmatpush.bf16.msra.mxu0 %v5210
  %5220 = vmatpush.bf16.msra.mxu0 %v5209
  %5221 = vmatpush.bf16.msra.mxu0 %v5208
  %5222 = vmatpush.bf16.msra.mxu0 %v5207
  %5223 = vmatpush.bf16.msra.mxu0 %v5206
  %5224 = vmatpush.bf16.msra.mxu0 %v5205
  %5225 = vmatpush.bf16.msra.mxu0 %v5204
  %5226 = vmatpush.bf16.msra.mxu0 %v5203
  %5227 = vmatmul.bf16.gmra.mxu0 %v5150
  %v5228 = vpop.f32.mrf.mxu0
  %v5229 = vadd.f32 %v5169, %v5228
  %v5230 = vpop.f32.mrf.mxu0
  %v5231 = vadd.f32 %v5169, %v5230
  %5232 = vdwg.mxu0
  %v5233 = vmax.f32 %v5229, 0.0
  %v5234 = vmax.f32 %v5231, 0.0
  %v5235 = vpack.c.bf16 %v5234, %v5233
  %v5236 = vld [vmem:[%s9] sm:$0xf]
  %v5237 = vld [vmem:[%s9 + $0x4] sm:$0xf]
  %v5238 = vld [vmem:[%s9 + $0x8] sm:$0xf]
  %v5239 = vld [vmem:[%s9 + $0xc] sm:$0xf]
  %v5240 = vld [vmem:[%s9 + $0x10] sm:$0xf]
  %v5241 = vld [vmem:[%s9 + $0x14] sm:$0xf]
  %v5242 = vld [vmem:[%s9 + $0x18] sm:$0xf]
  %v5243 = vld [vmem:[%s9 + $0x1c] sm:$0xf]
  %v5244 = vld [vmem:[%s9 + $0x20] sm:$0xf]
  %v5245 = vld [vmem:[%s9 + $0x24] sm:$0xf]
  %v5246 = vld [vmem:[%s9 + $0x28] sm:$0xf]
  %v5247 = vld [vmem:[%s9 + $0x2c] sm:$0xf]
  %v5248 = vld [vmem:[%s9 + $0x30] sm:$0xf]
  %v5249 = vld [vmem:[%s9 + $0x34] sm:$0xf]
  %v5250 = vld [vmem:[%s9 + $0x38] sm:$0xf]
  %v5251 = vld [vmem:[%s9 + $0x3c] sm:$0xf]
  %v5252 = vld [vmem:[%s10] sm:$0x1]
  %v5254 = vperm.slane %v5252, 0
  %v5272 = vunpack.c.l.b16 %v5236
  %v5273 = vunpack.c.l.b16 %v5237
  %v5274 = vunpack.c.l.b16 %v5238
  %v5275 = vunpack.c.l.b16 %v5239
  %v5276 = vunpack.c.l.b16 %v5240
  %v5277 = vunpack.c.l.b16 %v5241
  %v5278 = vunpack.c.l.b16 %v5242
  %v5279 = vunpack.c.l.b16 %v5243
  %v5280 = vunpack.c.l.b16 %v5244
  %v5281 = vunpack.c.l.b16 %v5245
  %v5282 = vunpack.c.l.b16 %v5246
  %v5283 = vunpack.c.l.b16 %v5247
  %v5284 = vunpack.c.l.b16 %v5248
  %v5285 = vunpack.c.l.b16 %v5249
  %v5286 = vunpack.c.l.b16 %v5250
  %v5287 = vunpack.c.l.b16 %v5251
  %v5288 = vpack.c.b16 %v5273, %v5272
  %v5289 = vpack.c.b16 %v5275, %v5274
  %v5290 = vpack.c.b16 %v5277, %v5276
  %v5291 = vpack.c.b16 %v5279, %v5278
  %v5292 = vpack.c.b16 %v5281, %v5280
  %v5293 = vpack.c.b16 %v5283, %v5282
  %v5294 = vpack.c.b16 %v5285, %v5284
  %v5295 = vpack.c.b16 %v5287, %v5286
  %5304 = vmatpush.bf16.msra.mxu0 %v5295
  %5305 = vmatpush.bf16.msra.mxu0 %v5294
  %5306 = vmatpush.bf16.msra.mxu0 %v5293
  %5307 = vmatpush.bf16.msra.mxu0 %v5292
  %5308 = vmatpush.bf16.msra.mxu0 %v5291
  %5309 = vmatpush.bf16.msra.mxu0 %v5290
  %5310 = vmatpush.bf16.msra.mxu0 %v5289
  %5311 = vmatpush.bf16.msra.mxu0 %v5288
  %5312 = vmatmul.bf16.gmra.mxu0 %v5235
  %v5313 = vpop.f32.mrf.mxu0
  %v5314 = vadd.f32 %v5254, %v5313
  %v5315 = vpop.f32.mrf.mxu0
  %v5316 = vadd.f32 %v5254, %v5315
  %5317 = vdwg.mxu0
  %5318 = vst [vmem:[%s11] sm:$0xff] %v5314
  %5319 = vst [vmem:[%s11 + $0x8] sm:$0xff] %v5316
  // Predicated region
  $region46: #{net_forward.1} parent=0 // pred_check
    _
  $region47: #{net_forward.1} parent=0 // pred_check_branch
    %5321 = sbr.rel (0) target = $region49
  $region48: #{net_forward.1} parent=0 // pred_region
    _
  $region49: #{net_forward.1} parent=0 // pred_fallthru
    _
  // Predicated region
  $region50: #{net_forward.1} parent=0 // pred_check
    _
  $region51: #{net_forward.1} parent=0 // pred_check_branch
    %5323 = sbr.rel (0) target = $region53
  $region52: #{net_forward.1} parent=0 // pred_region
    _
  $region53: #{net_forward.1} parent=0 // pred_fallthru
    _

</llo_original>
